<compile_context>
chip_gen: v5e
topology: v5e:2x2
jax: 0.10.0
libtpu: 0.0.40
codegen_flags: <defaults>
</compile_context>

<pallas_src>
import jax
import jax.numpy as jnp
from jax.experimental import pallas as pl
from jax.experimental.pallas import tpu as pltpu  # noqa: F401  (TPU backend)


# ----------------------------- in-kernel helpers ---------------------------

def _conv_bn(x, w_ref, b_ref, K, relu):
    """Conv1dSame + folded BN affine as a single im2col MXU matmul.

    x:      (N, L, Cin) f32 value (VMEM resident)
    w_ref:  (K*Cin, Cout) BN-folded weights, row index = k*Cin + c
    b_ref:  (1, Cout) BN-folded bias
    returns (N, L, Cout) f32
    """
    N, L, Cin = x.shape
    w = w_ref[...]
    b = b_ref[...]
    if K > 1:
        # torch Conv1d(padding='same'): pad_left=(K-1)//2, pad_right=K//2.
        pad_l, pad_r = (K - 1) // 2, K // 2
        xp = jnp.concatenate(
            [jnp.zeros((N, pad_l, Cin), x.dtype), x,
             jnp.zeros((N, pad_r, Cin), x.dtype)],
            axis=1)                                           # (N, L+K-1, Cin)
        # im2col: cols[n, l, k*Cin + c] = xp[n, l + k, c]
        cols = jnp.concatenate([xp[:, k:k + L, :] for k in range(K)], axis=-1)
    else:
        cols = x
    out = jnp.dot(cols.reshape(N * L, K * Cin), w,
                  preferred_element_type=jnp.float32) + b     # (N*L, Cout)
    if relu:
        out = jnp.maximum(out, 0.0)
    return out.reshape(N, L, w.shape[1])


def _res_block(x, refs):
    w1, b1, w2, b2, w3, b3, wp, bp = refs
    h = _conv_bn(x, w1, b1, 8, relu=True)      # conv1 (K=8) + bn + relu
    h = _conv_bn(h, w2, b2, 5, relu=True)      # conv2 (K=5) + bn + relu
    h = _conv_bn(h, w3, b3, 3, relu=False)     # conv3 (K=3) + bn
    p = _conv_bn(x, wp, bp, 1, relu=False)     # projection (K=1) + bn
    return jnp.maximum(h + p, 0.0)             # residual add + relu


def _resnet_kernel(*refs):
    """Whole network in one kernel: 3 residual blocks + avg pool + fc."""
    x_ref, o_ref = refs[0], refs[-1]
    wrefs = refs[1:-1]

    x = x_ref[...]                              # (N, L, 2)
    h = _res_block(x, wrefs[0:8])               # (N, L, 64)
    h = _res_block(h, wrefs[8:16])              # (N, L, 128)
    h = _res_block(h, wrefs[16:24])             # (N, L, 128)

    fc_w = wrefs[24][...]                       # (128, num_classes)
    fc_b = wrefs[25][...]                       # (1, num_classes)
    N, L, _ = h.shape
    pooled = jnp.sum(h, axis=1) * (1.0 / L)     # global avg pool over L: (N, 128)
    o_ref[...] = (jnp.dot(pooled, fc_w, preferred_element_type=jnp.float32)
                  + fc_b)                        # (N, num_classes)


# ----------------------------- wrapper --------------------------------------

def resnet_forward(x_ncl, params):
    """x_ncl: (N, C=2, L) PyTorch-layout input -> (N, num_classes) logits."""
    x = jnp.transpose(x_ncl, (0, 2, 1))        # NCL -> NLC (channels on lanes)
    N = x.shape[0]
    flat = []
    for name in ("b1", "b2", "b3"):
        b = params[name]
        flat += [b["w1"], b["b1"], b["w2"], b["b2"],
                 b["w3"], b["b3"], b["wp"], b["bp"]]
    flat += [params["fc_w"], params["fc_b"]]
    num_classes = params["fc_w"].shape[1]
    return pl.pallas_call(
        _resnet_kernel,
        out_shape=jax.ShapeDtypeStruct((N, num_classes), jnp.float32),
    )(x, *flat)


# ----------------------------- parameter init -------------------------------

def _folded_conv_bn(wkey, bnkey, k, cin, cout, eps=1e-5):
    """Random Conv1d(k, cin, cout, bias=False) + BatchNorm1d, folded for eval."""
    w = jax.random.normal(wkey, (k, cin, cout), jnp.float32) \
        * (1.0 / jnp.sqrt(float(cin * k)))
    k1, k2, k3, k4 = jax.random.split(bnkey, 4)
    gamma = 1.0 + 0.1 * jax.random.normal(k1, (cout,), jnp.float32)
    beta = 0.1 * jax.random.normal(k2, (cout,), jnp.float32)
    mean = 0.1 * jax.random.normal(k3, (cout,), jnp.float32)
    var = 1.0 + 0.1 * jax.random.uniform(k4, (cout,), jnp.float32)
    scale = gamma / jnp.sqrt(var + eps)
    bias = beta - mean * scale
    # Fold BN scale into the conv weights; store in im2col layout (K*Cin, Cout)
    # with row index k*Cin + c (matches the in-kernel column construction).
    wcol = (w * scale[None, None, :]).reshape(k * cin, cout)
    return wcol, bias.reshape(1, cout)


def make_block(key, cin, cmid, cout):
    ks = jax.random.split(key, 8)
    w1, b1 = _folded_conv_bn(ks[0], ks[1], 8, cin, cmid)
    w2, b2 = _folded_conv_bn(ks[2], ks[3], 5, cmid, cmid)
    w3, b3 = _folded_conv_bn(ks[4], ks[5], 3, cmid, cout)
    wp, bp = _folded_conv_bn(ks[6], ks[7], 1, cin, cout)
    return dict(w1=w1, b1=b1, w2=w2, b2=b2, w3=w3, b3=b3, wp=wp, bp=bp)


def make_params(key, num_classes=9):
    kb1, kb2, kb3, kfw, kfb = jax.random.split(key, 5)
    return dict(
        b1=make_block(kb1, 2, 64, 64),
        b2=make_block(kb2, 64, 128, 128),
        b3=make_block(kb3, 128, 128, 128),
        fc_w=jax.random.normal(kfw, (128, num_classes), jnp.float32)
             * (1.0 / jnp.sqrt(128.0)),
        fc_b=0.1 * jax.random.normal(kfb, (1, num_classes), jnp.float32),
    )


# ----------------------------- main -----------------------------------------

if __name__ == "__main__":
    key = jax.random.PRNGKey(0)
    kx, kp = jax.random.split(key)
    # PyTorch-style input: (batch=2, channels=2, length=16), NCL.
    x = jax.random.normal(kx, (2, 2, 16), jnp.float32)
    params = make_params(kp, num_classes=9)

    out = jax.jit(resnet_forward)(x, params)
    jax.block_until_ready(out)
    assert out.shape == (2, 9) and out.dtype == jnp.float32
    print("KERNEL_OK")
</pallas_src>

<mosaic_0001>
module attributes {stable_mosaic.version = 11 : i64} {
  func.func @_resnet_kernel(%arg0: memref<2x16x2xf32, #tpu.memory_space<vmem>>, %arg1: memref<16x64xf32, #tpu.memory_space<vmem>>, %arg2: memref<1x64xf32, #tpu.memory_space<vmem>>, %arg3: memref<320x64xf32, #tpu.memory_space<vmem>>, %arg4: memref<1x64xf32, #tpu.memory_space<vmem>>, %arg5: memref<192x64xf32, #tpu.memory_space<vmem>>, %arg6: memref<1x64xf32, #tpu.memory_space<vmem>>, %arg7: memref<2x64xf32, #tpu.memory_space<vmem>>, %arg8: memref<1x64xf32, #tpu.memory_space<vmem>>, %arg9: memref<512x128xf32, #tpu.memory_space<vmem>>, %arg10: memref<1x128xf32, #tpu.memory_space<vmem>>, %arg11: memref<640x128xf32, #tpu.memory_space<vmem>>, %arg12: memref<1x128xf32, #tpu.memory_space<vmem>>, %arg13: memref<384x128xf32, #tpu.memory_space<vmem>>, %arg14: memref<1x128xf32, #tpu.memory_space<vmem>>, %arg15: memref<64x128xf32, #tpu.memory_space<vmem>>, %arg16: memref<1x128xf32, #tpu.memory_space<vmem>>, %arg17: memref<1024x128xf32, #tpu.memory_space<vmem>>, %arg18: memref<1x128xf32, #tpu.memory_space<vmem>>, %arg19: memref<640x128xf32, #tpu.memory_space<vmem>>, %arg20: memref<1x128xf32, #tpu.memory_space<vmem>>, %arg21: memref<384x128xf32, #tpu.memory_space<vmem>>, %arg22: memref<1x128xf32, #tpu.memory_space<vmem>>, %arg23: memref<128x128xf32, #tpu.memory_space<vmem>>, %arg24: memref<1x128xf32, #tpu.memory_space<vmem>>, %arg25: memref<128x9xf32, #tpu.memory_space<vmem>>, %arg26: memref<1x9xf32, #tpu.memory_space<vmem>>, %arg27: memref<2x9xf32, #tpu.memory_space<vmem>>) attributes {dimension_semantics = [], scalar_prefetch = 0 : i64, scratch_operands = 0 : i64, tpu.core_type = #tpu.core_type<tc>} {
    %c0 = arith.constant 0 : index
    %c0_0 = arith.constant 0 : index
    %c0_1 = arith.constant 0 : index
    %0 = vector.load %arg0[%c0, %c0_0, %c0_1] : memref<2x16x2xf32, #tpu.memory_space<vmem>>, vector<2x16x2xf32>
    %c0_2 = arith.constant 0 : index
    %c0_3 = arith.constant 0 : index
    %1 = vector.load %arg1[%c0_2, %c0_3] : memref<16x64xf32, #tpu.memory_space<vmem>>, vector<16x64xf32>
    %c0_4 = arith.constant 0 : index
    %c0_5 = arith.constant 0 : index
    %2 = vector.load %arg2[%c0_4, %c0_5] : memref<1x64xf32, #tpu.memory_space<vmem>>, vector<1x64xf32>
    %cst = arith.constant 0.000000e+00 : f32
    %3 = vector.broadcast %cst : f32 to vector<2x3x2xf32>
    %cst_6 = arith.constant 0.000000e+00 : f32
    %4 = vector.broadcast %cst_6 : f32 to vector<2x4x2xf32>
    %5 = tpu.concatenate %3, %0, %4 in 1 : vector<2x3x2xf32>, vector<2x16x2xf32>, vector<2x4x2xf32> -> vector<2x23x2xf32>
    %6 = vector.extract_strided_slice %5 {offsets = [0, 0, 0], sizes = [2, 16, 2], strides = [1, 1, 1]} : vector<2x23x2xf32> to vector<2x16x2xf32>
    %7 = vector.extract_strided_slice %5 {offsets = [0, 1, 0], sizes = [2, 16, 2], strides = [1, 1, 1]} : vector<2x23x2xf32> to vector<2x16x2xf32>
    %8 = vector.extract_strided_slice %5 {offsets = [0, 2, 0], sizes = [2, 16, 2], strides = [1, 1, 1]} : vector<2x23x2xf32> to vector<2x16x2xf32>
    %9 = vector.extract_strided_slice %5 {offsets = [0, 3, 0], sizes = [2, 16, 2], strides = [1, 1, 1]} : vector<2x23x2xf32> to vector<2x16x2xf32>
    %10 = vector.extract_strided_slice %5 {offsets = [0, 4, 0], sizes = [2, 16, 2], strides = [1, 1, 1]} : vector<2x23x2xf32> to vector<2x16x2xf32>
    %11 = vector.extract_strided_slice %5 {offsets = [0, 5, 0], sizes = [2, 16, 2], strides = [1, 1, 1]} : vector<2x23x2xf32> to vector<2x16x2xf32>
    %12 = vector.extract_strided_slice %5 {offsets = [0, 6, 0], sizes = [2, 16, 2], strides = [1, 1, 1]} : vector<2x23x2xf32> to vector<2x16x2xf32>
    %13 = vector.extract_strided_slice %5 {offsets = [0, 7, 0], sizes = [2, 16, 2], strides = [1, 1, 1]} : vector<2x23x2xf32> to vector<2x16x2xf32>
    %14 = tpu.concatenate %6, %7, %8, %9, %10, %11, %12, %13 in 2 : vector<2x16x2xf32>, vector<2x16x2xf32>, vector<2x16x2xf32>, vector<2x16x2xf32>, vector<2x16x2xf32>, vector<2x16x2xf32>, vector<2x16x2xf32>, vector<2x16x2xf32> -> vector<2x16x16xf32>
    %15 = vector.shape_cast %14 : vector<2x16x16xf32> to vector<32x16xf32>
    %cst_7 = arith.constant dense<0.000000e+00> : vector<32x64xf32>
    %16 = tpu.matmul %15, %1, %cst_7 {dimension_numbers = #tpu.dot_dimension_numbers<[1], [0], [0], [1], [0, 0, 1, 1], [], []>} : vector<32x16xf32>, vector<16x64xf32>, vector<32x64xf32> -> vector<32x64xf32>
    %17 = vector.broadcast %2 : vector<1x64xf32> to vector<32x64xf32>
    %18 = arith.addf %16, %17 : vector<32x64xf32>
    %cst_8 = arith.constant 0.000000e+00 : f32
    %19 = vector.broadcast %cst_8 : f32 to vector<32x64xf32>
    %20 = arith.maximumf %18, %19 : vector<32x64xf32>
    %21 = vector.shape_cast %20 : vector<32x64xf32> to vector<2x16x64xf32>
    %c0_9 = arith.constant 0 : index
    %c0_10 = arith.constant 0 : index
    %22 = vector.load %arg3[%c0_9, %c0_10] : memref<320x64xf32, #tpu.memory_space<vmem>>, vector<320x64xf32>
    %c0_11 = arith.constant 0 : index
    %c0_12 = arith.constant 0 : index
    %23 = vector.load %arg4[%c0_11, %c0_12] : memref<1x64xf32, #tpu.memory_space<vmem>>, vector<1x64xf32>
    %cst_13 = arith.constant 0.000000e+00 : f32
    %24 = vector.broadcast %cst_13 : f32 to vector<2x2x64xf32>
    %cst_14 = arith.constant 0.000000e+00 : f32
    %25 = vector.broadcast %cst_14 : f32 to vector<2x2x64xf32>
    %26 = tpu.concatenate %24, %21, %25 in 1 : vector<2x2x64xf32>, vector<2x16x64xf32>, vector<2x2x64xf32> -> vector<2x20x64xf32>
    %27 = vector.extract_strided_slice %26 {offsets = [0, 0, 0], sizes = [2, 16, 64], strides = [1, 1, 1]} : vector<2x20x64xf32> to vector<2x16x64xf32>
    %28 = vector.extract_strided_slice %26 {offsets = [0, 1, 0], sizes = [2, 16, 64], strides = [1, 1, 1]} : vector<2x20x64xf32> to vector<2x16x64xf32>
    %29 = vector.extract_strided_slice %26 {offsets = [0, 2, 0], sizes = [2, 16, 64], strides = [1, 1, 1]} : vector<2x20x64xf32> to vector<2x16x64xf32>
    %30 = vector.extract_strided_slice %26 {offsets = [0, 3, 0], sizes = [2, 16, 64], strides = [1, 1, 1]} : vector<2x20x64xf32> to vector<2x16x64xf32>
    %31 = vector.extract_strided_slice %26 {offsets = [0, 4, 0], sizes = [2, 16, 64], strides = [1, 1, 1]} : vector<2x20x64xf32> to vector<2x16x64xf32>
    %32 = tpu.concatenate %27, %28, %29, %30, %31 in 2 : vector<2x16x64xf32>, vector<2x16x64xf32>, vector<2x16x64xf32>, vector<2x16x64xf32>, vector<2x16x64xf32> -> vector<2x16x320xf32>
    %33 = vector.shape_cast %32 : vector<2x16x320xf32> to vector<32x320xf32>
    %cst_15 = arith.constant dense<0.000000e+00> : vector<32x64xf32>
    %34 = tpu.matmul %33, %22, %cst_15 {dimension_numbers = #tpu.dot_dimension_numbers<[1], [0], [0], [1], [0, 0, 1, 1], [], []>} : vector<32x320xf32>, vector<320x64xf32>, vector<32x64xf32> -> vector<32x64xf32>
    %35 = vector.broadcast %23 : vector<1x64xf32> to vector<32x64xf32>
    %36 = arith.addf %34, %35 : vector<32x64xf32>
    %cst_16 = arith.constant 0.000000e+00 : f32
    %37 = vector.broadcast %cst_16 : f32 to vector<32x64xf32>
    %38 = arith.maximumf %36, %37 : vector<32x64xf32>
    %39 = vector.shape_cast %38 : vector<32x64xf32> to vector<2x16x64xf32>
    %c0_17 = arith.constant 0 : index
    %c0_18 = arith.constant 0 : index
    %40 = vector.load %arg5[%c0_17, %c0_18] : memref<192x64xf32, #tpu.memory_space<vmem>>, vector<192x64xf32>
    %c0_19 = arith.constant 0 : index
    %c0_20 = arith.constant 0 : index
    %41 = vector.load %arg6[%c0_19, %c0_20] : memref<1x64xf32, #tpu.memory_space<vmem>>, vector<1x64xf32>
    %cst_21 = arith.constant 0.000000e+00 : f32
    %42 = vector.broadcast %cst_21 : f32 to vector<2x1x64xf32>
    %cst_22 = arith.constant 0.000000e+00 : f32
    %43 = vector.broadcast %cst_22 : f32 to vector<2x1x64xf32>
    %44 = tpu.concatenate %42, %39, %43 in 1 : vector<2x1x64xf32>, vector<2x16x64xf32>, vector<2x1x64xf32> -> vector<2x18x64xf32>
    %45 = vector.extract_strided_slice %44 {offsets = [0, 0, 0], sizes = [2, 16, 64], strides = [1, 1, 1]} : vector<2x18x64xf32> to vector<2x16x64xf32>
    %46 = vector.extract_strided_slice %44 {offsets = [0, 1, 0], sizes = [2, 16, 64], strides = [1, 1, 1]} : vector<2x18x64xf32> to vector<2x16x64xf32>
    %47 = vector.extract_strided_slice %44 {offsets = [0, 2, 0], sizes = [2, 16, 64], strides = [1, 1, 1]} : vector<2x18x64xf32> to vector<2x16x64xf32>
    %48 = tpu.concatenate %45, %46, %47 in 2 : vector<2x16x64xf32>, vector<2x16x64xf32>, vector<2x16x64xf32> -> vector<2x16x192xf32>
    %49 = vector.shape_cast %48 : vector<2x16x192xf32> to vector<32x192xf32>
    %cst_23 = arith.constant dense<0.000000e+00> : vector<32x64xf32>
    %50 = tpu.matmul %49, %40, %cst_23 {dimension_numbers = #tpu.dot_dimension_numbers<[1], [0], [0], [1], [0, 0, 1, 1], [], []>} : vector<32x192xf32>, vector<192x64xf32>, vector<32x64xf32> -> vector<32x64xf32>
    %51 = vector.broadcast %41 : vector<1x64xf32> to vector<32x64xf32>
    %52 = arith.addf %50, %51 : vector<32x64xf32>
    %53 = vector.shape_cast %52 : vector<32x64xf32> to vector<2x16x64xf32>
    %c0_24 = arith.constant 0 : index
    %c0_25 = arith.constant 0 : index
    %54 = vector.load %arg7[%c0_24, %c0_25] : memref<2x64xf32, #tpu.memory_space<vmem>>, vector<2x64xf32>
    %c0_26 = arith.constant 0 : index
    %c0_27 = arith.constant 0 : index
    %55 = vector.load %arg8[%c0_26, %c0_27] : memref<1x64xf32, #tpu.memory_space<vmem>>, vector<1x64xf32>
    %56 = vector.shape_cast %0 : vector<2x16x2xf32> to vector<32x2xf32>
    %cst_28 = arith.constant dense<0.000000e+00> : vector<32x64xf32>
    %57 = tpu.matmul %56, %54, %cst_28 {dimension_numbers = #tpu.dot_dimension_numbers<[1], [0], [0], [1], [0, 0, 1, 1], [], []>} : vector<32x2xf32>, vector<2x64xf32>, vector<32x64xf32> -> vector<32x64xf32>
    %58 = vector.broadcast %55 : vector<1x64xf32> to vector<32x64xf32>
    %59 = arith.addf %57, %58 : vector<32x64xf32>
    %60 = vector.shape_cast %59 : vector<32x64xf32> to vector<2x16x64xf32>
    %61 = arith.addf %53, %60 : vector<2x16x64xf32>
    %cst_29 = arith.constant 0.000000e+00 : f32
    %62 = vector.broadcast %cst_29 : f32 to vector<2x16x64xf32>
    %63 = arith.maximumf %61, %62 : vector<2x16x64xf32>
    %c0_30 = arith.constant 0 : index
    %c0_31 = arith.constant 0 : index
    %64 = vector.load %arg9[%c0_30, %c0_31] : memref<512x128xf32, #tpu.memory_space<vmem>>, vector<512x128xf32>
    %c0_32 = arith.constant 0 : index
    %c0_33 = arith.constant 0 : index
    %65 = vector.load %arg10[%c0_32, %c0_33] : memref<1x128xf32, #tpu.memory_space<vmem>>, vector<1x128xf32>
    %cst_34 = arith.constant 0.000000e+00 : f32
    %66 = vector.broadcast %cst_34 : f32 to vector<2x3x64xf32>
    %cst_35 = arith.constant 0.000000e+00 : f32
    %67 = vector.broadcast %cst_35 : f32 to vector<2x4x64xf32>
    %68 = tpu.concatenate %66, %63, %67 in 1 : vector<2x3x64xf32>, vector<2x16x64xf32>, vector<2x4x64xf32> -> vector<2x23x64xf32>
    %69 = vector.extract_strided_slice %68 {offsets = [0, 0, 0], sizes = [2, 16, 64], strides = [1, 1, 1]} : vector<2x23x64xf32> to vector<2x16x64xf32>
    %70 = vector.extract_strided_slice %68 {offsets = [0, 1, 0], sizes = [2, 16, 64], strides = [1, 1, 1]} : vector<2x23x64xf32> to vector<2x16x64xf32>
    %71 = vector.extract_strided_slice %68 {offsets = [0, 2, 0], sizes = [2, 16, 64], strides = [1, 1, 1]} : vector<2x23x64xf32> to vector<2x16x64xf32>
    %72 = vector.extract_strided_slice %68 {offsets = [0, 3, 0], sizes = [2, 16, 64], strides = [1, 1, 1]} : vector<2x23x64xf32> to vector<2x16x64xf32>
    %73 = vector.extract_strided_slice %68 {offsets = [0, 4, 0], sizes = [2, 16, 64], strides = [1, 1, 1]} : vector<2x23x64xf32> to vector<2x16x64xf32>
    %74 = vector.extract_strided_slice %68 {offsets = [0, 5, 0], sizes = [2, 16, 64], strides = [1, 1, 1]} : vector<2x23x64xf32> to vector<2x16x64xf32>
    %75 = vector.extract_strided_slice %68 {offsets = [0, 6, 0], sizes = [2, 16, 64], strides = [1, 1, 1]} : vector<2x23x64xf32> to vector<2x16x64xf32>
    %76 = vector.extract_strided_slice %68 {offsets = [0, 7, 0], sizes = [2, 16, 64], strides = [1, 1, 1]} : vector<2x23x64xf32> to vector<2x16x64xf32>
    %77 = tpu.concatenate %69, %70, %71, %72, %73, %74, %75, %76 in 2 : vector<2x16x64xf32>, vector<2x16x64xf32>, vector<2x16x64xf32>, vector<2x16x64xf32>, vector<2x16x64xf32>, vector<2x16x64xf32>, vector<2x16x64xf32>, vector<2x16x64xf32> -> vector<2x16x512xf32>
    %78 = vector.shape_cast %77 : vector<2x16x512xf32> to vector<32x512xf32>
    %cst_36 = arith.constant dense<0.000000e+00> : vector<32x128xf32>
    %79 = tpu.matmul %78, %64, %cst_36 {dimension_numbers = #tpu.dot_dimension_numbers<[1], [0], [0], [1], [0, 0, 1, 1], [], []>} : vector<32x512xf32>, vector<512x128xf32>, vector<32x128xf32> -> vector<32x128xf32>
    %80 = vector.broadcast %65 : vector<1x128xf32> to vector<32x128xf32>
    %81 = arith.addf %79, %80 : vector<32x128xf32>
    %cst_37 = arith.constant 0.000000e+00 : f32
    %82 = vector.broadcast %cst_37 : f32 to vector<32x128xf32>
    %83 = arith.maximumf %81, %82 : vector<32x128xf32>
    %84 = vector.shape_cast %83 : vector<32x128xf32> to vector<2x16x128xf32>
    %c0_38 = arith.constant 0 : index
    %c0_39 = arith.constant 0 : index
    %85 = vector.load %arg11[%c0_38, %c0_39] : memref<640x128xf32, #tpu.memory_space<vmem>>, vector<640x128xf32>
    %c0_40 = arith.constant 0 : index
    %c0_41 = arith.constant 0 : index
    %86 = vector.load %arg12[%c0_40, %c0_41] : memref<1x128xf32, #tpu.memory_space<vmem>>, vector<1x128xf32>
    %cst_42 = arith.constant 0.000000e+00 : f32
    %87 = vector.broadcast %cst_42 : f32 to vector<2x2x128xf32>
    %cst_43 = arith.constant 0.000000e+00 : f32
    %88 = vector.broadcast %cst_43 : f32 to vector<2x2x128xf32>
    %89 = tpu.concatenate %87, %84, %88 in 1 : vector<2x2x128xf32>, vector<2x16x128xf32>, vector<2x2x128xf32> -> vector<2x20x128xf32>
    %90 = vector.extract_strided_slice %89 {offsets = [0, 0, 0], sizes = [2, 16, 128], strides = [1, 1, 1]} : vector<2x20x128xf32> to vector<2x16x128xf32>
    %91 = vector.extract_strided_slice %89 {offsets = [0, 1, 0], sizes = [2, 16, 128], strides = [1, 1, 1]} : vector<2x20x128xf32> to vector<2x16x128xf32>
    %92 = vector.extract_strided_slice %89 {offsets = [0, 2, 0], sizes = [2, 16, 128], strides = [1, 1, 1]} : vector<2x20x128xf32> to vector<2x16x128xf32>
    %93 = vector.extract_strided_slice %89 {offsets = [0, 3, 0], sizes = [2, 16, 128], strides = [1, 1, 1]} : vector<2x20x128xf32> to vector<2x16x128xf32>
    %94 = vector.extract_strided_slice %89 {offsets = [0, 4, 0], sizes = [2, 16, 128], strides = [1, 1, 1]} : vector<2x20x128xf32> to vector<2x16x128xf32>
    %95 = tpu.concatenate %90, %91, %92, %93, %94 in 2 : vector<2x16x128xf32>, vector<2x16x128xf32>, vector<2x16x128xf32>, vector<2x16x128xf32>, vector<2x16x128xf32> -> vector<2x16x640xf32>
    %96 = vector.shape_cast %95 : vector<2x16x640xf32> to vector<32x640xf32>
    %cst_44 = arith.constant dense<0.000000e+00> : vector<32x128xf32>
    %97 = tpu.matmul %96, %85, %cst_44 {dimension_numbers = #tpu.dot_dimension_numbers<[1], [0], [0], [1], [0, 0, 1, 1], [], []>} : vector<32x640xf32>, vector<640x128xf32>, vector<32x128xf32> -> vector<32x128xf32>
    %98 = vector.broadcast %86 : vector<1x128xf32> to vector<32x128xf32>
    %99 = arith.addf %97, %98 : vector<32x128xf32>
    %cst_45 = arith.constant 0.000000e+00 : f32
    %100 = vector.broadcast %cst_45 : f32 to vector<32x128xf32>
    %101 = arith.maximumf %99, %100 : vector<32x128xf32>
    %102 = vector.shape_cast %101 : vector<32x128xf32> to vector<2x16x128xf32>
    %c0_46 = arith.constant 0 : index
    %c0_47 = arith.constant 0 : index
    %103 = vector.load %arg13[%c0_46, %c0_47] : memref<384x128xf32, #tpu.memory_space<vmem>>, vector<384x128xf32>
    %c0_48 = arith.constant 0 : index
    %c0_49 = arith.constant 0 : index
    %104 = vector.load %arg14[%c0_48, %c0_49] : memref<1x128xf32, #tpu.memory_space<vmem>>, vector<1x128xf32>
    %cst_50 = arith.constant 0.000000e+00 : f32
    %105 = vector.broadcast %cst_50 : f32 to vector<2x1x128xf32>
    %cst_51 = arith.constant 0.000000e+00 : f32
    %106 = vector.broadcast %cst_51 : f32 to vector<2x1x128xf32>
    %107 = tpu.concatenate %105, %102, %106 in 1 : vector<2x1x128xf32>, vector<2x16x128xf32>, vector<2x1x128xf32> -> vector<2x18x128xf32>
    %108 = vector.extract_strided_slice %107 {offsets = [0, 0, 0], sizes = [2, 16, 128], strides = [1, 1, 1]} : vector<2x18x128xf32> to vector<2x16x128xf32>
    %109 = vector.extract_strided_slice %107 {offsets = [0, 1, 0], sizes = [2, 16, 128], strides = [1, 1, 1]} : vector<2x18x128xf32> to vector<2x16x128xf32>
    %110 = vector.extract_strided_slice %107 {offsets = [0, 2, 0], sizes = [2, 16, 128], strides = [1, 1, 1]} : vector<2x18x128xf32> to vector<2x16x128xf32>
    %111 = tpu.concatenate %108, %109, %110 in 2 : vector<2x16x128xf32>, vector<2x16x128xf32>, vector<2x16x128xf32> -> vector<2x16x384xf32>
    %112 = vector.shape_cast %111 : vector<2x16x384xf32> to vector<32x384xf32>
    %cst_52 = arith.constant dense<0.000000e+00> : vector<32x128xf32>
    %113 = tpu.matmul %112, %103, %cst_52 {dimension_numbers = #tpu.dot_dimension_numbers<[1], [0], [0], [1], [0, 0, 1, 1], [], []>} : vector<32x384xf32>, vector<384x128xf32>, vector<32x128xf32> -> vector<32x128xf32>
    %114 = vector.broadcast %104 : vector<1x128xf32> to vector<32x128xf32>
    %115 = arith.addf %113, %114 : vector<32x128xf32>
    %116 = vector.shape_cast %115 : vector<32x128xf32> to vector<2x16x128xf32>
    %c0_53 = arith.constant 0 : index
    %c0_54 = arith.constant 0 : index
    %117 = vector.load %arg15[%c0_53, %c0_54] : memref<64x128xf32, #tpu.memory_space<vmem>>, vector<64x128xf32>
    %c0_55 = arith.constant 0 : index
    %c0_56 = arith.constant 0 : index
    %118 = vector.load %arg16[%c0_55, %c0_56] : memref<1x128xf32, #tpu.memory_space<vmem>>, vector<1x128xf32>
    %119 = vector.shape_cast %63 : vector<2x16x64xf32> to vector<32x64xf32>
    %cst_57 = arith.constant dense<0.000000e+00> : vector<32x128xf32>
    %120 = tpu.matmul %119, %117, %cst_57 {dimension_numbers = #tpu.dot_dimension_numbers<[1], [0], [0], [1], [0, 0, 1, 1], [], []>} : vector<32x64xf32>, vector<64x128xf32>, vector<32x128xf32> -> vector<32x128xf32>
    %121 = vector.broadcast %118 : vector<1x128xf32> to vector<32x128xf32>
    %122 = arith.addf %120, %121 : vector<32x128xf32>
    %123 = vector.shape_cast %122 : vector<32x128xf32> to vector<2x16x128xf32>
    %124 = arith.addf %116, %123 : vector<2x16x128xf32>
    %cst_58 = arith.constant 0.000000e+00 : f32
    %125 = vector.broadcast %cst_58 : f32 to vector<2x16x128xf32>
    %126 = arith.maximumf %124, %125 : vector<2x16x128xf32>
    %c0_59 = arith.constant 0 : index
    %c0_60 = arith.constant 0 : index
    %127 = vector.load %arg17[%c0_59, %c0_60] : memref<1024x128xf32, #tpu.memory_space<vmem>>, vector<1024x128xf32>
    %c0_61 = arith.constant 0 : index
    %c0_62 = arith.constant 0 : index
    %128 = vector.load %arg18[%c0_61, %c0_62] : memref<1x128xf32, #tpu.memory_space<vmem>>, vector<1x128xf32>
    %cst_63 = arith.constant 0.000000e+00 : f32
    %129 = vector.broadcast %cst_63 : f32 to vector<2x3x128xf32>
    %cst_64 = arith.constant 0.000000e+00 : f32
    %130 = vector.broadcast %cst_64 : f32 to vector<2x4x128xf32>
    %131 = tpu.concatenate %129, %126, %130 in 1 : vector<2x3x128xf32>, vector<2x16x128xf32>, vector<2x4x128xf32> -> vector<2x23x128xf32>
    %132 = vector.extract_strided_slice %131 {offsets = [0, 0, 0], sizes = [2, 16, 128], strides = [1, 1, 1]} : vector<2x23x128xf32> to vector<2x16x128xf32>
    %133 = vector.extract_strided_slice %131 {offsets = [0, 1, 0], sizes = [2, 16, 128], strides = [1, 1, 1]} : vector<2x23x128xf32> to vector<2x16x128xf32>
    %134 = vector.extract_strided_slice %131 {offsets = [0, 2, 0], sizes = [2, 16, 128], strides = [1, 1, 1]} : vector<2x23x128xf32> to vector<2x16x128xf32>
    %135 = vector.extract_strided_slice %131 {offsets = [0, 3, 0], sizes = [2, 16, 128], strides = [1, 1, 1]} : vector<2x23x128xf32> to vector<2x16x128xf32>
    %136 = vector.extract_strided_slice %131 {offsets = [0, 4, 0], sizes = [2, 16, 128], strides = [1, 1, 1]} : vector<2x23x128xf32> to vector<2x16x128xf32>
    %137 = vector.extract_strided_slice %131 {offsets = [0, 5, 0], sizes = [2, 16, 128], strides = [1, 1, 1]} : vector<2x23x128xf32> to vector<2x16x128xf32>
    %138 = vector.extract_strided_slice %131 {offsets = [0, 6, 0], sizes = [2, 16, 128], strides = [1, 1, 1]} : vector<2x23x128xf32> to vector<2x16x128xf32>
    %139 = vector.extract_strided_slice %131 {offsets = [0, 7, 0], sizes = [2, 16, 128], strides = [1, 1, 1]} : vector<2x23x128xf32> to vector<2x16x128xf32>
    %140 = tpu.concatenate %132, %133, %134, %135, %136, %137, %138, %139 in 2 : vector<2x16x128xf32>, vector<2x16x128xf32>, vector<2x16x128xf32>, vector<2x16x128xf32>, vector<2x16x128xf32>, vector<2x16x128xf32>, vector<2x16x128xf32>, vector<2x16x128xf32> -> vector<2x16x1024xf32>
    %141 = vector.shape_cast %140 : vector<2x16x1024xf32> to vector<32x1024xf32>
    %cst_65 = arith.constant dense<0.000000e+00> : vector<32x128xf32>
    %142 = tpu.matmul %141, %127, %cst_65 {dimension_numbers = #tpu.dot_dimension_numbers<[1], [0], [0], [1], [0, 0, 1, 1], [], []>} : vector<32x1024xf32>, vector<1024x128xf32>, vector<32x128xf32> -> vector<32x128xf32>
    %143 = vector.broadcast %128 : vector<1x128xf32> to vector<32x128xf32>
    %144 = arith.addf %142, %143 : vector<32x128xf32>
    %cst_66 = arith.constant 0.000000e+00 : f32
    %145 = vector.broadcast %cst_66 : f32 to vector<32x128xf32>
    %146 = arith.maximumf %144, %145 : vector<32x128xf32>
    %147 = vector.shape_cast %146 : vector<32x128xf32> to vector<2x16x128xf32>
    %c0_67 = arith.constant 0 : index
    %c0_68 = arith.constant 0 : index
    %148 = vector.load %arg19[%c0_67, %c0_68] : memref<640x128xf32, #tpu.memory_space<vmem>>, vector<640x128xf32>
    %c0_69 = arith.constant 0 : index
    %c0_70 = arith.constant 0 : index
    %149 = vector.load %arg20[%c0_69, %c0_70] : memref<1x128xf32, #tpu.memory_space<vmem>>, vector<1x128xf32>
    %cst_71 = arith.constant 0.000000e+00 : f32
    %150 = vector.broadcast %cst_71 : f32 to vector<2x2x128xf32>
    %cst_72 = arith.constant 0.000000e+00 : f32
    %151 = vector.broadcast %cst_72 : f32 to vector<2x2x128xf32>
    %152 = tpu.concatenate %150, %147, %151 in 1 : vector<2x2x128xf32>, vector<2x16x128xf32>, vector<2x2x128xf32> -> vector<2x20x128xf32>
    %153 = vector.extract_strided_slice %152 {offsets = [0, 0, 0], sizes = [2, 16, 128], strides = [1, 1, 1]} : vector<2x20x128xf32> to vector<2x16x128xf32>
    %154 = vector.extract_strided_slice %152 {offsets = [0, 1, 0], sizes = [2, 16, 128], strides = [1, 1, 1]} : vector<2x20x128xf32> to vector<2x16x128xf32>
    %155 = vector.extract_strided_slice %152 {offsets = [0, 2, 0], sizes = [2, 16, 128], strides = [1, 1, 1]} : vector<2x20x128xf32> to vector<2x16x128xf32>
    %156 = vector.extract_strided_slice %152 {offsets = [0, 3, 0], sizes = [2, 16, 128], strides = [1, 1, 1]} : vector<2x20x128xf32> to vector<2x16x128xf32>
    %157 = vector.extract_strided_slice %152 {offsets = [0, 4, 0], sizes = [2, 16, 128], strides = [1, 1, 1]} : vector<2x20x128xf32> to vector<2x16x128xf32>
    %158 = tpu.concatenate %153, %154, %155, %156, %157 in 2 : vector<2x16x128xf32>, vector<2x16x128xf32>, vector<2x16x128xf32>, vector<2x16x128xf32>, vector<2x16x128xf32> -> vector<2x16x640xf32>
    %159 = vector.shape_cast %158 : vector<2x16x640xf32> to vector<32x640xf32>
    %cst_73 = arith.constant dense<0.000000e+00> : vector<32x128xf32>
    %160 = tpu.matmul %159, %148, %cst_73 {dimension_numbers = #tpu.dot_dimension_numbers<[1], [0], [0], [1], [0, 0, 1, 1], [], []>} : vector<32x640xf32>, vector<640x128xf32>, vector<32x128xf32> -> vector<32x128xf32>
    %161 = vector.broadcast %149 : vector<1x128xf32> to vector<32x128xf32>
    %162 = arith.addf %160, %161 : vector<32x128xf32>
    %cst_74 = arith.constant 0.000000e+00 : f32
    %163 = vector.broadcast %cst_74 : f32 to vector<32x128xf32>
    %164 = arith.maximumf %162, %163 : vector<32x128xf32>
    %165 = vector.shape_cast %164 : vector<32x128xf32> to vector<2x16x128xf32>
    %c0_75 = arith.constant 0 : index
    %c0_76 = arith.constant 0 : index
    %166 = vector.load %arg21[%c0_75, %c0_76] : memref<384x128xf32, #tpu.memory_space<vmem>>, vector<384x128xf32>
    %c0_77 = arith.constant 0 : index
    %c0_78 = arith.constant 0 : index
    %167 = vector.load %arg22[%c0_77, %c0_78] : memref<1x128xf32, #tpu.memory_space<vmem>>, vector<1x128xf32>
    %cst_79 = arith.constant 0.000000e+00 : f32
    %168 = vector.broadcast %cst_79 : f32 to vector<2x1x128xf32>
    %cst_80 = arith.constant 0.000000e+00 : f32
    %169 = vector.broadcast %cst_80 : f32 to vector<2x1x128xf32>
    %170 = tpu.concatenate %168, %165, %169 in 1 : vector<2x1x128xf32>, vector<2x16x128xf32>, vector<2x1x128xf32> -> vector<2x18x128xf32>
    %171 = vector.extract_strided_slice %170 {offsets = [0, 0, 0], sizes = [2, 16, 128], strides = [1, 1, 1]} : vector<2x18x128xf32> to vector<2x16x128xf32>
    %172 = vector.extract_strided_slice %170 {offsets = [0, 1, 0], sizes = [2, 16, 128], strides = [1, 1, 1]} : vector<2x18x128xf32> to vector<2x16x128xf32>
    %173 = vector.extract_strided_slice %170 {offsets = [0, 2, 0], sizes = [2, 16, 128], strides = [1, 1, 1]} : vector<2x18x128xf32> to vector<2x16x128xf32>
    %174 = tpu.concatenate %171, %172, %173 in 2 : vector<2x16x128xf32>, vector<2x16x128xf32>, vector<2x16x128xf32> -> vector<2x16x384xf32>
    %175 = vector.shape_cast %174 : vector<2x16x384xf32> to vector<32x384xf32>
    %cst_81 = arith.constant dense<0.000000e+00> : vector<32x128xf32>
    %176 = tpu.matmul %175, %166, %cst_81 {dimension_numbers = #tpu.dot_dimension_numbers<[1], [0], [0], [1], [0, 0, 1, 1], [], []>} : vector<32x384xf32>, vector<384x128xf32>, vector<32x128xf32> -> vector<32x128xf32>
    %177 = vector.broadcast %167 : vector<1x128xf32> to vector<32x128xf32>
    %178 = arith.addf %176, %177 : vector<32x128xf32>
    %179 = vector.shape_cast %178 : vector<32x128xf32> to vector<2x16x128xf32>
    %c0_82 = arith.constant 0 : index
    %c0_83 = arith.constant 0 : index
    %180 = vector.load %arg23[%c0_82, %c0_83] : memref<128x128xf32, #tpu.memory_space<vmem>>, vector<128x128xf32>
    %c0_84 = arith.constant 0 : index
    %c0_85 = arith.constant 0 : index
    %181 = vector.load %arg24[%c0_84, %c0_85] : memref<1x128xf32, #tpu.memory_space<vmem>>, vector<1x128xf32>
    %182 = vector.shape_cast %126 : vector<2x16x128xf32> to vector<32x128xf32>
    %cst_86 = arith.constant dense<0.000000e+00> : vector<32x128xf32>
    %183 = tpu.matmul %182, %180, %cst_86 {dimension_numbers = #tpu.dot_dimension_numbers<[1], [0], [0], [1], [0, 0, 1, 1], [], []>} : vector<32x128xf32>, vector<128x128xf32>, vector<32x128xf32> -> vector<32x128xf32>
    %184 = vector.broadcast %181 : vector<1x128xf32> to vector<32x128xf32>
    %185 = arith.addf %183, %184 : vector<32x128xf32>
    %186 = vector.shape_cast %185 : vector<32x128xf32> to vector<2x16x128xf32>
    %187 = arith.addf %179, %186 : vector<2x16x128xf32>
    %cst_87 = arith.constant 0.000000e+00 : f32
    %188 = vector.broadcast %cst_87 : f32 to vector<2x16x128xf32>
    %189 = arith.maximumf %187, %188 : vector<2x16x128xf32>
    %c0_88 = arith.constant 0 : index
    %c0_89 = arith.constant 0 : index
    %190 = vector.load %arg25[%c0_88, %c0_89] : memref<128x9xf32, #tpu.memory_space<vmem>>, vector<128x9xf32>
    %c0_90 = arith.constant 0 : index
    %c0_91 = arith.constant 0 : index
    %191 = vector.load %arg26[%c0_90, %c0_91] : memref<1x9xf32, #tpu.memory_space<vmem>>, vector<1x9xf32>
    %cst_92 = arith.constant dense<0.000000e+00> : vector<2x128xf32>
    %192 = vector.multi_reduction <add>, %189, %cst_92 [1] : vector<2x16x128xf32> to vector<2x128xf32>
    %cst_93 = arith.constant 6.250000e-02 : f32
    %193 = vector.broadcast %cst_93 : f32 to vector<2x128xf32>
    %194 = arith.mulf %192, %193 : vector<2x128xf32>
    %cst_94 = arith.constant dense<0.000000e+00> : vector<2x9xf32>
    %195 = tpu.matmul %194, %190, %cst_94 {dimension_numbers = #tpu.dot_dimension_numbers<[1], [0], [0], [1], [0, 0, 1, 1], [], []>} : vector<2x128xf32>, vector<128x9xf32>, vector<2x9xf32> -> vector<2x9xf32>
    %196 = vector.broadcast %191 : vector<1x9xf32> to vector<2x9xf32>
    %197 = arith.addf %195, %196 : vector<2x9xf32>
    %c0_95 = arith.constant 0 : index
    %c0_96 = arith.constant 0 : index
    %198 = vector.load %arg27[%c0_95, %c0_96] : memref<2x9xf32, #tpu.memory_space<vmem>>, vector<2x9xf32>
    tpu.vector_store %arg27[%c0_95, %c0_96], %197 {strides = array<i32>} : memref<2x9xf32, #tpu.memory_space<vmem>>, vector<2x9xf32>,
    return
  }
}

</mosaic_0001>

<llo_original>
// kernel: resnet_forward.1
$region0: #{resnet_forward.1}
  #allocation0 [shape = 'u32[]', space=smem, size = 0x4, offset = 0x4, fixed_abs, tag = 'smem constant byte address 0x4 - core index']
  #allocation1 [shape = 'u32[72,128]{1,0:T(1,128)}', space=vmem, size = 0x9000, scoped, tag = 'internal scratch']
  %s0 = inlined_call_operand.vmem [shape: f32[2,16,2], index: 0, kind: input, shape index: {}]
  %s1 = inlined_call_operand.vmem [shape: f32[16,64], index: 1, kind: input, shape index: {}]
  %s2 = inlined_call_operand.vmem [shape: f32[1,64], index: 2, kind: input, shape index: {}]
  %s3 = inlined_call_operand.vmem [shape: f32[320,64], index: 3, kind: input, shape index: {}]
  %s4 = inlined_call_operand.vmem [shape: f32[1,64], index: 4, kind: input, shape index: {}]
  %s5 = inlined_call_operand.vmem [shape: f32[192,64], index: 5, kind: input, shape index: {}]
  %s6 = inlined_call_operand.vmem [shape: f32[1,64], index: 6, kind: input, shape index: {}]
  %s7 = inlined_call_operand.vmem [shape: f32[2,64], index: 7, kind: input, shape index: {}]
  %s8 = inlined_call_operand.vmem [shape: f32[1,64], index: 8, kind: input, shape index: {}]
  %s9 = inlined_call_operand.hbm [shape: f32[512,128], index: 9, kind: input, shape index: {}]
  %s10 = inlined_call_operand.vmem [shape: f32[1,128], index: 10, kind: input, shape index: {}]
  %s11 = inlined_call_operand.vmem [shape: f32[640,128], index: 11, kind: input, shape index: {}]
  %s12 = inlined_call_operand.vmem [shape: f32[1,128], index: 12, kind: input, shape index: {}]
  %s13 = inlined_call_operand.hbm [shape: f32[384,128], index: 13, kind: input, shape index: {}]
  %s14 = inlined_call_operand.vmem [shape: f32[1,128], index: 14, kind: input, shape index: {}]
  %s15 = inlined_call_operand.hbm [shape: f32[64,128], index: 15, kind: input, shape index: {}]
  %s16 = inlined_call_operand.vmem [shape: f32[1,128], index: 16, kind: input, shape index: {}]
  %s17 = inlined_call_operand.hbm [shape: f32[1024,128], index: 17, kind: input, shape index: {}]
  %s18 = inlined_call_operand.vmem [shape: f32[1,128], index: 18, kind: input, shape index: {}]
  %s19 = inlined_call_operand.hbm [shape: f32[640,128], index: 19, kind: input, shape index: {}]
  %s20 = inlined_call_operand.vmem [shape: f32[1,128], index: 20, kind: input, shape index: {}]
  %s21 = inlined_call_operand.hbm [shape: f32[384,128], index: 21, kind: input, shape index: {}]
  %s22 = inlined_call_operand.vmem [shape: f32[1,128], index: 22, kind: input, shape index: {}]
  %s23 = inlined_call_operand.hbm [shape: f32[128,128], index: 23, kind: input, shape index: {}]
  %s24 = inlined_call_operand.vmem [shape: f32[1,128], index: 24, kind: input, shape index: {}]
  %s25 = inlined_call_operand.vmem [shape: f32[128,9], index: 25, kind: input, shape index: {}]
  %s26 = inlined_call_operand.vmem [shape: f32[1,9], index: 26, kind: input, shape index: {}]
  %s27 = inlined_call_operand.hbm [shape: f32[2,9], index: 27, kind: output, shape index: {}]
  %s28 = sld [smem:[#allocation0]]
  $region146: #{resnet_forward.1} parent=0
    _
  %s30 = ssub.s32 1, %s28
  %s31 = scalar_select 0, %s30, %s28
  $region1: #{resnet_forward.1} parent=0
    #allocation2 [shape = 'u8[262144]{0}', space=vmem, size = 0x40000, scoped, tag = 'input window, operand 9, single buffered']
    #allocation3 [shape = 's32[1]{0}', space=sflag, size = 0x4, scoped, tag = 'scoped memory for resnet_forward.1']
    #allocation4 [shape = 's32[1]{0}', space=sflag, size = 0x4, scoped, tag = 'scoped memory for resnet_forward.1']
    #allocation5 [shape = 'u8[196608]{0}', space=vmem, size = 0x30000, scoped, tag = 'input window, operand 13, single buffered']
    #allocation6 [shape = 's32[1]{0}', space=sflag, size = 0x4, scoped, tag = 'scoped memory for resnet_forward.1']
    #allocation7 [shape = 'u8[32768]{0}', space=vmem, size = 0x8000, scoped, tag = 'input window, operand 15, single buffered']
    #allocation8 [shape = 'u8[524288]{0}', space=vmem, size = 0x80000, scoped, tag = 'input window, operand 17, single buffered']
    #allocation9 [shape = 's32[1]{0}', space=sflag, size = 0x4, scoped, tag = 'scoped memory for resnet_forward.1']
    #allocation10 [shape = 'u8[327680]{0}', space=vmem, size = 0x50000, scoped, tag = 'input window, operand 19, single buffered']
    #allocation11 [shape = 'u8[196608]{0}', space=vmem, size = 0x30000, scoped, tag = 'input window, operand 21, single buffered']
    #allocation12 [shape = 's32[1]{0}', space=sflag, size = 0x4, scoped, tag = 'scoped memory for resnet_forward.1']
    #allocation13 [shape = 'u8[65536]{0}', space=vmem, size = 0x10000, scoped, tag = 'input window, operand 23, single buffered']
    #allocation14 [shape = 'u8[1024]{0}', space=vmem, size = 0x400, scoped, tag = 'output window, operand 0, single buffered']
    %32 = vsyncpa [#allocation3], 0
    %33 = vsyncpa [#allocation6], 0
    %34 = vsyncpa [#allocation9], 0
    %35 = vsyncpa [#allocation12], 0
    %36 = vsyncpa [#allocation4], 0
    // Predicated region
    $region2: #{resnet_forward.1} parent=1 // pred_check
      _
    $region3: #{resnet_forward.1} parent=1 // pred_check_branch
      %38 = sbr.rel (0) target = $region5
    $region4: #{resnet_forward.1} parent=1 // pred_region
      _
    $region5: #{resnet_forward.1} parent=1 // pred_fallthru
      _
    // Predicated region
    $region6: #{resnet_forward.1} parent=1 // pred_check
      _
    $region7: #{resnet_forward.1} parent=1 // pred_check_branch
      %40 = sbr.rel (0) target = $region9
    $region8: #{resnet_forward.1} parent=1 // pred_region
      _
    $region9: #{resnet_forward.1} parent=1 // pred_fallthru
      _
    // Predicated region
    $region10: #{resnet_forward.1} parent=1 // pred_check
      _
    $region11: #{resnet_forward.1} parent=1 // pred_check_branch
      %42 = sbr.rel (0) target = $region13
    $region12: #{resnet_forward.1} parent=1 // pred_region
      _
    $region13: #{resnet_forward.1} parent=1 // pred_fallthru
      _
    // Predicated region
    $region14: #{resnet_forward.1} parent=1 // pred_check
      _
    $region15: #{resnet_forward.1} parent=1 // pred_check_branch
      %44 = sbr.rel (0) target = $region17
    $region16: #{resnet_forward.1} parent=1 // pred_region
      _
    $region17: #{resnet_forward.1} parent=1 // pred_fallthru
      _
    // Predicated region
    $region18: #{resnet_forward.1} parent=1 // pred_check
      _
    $region19: #{resnet_forward.1} parent=1 // pred_check_branch
      %46 = sbr.rel (0) target = $region21
    $region20: #{resnet_forward.1} parent=1 // pred_region
      _
    $region21: #{resnet_forward.1} parent=1 // pred_fallthru
      _
    // Predicated region
    $region22: #{resnet_forward.1} parent=1 // pred_check
      _
    $region23: #{resnet_forward.1} parent=1 // pred_check_branch
      %48 = sbr.rel (0) target = $region25
    $region24: #{resnet_forward.1} parent=1 // pred_region
      _
    $region25: #{resnet_forward.1} parent=1 // pred_fallthru
      _
    // Predicated region
    $region26: #{resnet_forward.1} parent=1 // pred_check
      _
    $region27: #{resnet_forward.1} parent=1 // pred_check_branch
      %50 = sbr.rel (0) target = $region29
    $region28: #{resnet_forward.1} parent=1 // pred_region
      _
    $region29: #{resnet_forward.1} parent=1 // pred_fallthru
      _
    // Predicated region
    $region30: #{resnet_forward.1} parent=1 // pred_check
      _
    $region31: #{resnet_forward.1} parent=1 // pred_check_branch
      %52 = sbr.rel (0) target = $region33
    $region32: #{resnet_forward.1} parent=1 // pred_region
      _
    $region33: #{resnet_forward.1} parent=1 // pred_fallthru
      _
    // Predicated region
    $region34: #{resnet_forward.1} parent=1 // pred_check
      _
    $region35: #{resnet_forward.1} parent=1 // pred_check_branch
      %54 = sbr.rel (0) target = $region37
    $region36: #{resnet_forward.1} parent=1 // pred_region
      _
    $region37: #{resnet_forward.1} parent=1 // pred_fallthru
      _
    // Predicated region
    $region38: #{resnet_forward.1} parent=1 // pred_check
      _
    $region39: #{resnet_forward.1} parent=1 // pred_check_branch
      %56 = sbr.rel (0) target = $region41
    $region40: #{resnet_forward.1} parent=1 // pred_region
      %58 = vsyncadd [#allocation3], 0
      %s59 = sshll.u32 %s9, 4
      %s60 = int_to_ptr.hbm [resolvable:$true] %s59
      %s61 = sshll.u32 [#allocation2], 4
      %s62 = int_to_ptr.vmem [resolvable:$true] %s61
      %67 = dma.hbm_to_vmem [thread:$0]  %s60, 8192, %s62, [#allocation3], 128, 128, 8
    $region41: #{resnet_forward.1} parent=1 // pred_fallthru
      _
    // Predicated region
    $region42: #{resnet_forward.1} parent=1 // pred_check
      _
    $region43: #{resnet_forward.1} parent=1 // pred_check_branch
      %69 = sbr.rel (0) target = $region45
    $region44: #{resnet_forward.1} parent=1 // pred_region
      _
    $region45: #{resnet_forward.1} parent=1 // pred_fallthru
      _
    // Predicated region
    $region46: #{resnet_forward.1} parent=1 // pred_check
      _
    $region47: #{resnet_forward.1} parent=1 // pred_check_branch
      %71 = sbr.rel (0) target = $region49
    $region48: #{resnet_forward.1} parent=1 // pred_region
      _
    $region49: #{resnet_forward.1} parent=1 // pred_fallthru
      _
    // Predicated region
    $region50: #{resnet_forward.1} parent=1 // pred_check
      _
    $region51: #{resnet_forward.1} parent=1 // pred_check_branch
      %73 = sbr.rel (0) target = $region53
    $region52: #{resnet_forward.1} parent=1 // pred_region
      _
    $region53: #{resnet_forward.1} parent=1 // pred_fallthru
      _
    // Predicated region
    $region54: #{resnet_forward.1} parent=1 // pred_check
      _
    $region55: #{resnet_forward.1} parent=1 // pred_check_branch
      %75 = sbr.rel (0) target = $region57
    $region56: #{resnet_forward.1} parent=1 // pred_region
      %77 = vsyncadd [#allocation6], 0
      %s78 = sshll.u32 %s13, 4
      %s79 = int_to_ptr.hbm [resolvable:$true] %s78
      %s80 = sshll.u32 [#allocation5], 4
      %s81 = int_to_ptr.vmem [resolvable:$true] %s80
      %86 = dma.hbm_to_vmem [thread:$0]  %s79, 6144, %s81, [#allocation6], 128, 128, 8
    $region57: #{resnet_forward.1} parent=1 // pred_fallthru
      _
    // Predicated region
    $region58: #{resnet_forward.1} parent=1 // pred_check
      _
    $region59: #{resnet_forward.1} parent=1 // pred_check_branch
      %88 = sbr.rel (0) target = $region61
    $region60: #{resnet_forward.1} parent=1 // pred_region
      _
    $region61: #{resnet_forward.1} parent=1 // pred_fallthru
      _
    // Predicated region
    $region62: #{resnet_forward.1} parent=1 // pred_check
      _
    $region63: #{resnet_forward.1} parent=1 // pred_check_branch
      %90 = sbr.rel (0) target = $region65
    $region64: #{resnet_forward.1} parent=1 // pred_region
      %92 = vsyncadd [#allocation6], 0
      %s93 = sshll.u32 %s15, 4
      %s94 = int_to_ptr.hbm [resolvable:$true] %s93
      %s95 = sshll.u32 [#allocation7], 4
      %s96 = int_to_ptr.vmem [resolvable:$true] %s95
      %101 = dma.hbm_to_vmem [thread:$0]  %s94, 1024, %s96, [#allocation6], 128, 128, 8
    $region65: #{resnet_forward.1} parent=1 // pred_fallthru
      _
    // Predicated region
    $region66: #{resnet_forward.1} parent=1 // pred_check
      _
    $region67: #{resnet_forward.1} parent=1 // pred_check_branch
      %103 = sbr.rel (0) target = $region69
    $region68: #{resnet_forward.1} parent=1 // pred_region
      _
    $region69: #{resnet_forward.1} parent=1 // pred_fallthru
      _
    // Predicated region
    $region70: #{resnet_forward.1} parent=1 // pred_check
      _
    $region71: #{resnet_forward.1} parent=1 // pred_check_branch
      %105 = sbr.rel (0) target = $region73
    $region72: #{resnet_forward.1} parent=1 // pred_region
      %107 = vsyncadd [#allocation9], 0
      %s108 = sshll.u32 %s17, 4
      %s109 = int_to_ptr.hbm [resolvable:$true] %s108
      %s110 = sshll.u32 [#allocation8], 4
      %s111 = int_to_ptr.vmem [resolvable:$true] %s110
      %116 = dma.hbm_to_vmem [thread:$0]  %s109, 16384, %s111, [#allocation9], 128, 128, 8
    $region73: #{resnet_forward.1} parent=1 // pred_fallthru
      _
    // Predicated region
    $region74: #{resnet_forward.1} parent=1 // pred_check
      _
    $region75: #{resnet_forward.1} parent=1 // pred_check_branch
      %118 = sbr.rel (0) target = $region77
    $region76: #{resnet_forward.1} parent=1 // pred_region
      _
    $region77: #{resnet_forward.1} parent=1 // pred_fallthru
      _
    // Predicated region
    $region78: #{resnet_forward.1} parent=1 // pred_check
      _
    $region79: #{resnet_forward.1} parent=1 // pred_check_branch
      %120 = sbr.rel (0) target = $region81
    $region80: #{resnet_forward.1} parent=1 // pred_region
      %122 = vsyncadd [#allocation9], 0
      %s123 = sshll.u32 %s19, 4
      %s124 = int_to_ptr.hbm [resolvable:$true] %s123
      %s125 = sshll.u32 [#allocation10], 4
      %s126 = int_to_ptr.vmem [resolvable:$true] %s125
      %131 = dma.hbm_to_vmem [thread:$0]  %s124, 10240, %s126, [#allocation9], 128, 128, 8
    $region81: #{resnet_forward.1} parent=1 // pred_fallthru
      _
    // Predicated region
    $region82: #{resnet_forward.1} parent=1 // pred_check
      _
    $region83: #{resnet_forward.1} parent=1 // pred_check_branch
      %133 = sbr.rel (0) target = $region85
    $region84: #{resnet_forward.1} parent=1 // pred_region
      _
    $region85: #{resnet_forward.1} parent=1 // pred_fallthru
      _
    // Predicated region
    $region86: #{resnet_forward.1} parent=1 // pred_check
      _
    $region87: #{resnet_forward.1} parent=1 // pred_check_branch
      %135 = sbr.rel (0) target = $region89
    $region88: #{resnet_forward.1} parent=1 // pred_region
      %137 = vsyncadd [#allocation12], 0
      %s138 = sshll.u32 %s21, 4
      %s139 = int_to_ptr.hbm [resolvable:$true] %s138
      %s140 = sshll.u32 [#allocation11], 4
      %s141 = int_to_ptr.vmem [resolvable:$true] %s140
      %146 = dma.hbm_to_vmem [thread:$0]  %s139, 6144, %s141, [#allocation12], 128, 128, 8
    $region89: #{resnet_forward.1} parent=1 // pred_fallthru
      _
    // Predicated region
    $region90: #{resnet_forward.1} parent=1 // pred_check
      _
    $region91: #{resnet_forward.1} parent=1 // pred_check_branch
      %148 = sbr.rel (0) target = $region93
    $region92: #{resnet_forward.1} parent=1 // pred_region
      _
    $region93: #{resnet_forward.1} parent=1 // pred_fallthru
      _
    // Predicated region
    $region94: #{resnet_forward.1} parent=1 // pred_check
      _
    $region95: #{resnet_forward.1} parent=1 // pred_check_branch
      %150 = sbr.rel (0) target = $region97
    $region96: #{resnet_forward.1} parent=1 // pred_region
      %152 = vsyncadd [#allocation12], 0
      %s153 = sshll.u32 %s23, 4
      %s154 = int_to_ptr.hbm [resolvable:$true] %s153
      %s155 = sshll.u32 [#allocation13], 4
      %s156 = int_to_ptr.vmem [resolvable:$true] %s155
      %161 = dma.hbm_to_vmem [thread:$0]  %s154, 2048, %s156, [#allocation12], 128, 128, 8
    $region97: #{resnet_forward.1} parent=1 // pred_fallthru
      _
    // Predicated region
    $region98: #{resnet_forward.1} parent=1 // pred_check
      _
    $region99: #{resnet_forward.1} parent=1 // pred_check_branch
      %163 = sbr.rel (0) target = $region101
    $region100: #{resnet_forward.1} parent=1 // pred_region
      _
    $region101: #{resnet_forward.1} parent=1 // pred_fallthru
      _
    // Predicated region
    $region102: #{resnet_forward.1} parent=1 // pred_check
      _
    $region103: #{resnet_forward.1} parent=1 // pred_check_branch
      %165 = sbr.rel (0) target = $region105
    $region104: #{resnet_forward.1} parent=1 // pred_region
      _
    $region105: #{resnet_forward.1} parent=1 // pred_fallthru
      _
    // Predicated region
    $region106: #{resnet_forward.1} parent=1 // pred_check
      _
    $region107: #{resnet_forward.1} parent=1 // pred_check_branch
      %167 = sbr.rel (0) target = $region109
    $region108: #{resnet_forward.1} parent=1 // pred_region
      _
    $region109: #{resnet_forward.1} parent=1 // pred_fallthru
      _
    // Predicated region
    $region110: #{resnet_forward.1} parent=1 // pred_check
      _
    $region111: #{resnet_forward.1} parent=1 // pred_check_branch
      %169 = sbr.rel (0) target = $region113
    $region112: #{resnet_forward.1} parent=1 // pred_region
      %171 = dma.done [#allocation3], 8192
    $region113: #{resnet_forward.1} parent=1 // pred_fallthru
      _
    // Predicated region
    $region114: #{resnet_forward.1} parent=1 // pred_check
      _
    $region115: #{resnet_forward.1} parent=1 // pred_check_branch
      %173 = sbr.rel (0) target = $region117
    $region116: #{resnet_forward.1} parent=1 // pred_region
      %175 = dma.done [#allocation6], 6144
    $region117: #{resnet_forward.1} parent=1 // pred_fallthru
      _
    // Predicated region
    $region118: #{resnet_forward.1} parent=1 // pred_check
      _
    $region119: #{resnet_forward.1} parent=1 // pred_check_branch
      %177 = sbr.rel (0) target = $region121
    $region120: #{resnet_forward.1} parent=1 // pred_region
      %179 = dma.done [#allocation6], 1024
    $region121: #{resnet_forward.1} parent=1 // pred_fallthru
      _
    // Predicated region
    $region122: #{resnet_forward.1} parent=1 // pred_check
      _
    $region123: #{resnet_forward.1} parent=1 // pred_check_branch
      %181 = sbr.rel (0) target = $region125
    $region124: #{resnet_forward.1} parent=1 // pred_region
      %183 = dma.done [#allocation9], 16384
    $region125: #{resnet_forward.1} parent=1 // pred_fallthru
      _
    // Predicated region
    $region126: #{resnet_forward.1} parent=1 // pred_check
      _
    $region127: #{resnet_forward.1} parent=1 // pred_check_branch
      %185 = sbr.rel (0) target = $region129
    $region128: #{resnet_forward.1} parent=1 // pred_region
      %187 = dma.done [#allocation9], 10240
    $region129: #{resnet_forward.1} parent=1 // pred_fallthru
      _
    // Predicated region
    $region130: #{resnet_forward.1} parent=1 // pred_check
      _
    $region131: #{resnet_forward.1} parent=1 // pred_check_branch
      %189 = sbr.rel (0) target = $region133
    $region132: #{resnet_forward.1} parent=1 // pred_region
      %191 = dma.done [#allocation12], 6144
    $region133: #{resnet_forward.1} parent=1 // pred_fallthru
      _
    // Predicated region
    $region134: #{resnet_forward.1} parent=1 // pred_check
      _
    $region135: #{resnet_forward.1} parent=1 // pred_check_branch
      %193 = sbr.rel (0) target = $region137
    $region136: #{resnet_forward.1} parent=1 // pred_region
      %195 = dma.done [#allocation12], 2048
    $region137: #{resnet_forward.1} parent=1 // pred_fallthru
      _
    %v196 = vld [vmem:[%s0] sm:$0xff]
    %v197 = vld [vmem:[%s0 + $0x8] sm:$0xff]
    %v198 = vld [vmem:[%s0 + $0x10] sm:$0xff]
    %v199 = vld [vmem:[%s0 + $0x18] sm:$0xff]
    %v200 = vld [vmem:[%s1] sm:$0xff]
    %v201 = vld [vmem:[%s1 + $0x8] sm:$0xff]
    %v202 = vld [vmem:[%s2] sm:$0x1]
    %vm207 = vcmask 1042432
    %v208 = vrot.slane %v196, 5
    %v209 = vrot.slane %v197, 5
    %v210 = vsel %vm207, %v208, %v209
    %v211 = vrot.slane %v198, 5
    %v212 = vrot.slane %v199, 5
    %v213 = vsel %vm207, %v211, %v212
    %v220 = vsel %vm207, 0.0, %v208
    %v221 = vsel %vm207, 0.0, %v211
    %v222 = vsel %vm207, %v209, 0.0
    %v223 = vsel %vm207, %v212, 0.0
    %vm228 = vcmask 1046528
    %v229 = vrot.slane %v220, 1
    %v230 = vrot.slane %v210, 1
    %v231 = vsel %vm228, %v229, %v230
    %v232 = vrot.slane %v222, 1
    %v233 = vsel %vm228, %v230, %v232
    %v234 = vrot.slane %v221, 1
    %v235 = vrot.slane %v213, 1
    %v236 = vsel %vm228, %v234, %v235
    %v237 = vrot.slane %v223, 1
    %v238 = vsel %vm228, %v235, %v237
    %239 = vrot.lane.b32.xlu0 %v231, 2
    %v240 = vpop.permute.xlu0 %239
    %241 = vrot.lane.b32.xlu0 %v233, 2
    %v242 = vpop.permute.xlu0 %241
    %243 = vrot.lane.b32.xlu0 %v236, 2
    %v244 = vpop.permute.xlu0 %243
    %245 = vrot.lane.b32.xlu0 %v238, 2
    %v246 = vpop.permute.xlu0 %245
    %vm251 = vcmask 1045504
    %v252 = vrot.slane %v220, 2
    %v253 = vrot.slane %v210, 2
    %v254 = vsel %vm251, %v252, %v253
    %v255 = vrot.slane %v222, 2
    %v256 = vsel %vm251, %v253, %v255
    %v257 = vrot.slane %v221, 2
    %v258 = vrot.slane %v213, 2
    %v259 = vsel %vm251, %v257, %v258
    %v260 = vrot.slane %v223, 2
    %v261 = vsel %vm251, %v258, %v260
    %262 = vrot.lane.b32.xlu0 %v254, 4
    %v263 = vpop.permute.xlu0 %262
    %264 = vrot.lane.b32.xlu0 %v256, 4
    %v265 = vpop.permute.xlu0 %264
    %266 = vrot.lane.b32.xlu0 %v259, 4
    %v267 = vpop.permute.xlu0 %266
    %268 = vrot.lane.b32.xlu0 %v261, 4
    %v269 = vpop.permute.xlu0 %268
    %vm274 = vcmask 1044480
    %v275 = vrot.slane %v220, 3
    %v276 = vrot.slane %v210, 3
    %v277 = vsel %vm274, %v275, %v276
    %v278 = vrot.slane %v222, 3
    %v279 = vsel %vm274, %v276, %v278
    %v280 = vrot.slane %v221, 3
    %v281 = vrot.slane %v213, 3
    %v282 = vsel %vm274, %v280, %v281
    %v283 = vrot.slane %v223, 3
    %v284 = vsel %vm274, %v281, %v283
    %285 = vrot.lane.b32.xlu0 %v277, 6
    %v286 = vpop.permute.xlu0 %285
    %287 = vrot.lane.b32.xlu0 %v279, 6
    %v288 = vpop.permute.xlu0 %287
    %289 = vrot.lane.b32.xlu0 %v282, 6
    %v290 = vpop.permute.xlu0 %289
    %291 = vrot.lane.b32.xlu0 %v284, 6
    %v292 = vpop.permute.xlu0 %291
    %vm297 = vcmask 1043456
    %v298 = vrot.slane %v220, 4
    %v299 = vrot.slane %v210, 4
    %v300 = vsel %vm297, %v298, %v299
    %v301 = vrot.slane %v222, 4
    %v302 = vsel %vm297, %v299, %v301
    %v303 = vrot.slane %v221, 4
    %v304 = vrot.slane %v213, 4
    %v305 = vsel %vm297, %v303, %v304
    %v306 = vrot.slane %v223, 4
    %v307 = vsel %vm297, %v304, %v306
    %308 = vrot.lane.b32.xlu0 %v300, 8
    %v309 = vpop.permute.xlu0 %308
    %310 = vrot.lane.b32.xlu0 %v302, 8
    %v311 = vpop.permute.xlu0 %310
    %312 = vrot.lane.b32.xlu0 %v305, 8
    %v313 = vpop.permute.xlu0 %312
    %314 = vrot.lane.b32.xlu0 %v307, 8
    %v315 = vpop.permute.xlu0 %314
    %v320 = vrot.slane %v220, 5
    %v321 = vrot.slane %v210, 5
    %v322 = vsel %vm207, %v320, %v321
    %v323 = vrot.slane %v222, 5
    %v324 = vsel %vm207, %v321, %v323
    %v325 = vrot.slane %v221, 5
    %v326 = vrot.slane %v213, 5
    %v327 = vsel %vm207, %v325, %v326
    %v328 = vrot.slane %v223, 5
    %v329 = vsel %vm207, %v326, %v328
    %330 = vrot.lane.b32.xlu0 %v322, 10
    %v331 = vpop.permute.xlu0 %330
    %332 = vrot.lane.b32.xlu0 %v324, 10
    %v333 = vpop.permute.xlu0 %332
    %334 = vrot.lane.b32.xlu0 %v327, 10
    %v335 = vpop.permute.xlu0 %334
    %336 = vrot.lane.b32.xlu0 %v329, 10
    %v337 = vpop.permute.xlu0 %336
    %vm342 = vcmask 1041408
    %v343 = vrot.slane %v220, 6
    %v344 = vrot.slane %v210, 6
    %v345 = vsel %vm342, %v343, %v344
    %v346 = vrot.slane %v222, 6
    %v347 = vsel %vm342, %v344, %v346
    %v348 = vrot.slane %v221, 6
    %v349 = vrot.slane %v213, 6
    %v350 = vsel %vm342, %v348, %v349
    %v351 = vrot.slane %v223, 6
    %v352 = vsel %vm342, %v349, %v351
    %353 = vrot.lane.b32.xlu0 %v345, 12
    %v354 = vpop.permute.xlu0 %353
    %355 = vrot.lane.b32.xlu0 %v347, 12
    %v356 = vpop.permute.xlu0 %355
    %357 = vrot.lane.b32.xlu0 %v350, 12
    %v358 = vpop.permute.xlu0 %357
    %359 = vrot.lane.b32.xlu0 %v352, 12
    %v360 = vpop.permute.xlu0 %359
    %vm365 = vcmask 1040384
    %v366 = vrot.slane %v220, 7
    %v367 = vrot.slane %v210, 7
    %v368 = vsel %vm365, %v366, %v367
    %v369 = vrot.slane %v222, 7
    %v370 = vsel %vm365, %v367, %v369
    %v371 = vrot.slane %v221, 7
    %v372 = vrot.slane %v213, 7
    %v373 = vsel %vm365, %v371, %v372
    %v374 = vrot.slane %v223, 7
    %v375 = vsel %vm365, %v372, %v374
    %376 = vrot.lane.b32.xlu0 %v368, 14
    %v377 = vpop.permute.xlu0 %376
    %378 = vrot.lane.b32.xlu0 %v370, 14
    %v379 = vpop.permute.xlu0 %378
    %380 = vrot.lane.b32.xlu0 %v373, 14
    %v381 = vpop.permute.xlu0 %380
    %382 = vrot.lane.b32.xlu0 %v375, 14
    %v383 = vpop.permute.xlu0 %382
    %vm388 = vcmask 15360
    %v389 = vsel %vm388, %v220, %v240
    %v390 = vsel %vm388, %v210, %v242
    %v391 = vsel %vm388, %v221, %v244
    %v392 = vsel %vm388, %v213, %v246
    %vm393 = vcmask 31744
    %v394 = vsel %vm393, %v389, %v263
    %v395 = vsel %vm393, %v390, %v265
    %v396 = vsel %vm393, %v391, %v267
    %v397 = vsel %vm393, %v392, %v269
    %vm398 = vcmask 48128
    %v399 = vsel %vm398, %v394, %v286
    %v400 = vsel %vm398, %v395, %v288
    %v401 = vsel %vm398, %v396, %v290
    %v402 = vsel %vm398, %v397, %v292
    %vm403 = vcmask 64512
    %v404 = vsel %vm403, %v399, %v309
    %v405 = vsel %vm403, %v400, %v311
    %v406 = vsel %vm403, %v401, %v313
    %v407 = vsel %vm403, %v402, %v315
    %vm408 = vcmask 80896
    %v409 = vsel %vm408, %v404, %v331
    %v410 = vsel %vm408, %v405, %v333
    %v411 = vsel %vm408, %v406, %v335
    %v412 = vsel %vm408, %v407, %v337
    %vm413 = vcmask 97280
    %v414 = vsel %vm413, %v409, %v354
    %v415 = vsel %vm413, %v410, %v356
    %v416 = vsel %vm413, %v411, %v358
    %v417 = vsel %vm413, %v412, %v360
    %vm418 = vcmask 113664
    %v419 = vsel %vm418, %v414, %v377
    %v420 = vsel %vm418, %v415, %v379
    %v421 = vsel %vm418, %v416, %v381
    %v422 = vsel %vm418, %v417, %v383
    %v424 = vperm.slane %v202, 0
    %vm426 = vcmask 130048
    %v428 = vsel %vm426, %v419, 0
    %v431 = vsel %vm426, %v420, 0
    %v434 = vsel %vm426, %v421, 0
    %v437 = vsel %vm426, %v422, 0
    %439 = vmatpush.msra.mxu0 0.0
    %440 = vmatpush.msra.mxu0 0.0
    %441 = vmatpush.msra.mxu0 0.0
    %442 = vmatpush.msra.mxu0 0.0
    %443 = vmatpush.msra.mxu0 0.0
    %444 = vmatpush.msra.mxu0 0.0
    %445 = vmatpush.msra.mxu0 0.0
    %446 = vmatpush.msra.mxu0 0.0
    %447 = vmatpush.msra.mxu0 0.0
    %448 = vmatpush.msra.mxu0 0.0
    %449 = vmatpush.msra.mxu0 0.0
    %450 = vmatpush.msra.mxu0 0.0
    %451 = vmatpush.msra.mxu0 0.0
    %452 = vmatpush.msra.mxu0 0.0
    %453 = vmatpush.msra.mxu0 %v201
    %454 = vmatpush.msra.mxu0 %v200
    %455 = vmatmul.f32.gmra.mxu0 %v428
    %v456 = vpop.f32.mrf.mxu0
    %v457 = vadd.f32 %v424, %v456
    %458 = vmatmul.f32.gmra.mxu0 %v431
    %v459 = vpop.f32.mrf.mxu0
    %v460 = vadd.f32 %v424, %v459
    %461 = vmatmul.f32.gmra.mxu0 %v434
    %v462 = vpop.f32.mrf.mxu0
    %v463 = vadd.f32 %v424, %v462
    %464 = vmatmul.f32.gmra.mxu0 %v437
    %v465 = vpop.f32.mrf.mxu0
    %v466 = vadd.f32 %v424, %v465
    %467 = vdwg.mxu0
    %v468 = vmax.f32 %v457, 0.0
    %v469 = vmax.f32 %v460, 0.0
    %v470 = vmax.f32 %v463, 0.0
    %v471 = vmax.f32 %v466, 0.0
    %v472 = vld [vmem:[%s3] sm:$0xff]
    %v473 = vld [vmem:[%s3 + $0x8] sm:$0xff]
    %v474 = vld [vmem:[%s3 + $0x10] sm:$0xff]
    %v475 = vld [vmem:[%s3 + $0x18] sm:$0xff]
    %v476 = vld [vmem:[%s3 + $0x20] sm:$0xff]
    %v477 = vld [vmem:[%s3 + $0x28] sm:$0xff]
    %v478 = vld [vmem:[%s3 + $0x30] sm:$0xff]
    %v479 = vld [vmem:[%s3 + $0x38] sm:$0xff]
    %v480 = vld [vmem:[%s3 + $0x40] sm:$0xff]
    %v481 = vld [vmem:[%s3 + $0x48] sm:$0xff]
    %v482 = vld [vmem:[%s3 + $0x50] sm:$0xff]
    %v483 = vld [vmem:[%s3 + $0x58] sm:$0xff]
    %v484 = vld [vmem:[%s3 + $0x60] sm:$0xff]
    %v485 = vld [vmem:[%s3 + $0x68] sm:$0xff]
    %v486 = vld [vmem:[%s3 + $0x70] sm:$0xff]
    %v487 = vld [vmem:[%s3 + $0x78] sm:$0xff]
    %v488 = vld [vmem:[%s3 + $0x80] sm:$0xff]
    %v489 = vld [vmem:[%s3 + $0x88] sm:$0xff]
    %v490 = vld [vmem:[%s3 + $0x90] sm:$0xff]
    %v491 = vld [vmem:[%s3 + $0x98] sm:$0xff]
    %v492 = vld [vmem:[%s3 + $0xa0] sm:$0xff]
    %v493 = vld [vmem:[%s3 + $0xa8] sm:$0xff]
    %v494 = vld [vmem:[%s3 + $0xb0] sm:$0xff]
    %v495 = vld [vmem:[%s3 + $0xb8] sm:$0xff]
    %v496 = vld [vmem:[%s3 + $0xc0] sm:$0xff]
    %v497 = vld [vmem:[%s3 + $0xc8] sm:$0xff]
    %v498 = vld [vmem:[%s3 + $0xd0] sm:$0xff]
    %v499 = vld [vmem:[%s3 + $0xd8] sm:$0xff]
    %v500 = vld [vmem:[%s3 + $0xe0] sm:$0xff]
    %v501 = vld [vmem:[%s3 + $0xe8] sm:$0xff]
    %v502 = vld [vmem:[%s3 + $0xf0] sm:$0xff]
    %v503 = vld [vmem:[%s3 + $0xf8] sm:$0xff]
    %v504 = vld [vmem:[%s3 + $0x100] sm:$0xff]
    %v505 = vld [vmem:[%s3 + $0x108] sm:$0xff]
    %v506 = vld [vmem:[%s3 + $0x110] sm:$0xff]
    %v507 = vld [vmem:[%s3 + $0x118] sm:$0xff]
    %v508 = vld [vmem:[%s3 + $0x120] sm:$0xff]
    %v509 = vld [vmem:[%s3 + $0x128] sm:$0xff]
    %v510 = vld [vmem:[%s3 + $0x130] sm:$0xff]
    %v511 = vld [vmem:[%s3 + $0x138] sm:$0xff]
    %v512 = vld [vmem:[%s4] sm:$0x1]
    %v517 = vrot.slane %v468, 6
    %v518 = vrot.slane %v469, 6
    %v519 = vsel %vm342, %v517, %v518
    %v520 = vrot.slane %v470, 6
    %v521 = vrot.slane %v471, 6
    %v522 = vsel %vm342, %v520, %v521
    %v529 = vsel %vm342, 0.0, %v517
    %v530 = vsel %vm342, 0.0, %v520
    %v531 = vsel %vm342, %v518, 0.0
    %v532 = vsel %vm342, %v521, 0.0
    %v537 = vrot.slane %v529, 1
    %v538 = vrot.slane %v519, 1
    %v539 = vsel %vm228, %v537, %v538
    %v540 = vrot.slane %v531, 1
    %v541 = vsel %vm228, %v538, %v540
    %v542 = vrot.slane %v530, 1
    %v543 = vrot.slane %v522, 1
    %v544 = vsel %vm228, %v542, %v543
    %v545 = vrot.slane %v532, 1
    %v546 = vsel %vm228, %v543, %v545
    %547 = vrot.lane.b32.xlu0 %v539, 64
    %v548 = vpop.permute.xlu0 %547
    %549 = vrot.lane.b32.xlu0 %v541, 64
    %v550 = vpop.permute.xlu0 %549
    %551 = vrot.lane.b32.xlu0 %v544, 64
    %v552 = vpop.permute.xlu0 %551
    %553 = vrot.lane.b32.xlu0 %v546, 64
    %v554 = vpop.permute.xlu0 %553
    %v559 = vrot.slane %v529, 2
    %v560 = vrot.slane %v519, 2
    %v561 = vsel %vm251, %v559, %v560
    %v562 = vrot.slane %v531, 2
    %v563 = vsel %vm251, %v560, %v562
    %v564 = vrot.slane %v530, 2
    %v565 = vrot.slane %v522, 2
    %v566 = vsel %vm251, %v564, %v565
    %v567 = vrot.slane %v532, 2
    %v568 = vsel %vm251, %v565, %v567
    %v573 = vrot.slane %v529, 3
    %v574 = vrot.slane %v519, 3
    %v575 = vsel %vm274, %v573, %v574
    %v576 = vrot.slane %v531, 3
    %v577 = vsel %vm274, %v574, %v576
    %v578 = vrot.slane %v530, 3
    %v579 = vrot.slane %v522, 3
    %v580 = vsel %vm274, %v578, %v579
    %v581 = vrot.slane %v532, 3
    %v582 = vsel %vm274, %v579, %v581
    %583 = vrot.lane.b32.xlu0 %v575, 64
    %v584 = vpop.permute.xlu0 %583
    %585 = vrot.lane.b32.xlu0 %v577, 64
    %v586 = vpop.permute.xlu0 %585
    %587 = vrot.lane.b32.xlu0 %v580, 64
    %v588 = vpop.permute.xlu0 %587
    %589 = vrot.lane.b32.xlu0 %v582, 64
    %v590 = vpop.permute.xlu0 %589
    %v595 = vrot.slane %v529, 4
    %v596 = vrot.slane %v519, 4
    %v597 = vsel %vm297, %v595, %v596
    %v598 = vrot.slane %v531, 4
    %v599 = vsel %vm297, %v596, %v598
    %v600 = vrot.slane %v530, 4
    %v601 = vrot.slane %v522, 4
    %v602 = vsel %vm297, %v600, %v601
    %v603 = vrot.slane %v532, 4
    %v604 = vsel %vm297, %v601, %v603
    %vm605 = vcmask 523264
    %v606 = vsel %vm605, %v529, %v548
    %v607 = vsel %vm605, %v519, %v550
    %v608 = vsel %vm605, %v530, %v552
    %v609 = vsel %vm605, %v522, %v554
    %v610 = vsel %vm605, %v561, %v584
    %v611 = vsel %vm605, %v563, %v586
    %v612 = vsel %vm605, %v566, %v588
    %v613 = vsel %vm605, %v568, %v590
    %v615 = vperm.slane %v512, 0
    %v617 = vsel %vm605, %v597, 0
    %v619 = vsel %vm605, %v599, 0
    %v621 = vsel %vm605, %v602, 0
    %v623 = vsel %vm605, %v604, 0
    %625 = vmatpush.msra.mxu0 %v487
    %626 = vmatpush.msra.mxu0 %v486
    %627 = vmatpush.msra.mxu0 %v485
    %628 = vmatpush.msra.mxu0 %v484
    %629 = vmatpush.msra.mxu0 %v483
    %630 = vmatpush.msra.mxu0 %v482
    %631 = vmatpush.msra.mxu0 %v481
    %632 = vmatpush.msra.mxu0 %v480
    %633 = vmatpush.msra.mxu0 %v479
    %634 = vmatpush.msra.mxu0 %v478
    %635 = vmatpush.msra.mxu0 %v477
    %636 = vmatpush.msra.mxu0 %v476
    %637 = vmatpush.msra.mxu0 %v475
    %638 = vmatpush.msra.mxu0 %v474
    %639 = vmatpush.msra.mxu0 %v473
    %640 = vmatpush.msra.mxu0 %v472
    %641 = vmatmul.f32.gmra.mxu0 %v606
    %v642 = vpop.f32.mrf.mxu0
    %v643 = vadd.f32 %v615, %v642
    %644 = vmatmul.f32.gmra.mxu0 %v607
    %v645 = vpop.f32.mrf.mxu0
    %v646 = vadd.f32 %v615, %v645
    %647 = vmatmul.f32.gmra.mxu0 %v608
    %v648 = vpop.f32.mrf.mxu0
    %v649 = vadd.f32 %v615, %v648
    %650 = vmatmul.f32.gmra.mxu0 %v609
    %v651 = vpop.f32.mrf.mxu0
    %v652 = vadd.f32 %v615, %v651
    %653 = vdwg.mxu0
    %654 = vmatpush.msra.mxu0 %v503
    %655 = vmatpush.msra.mxu0 %v502
    %656 = vmatpush.msra.mxu0 %v501
    %657 = vmatpush.msra.mxu0 %v500
    %658 = vmatpush.msra.mxu0 %v499
    %659 = vmatpush.msra.mxu0 %v498
    %660 = vmatpush.msra.mxu0 %v497
    %661 = vmatpush.msra.mxu0 %v496
    %662 = vmatpush.msra.mxu0 %v495
    %663 = vmatpush.msra.mxu0 %v494
    %664 = vmatpush.msra.mxu0 %v493
    %665 = vmatpush.msra.mxu0 %v492
    %666 = vmatpush.msra.mxu0 %v491
    %667 = vmatpush.msra.mxu0 %v490
    %668 = vmatpush.msra.mxu0 %v489
    %669 = vmatpush.msra.mxu0 %v488
    %670 = vmatmul.f32.gmra.mxu0 %v610
    %v671 = vpop.f32.mrf.mxu0
    %v672 = vadd.f32 %v643, %v671
    %673 = vmatmul.f32.gmra.mxu0 %v611
    %v674 = vpop.f32.mrf.mxu0
    %v675 = vadd.f32 %v646, %v674
    %676 = vmatmul.f32.gmra.mxu0 %v612
    %v677 = vpop.f32.mrf.mxu0
    %v678 = vadd.f32 %v649, %v677
    %679 = vmatmul.f32.gmra.mxu0 %v613
    %v680 = vpop.f32.mrf.mxu0
    %v681 = vadd.f32 %v652, %v680
    %682 = vdwg.mxu0
    %683 = vmatpush.msra.mxu0 0.0
    %684 = vmatpush.msra.mxu0 0.0
    %685 = vmatpush.msra.mxu0 0.0
    %686 = vmatpush.msra.mxu0 0.0
    %687 = vmatpush.msra.mxu0 0.0
    %688 = vmatpush.msra.mxu0 0.0
    %689 = vmatpush.msra.mxu0 0.0
    %690 = vmatpush.msra.mxu0 0.0
    %691 = vmatpush.msra.mxu0 %v511
    %692 = vmatpush.msra.mxu0 %v510
    %693 = vmatpush.msra.mxu0 %v509
    %694 = vmatpush.msra.mxu0 %v508
    %695 = vmatpush.msra.mxu0 %v507
    %696 = vmatpush.msra.mxu0 %v506
    %697 = vmatpush.msra.mxu0 %v505
    %698 = vmatpush.msra.mxu0 %v504
    %699 = vmatmul.f32.gmra.mxu0 %v617
    %v700 = vpop.f32.mrf.mxu0
    %v701 = vadd.f32 %v672, %v700
    %702 = vmatmul.f32.gmra.mxu0 %v619
    %v703 = vpop.f32.mrf.mxu0
    %v704 = vadd.f32 %v675, %v703
    %705 = vmatmul.f32.gmra.mxu0 %v621
    %v706 = vpop.f32.mrf.mxu0
    %v707 = vadd.f32 %v678, %v706
    %708 = vmatmul.f32.gmra.mxu0 %v623
    %v709 = vpop.f32.mrf.mxu0
    %v710 = vadd.f32 %v681, %v709
    %711 = vdwg.mxu0
    %v712 = vmax.f32 %v701, 0.0
    %v713 = vmax.f32 %v704, 0.0
    %v714 = vmax.f32 %v707, 0.0
    %v715 = vmax.f32 %v710, 0.0
    %v716 = vld [vmem:[%s5] sm:$0xff]
    %v717 = vld [vmem:[%s5 + $0x8] sm:$0xff]
    %v718 = vld [vmem:[%s5 + $0x10] sm:$0xff]
    %v719 = vld [vmem:[%s5 + $0x18] sm:$0xff]
    %v720 = vld [vmem:[%s5 + $0x20] sm:$0xff]
    %v721 = vld [vmem:[%s5 + $0x28] sm:$0xff]
    %v722 = vld [vmem:[%s5 + $0x30] sm:$0xff]
    %v723 = vld [vmem:[%s5 + $0x38] sm:$0xff]
    %v724 = vld [vmem:[%s5 + $0x40] sm:$0xff]
    %v725 = vld [vmem:[%s5 + $0x48] sm:$0xff]
    %v726 = vld [vmem:[%s5 + $0x50] sm:$0xff]
    %v727 = vld [vmem:[%s5 + $0x58] sm:$0xff]
    %v728 = vld [vmem:[%s5 + $0x60] sm:$0xff]
    %v729 = vld [vmem:[%s5 + $0x68] sm:$0xff]
    %v730 = vld [vmem:[%s5 + $0x70] sm:$0xff]
    %v731 = vld [vmem:[%s5 + $0x78] sm:$0xff]
    %v732 = vld [vmem:[%s5 + $0x80] sm:$0xff]
    %v733 = vld [vmem:[%s5 + $0x88] sm:$0xff]
    %v734 = vld [vmem:[%s5 + $0x90] sm:$0xff]
    %v735 = vld [vmem:[%s5 + $0x98] sm:$0xff]
    %v736 = vld [vmem:[%s5 + $0xa0] sm:$0xff]
    %v737 = vld [vmem:[%s5 + $0xa8] sm:$0xff]
    %v738 = vld [vmem:[%s5 + $0xb0] sm:$0xff]
    %v739 = vld [vmem:[%s5 + $0xb8] sm:$0xff]
    %v740 = vld [vmem:[%s6] sm:$0x1]
    %v745 = vrot.slane %v712, 7
    %v746 = vrot.slane %v713, 7
    %v747 = vsel %vm365, %v745, %v746
    %v748 = vrot.slane %v714, 7
    %v749 = vrot.slane %v715, 7
    %v750 = vsel %vm365, %v748, %v749
    %v757 = vsel %vm365, 0.0, %v745
    %v758 = vsel %vm365, 0.0, %v748
    %v759 = vsel %vm365, %v746, 0.0
    %v760 = vsel %vm365, %v749, 0.0
    %v765 = vrot.slane %v757, 1
    %v766 = vrot.slane %v747, 1
    %v767 = vsel %vm228, %v765, %v766
    %v768 = vrot.slane %v759, 1
    %v769 = vsel %vm228, %v766, %v768
    %v770 = vrot.slane %v758, 1
    %v771 = vrot.slane %v750, 1
    %v772 = vsel %vm228, %v770, %v771
    %v773 = vrot.slane %v760, 1
    %v774 = vsel %vm228, %v771, %v773
    %775 = vrot.lane.b32.xlu0 %v767, 64
    %v776 = vpop.permute.xlu0 %775
    %777 = vrot.lane.b32.xlu0 %v769, 64
    %v778 = vpop.permute.xlu0 %777
    %779 = vrot.lane.b32.xlu0 %v772, 64
    %v780 = vpop.permute.xlu0 %779
    %781 = vrot.lane.b32.xlu0 %v774, 64
    %v782 = vpop.permute.xlu0 %781
    %v787 = vrot.slane %v757, 2
    %v788 = vrot.slane %v747, 2
    %v789 = vsel %vm251, %v787, %v788
    %v790 = vrot.slane %v759, 2
    %v791 = vsel %vm251, %v788, %v790
    %v792 = vrot.slane %v758, 2
    %v793 = vrot.slane %v750, 2
    %v794 = vsel %vm251, %v792, %v793
    %v795 = vrot.slane %v760, 2
    %v796 = vsel %vm251, %v793, %v795
    %v797 = vsel %vm605, %v757, %v776
    %v798 = vsel %vm605, %v747, %v778
    %v799 = vsel %vm605, %v758, %v780
    %v800 = vsel %vm605, %v750, %v782
    %v802 = vperm.slane %v740, 0
    %v804 = vsel %vm605, %v789, 0
    %v806 = vsel %vm605, %v791, 0
    %v808 = vsel %vm605, %v794, 0
    %v810 = vsel %vm605, %v796, 0
    %812 = vmatpush.msra.mxu0 %v731
    %813 = vmatpush.msra.mxu0 %v730
    %814 = vmatpush.msra.mxu0 %v729
    %815 = vmatpush.msra.mxu0 %v728
    %816 = vmatpush.msra.mxu0 %v727
    %817 = vmatpush.msra.mxu0 %v726
    %818 = vmatpush.msra.mxu0 %v725
    %819 = vmatpush.msra.mxu0 %v724
    %820 = vmatpush.msra.mxu0 %v723
    %821 = vmatpush.msra.mxu0 %v722
    %822 = vmatpush.msra.mxu0 %v721
    %823 = vmatpush.msra.mxu0 %v720
    %824 = vmatpush.msra.mxu0 %v719
    %825 = vmatpush.msra.mxu0 %v718
    %826 = vmatpush.msra.mxu0 %v717
    %827 = vmatpush.msra.mxu0 %v716
    %828 = vmatmul.f32.gmra.mxu0 %v797
    %v829 = vpop.f32.mrf.mxu0
    %v830 = vadd.f32 %v802, %v829
    %831 = vmatmul.f32.gmra.mxu0 %v798
    %v832 = vpop.f32.mrf.mxu0
    %v833 = vadd.f32 %v802, %v832
    %834 = vmatmul.f32.gmra.mxu0 %v799
    %v835 = vpop.f32.mrf.mxu0
    %v836 = vadd.f32 %v802, %v835
    %837 = vmatmul.f32.gmra.mxu0 %v800
    %v838 = vpop.f32.mrf.mxu0
    %v839 = vadd.f32 %v802, %v838
    %840 = vdwg.mxu0
    %841 = vmatpush.msra.mxu0 0.0
    %842 = vmatpush.msra.mxu0 0.0
    %843 = vmatpush.msra.mxu0 0.0
    %844 = vmatpush.msra.mxu0 0.0
    %845 = vmatpush.msra.mxu0 0.0
    %846 = vmatpush.msra.mxu0 0.0
    %847 = vmatpush.msra.mxu0 0.0
    %848 = vmatpush.msra.mxu0 0.0
    %849 = vmatpush.msra.mxu0 %v739
    %850 = vmatpush.msra.mxu0 %v738
    %851 = vmatpush.msra.mxu0 %v737
    %852 = vmatpush.msra.mxu0 %v736
    %853 = vmatpush.msra.mxu0 %v735
    %854 = vmatpush.msra.mxu0 %v734
    %855 = vmatpush.msra.mxu0 %v733
    %856 = vmatpush.msra.mxu0 %v732
    %857 = vmatmul.f32.gmra.mxu0 %v804
    %v858 = vpop.f32.mrf.mxu0
    %v859 = vadd.f32 %v830, %v858
    %860 = vmatmul.f32.gmra.mxu0 %v806
    %v861 = vpop.f32.mrf.mxu0
    %v862 = vadd.f32 %v833, %v861
    %863 = vmatmul.f32.gmra.mxu0 %v808
    %v864 = vpop.f32.mrf.mxu0
    %v865 = vadd.f32 %v836, %v864
    %866 = vmatmul.f32.gmra.mxu0 %v810
    %v867 = vpop.f32.mrf.mxu0
    %v868 = vadd.f32 %v839, %v867
    %869 = vdwg.mxu0
    %v870 = vld [vmem:[%s7] sm:$0x3]
    %v871 = vld [vmem:[%s8] sm:$0x1]
    %v873 = vperm.slane %v871, 0
    %v875 = vsel %vm388, %v196, 0
    %v877 = vsel %vm388, %v197, 0
    %v879 = vsel %vm388, %v198, 0
    %v881 = vsel %vm388, %v199, 0
    %v884 = vsel %vm342, %v870, 0
    %886 = vmatpush.msra.mxu0 0.0
    %887 = vmatpush.msra.mxu0 0.0
    %888 = vmatpush.msra.mxu0 0.0
    %889 = vmatpush.msra.mxu0 0.0
    %890 = vmatpush.msra.mxu0 0.0
    %891 = vmatpush.msra.mxu0 0.0
    %892 = vmatpush.msra.mxu0 0.0
    %893 = vmatpush.msra.mxu0 0.0
    %894 = vmatpush.msra.mxu0 0.0
    %895 = vmatpush.msra.mxu0 0.0
    %896 = vmatpush.msra.mxu0 0.0
    %897 = vmatpush.msra.mxu0 0.0
    %898 = vmatpush.msra.mxu0 0.0
    %899 = vmatpush.msra.mxu0 0.0
    %900 = vmatpush.msra.mxu0 0.0
    %901 = vmatpush.msra.mxu0 %v884
    %902 = vmatmul.f32.gmra.mxu0 %v875
    %v903 = vpop.f32.mrf.mxu0
    %v904 = vadd.f32 %v873, %v903
    %905 = vmatmul.f32.gmra.mxu0 %v877
    %v906 = vpop.f32.mrf.mxu0
    %v907 = vadd.f32 %v873, %v906
    %908 = vmatmul.f32.gmra.mxu0 %v879
    %v909 = vpop.f32.mrf.mxu0
    %v910 = vadd.f32 %v873, %v909
    %911 = vmatmul.f32.gmra.mxu0 %v881
    %v912 = vpop.f32.mrf.mxu0
    %v913 = vadd.f32 %v873, %v912
    %914 = vdwg.mxu0
    %v915 = vadd.f32 %v859, %v904
    %v916 = vadd.f32 %v862, %v907
    %v917 = vadd.f32 %v865, %v910
    %v918 = vadd.f32 %v868, %v913
    %v919 = vmax.f32 %v915, 0.0
    %v920 = vmax.f32 %v916, 0.0
    %v921 = vmax.f32 %v917, 0.0
    %v922 = vmax.f32 %v918, 0.0
    %v923 = vld [vmem:[#allocation2] sm:$0xff]
    %v924 = vld [vmem:[#allocation2 + $0x8] sm:$0xff]
    %v925 = vld [vmem:[#allocation2 + $0x10] sm:$0xff]
    %v926 = vld [vmem:[#allocation2 + $0x18] sm:$0xff]
    %v927 = vld [vmem:[#allocation2 + $0x20] sm:$0xff]
    %v928 = vld [vmem:[#allocation2 + $0x28] sm:$0xff]
    %v929 = vld [vmem:[#allocation2 + $0x30] sm:$0xff]
    %v930 = vld [vmem:[#allocation2 + $0x38] sm:$0xff]
    %v931 = vld [vmem:[#allocation2 + $0x40] sm:$0xff]
    %v932 = vld [vmem:[#allocation2 + $0x48] sm:$0xff]
    %v933 = vld [vmem:[#allocation2 + $0x50] sm:$0xff]
    %v934 = vld [vmem:[#allocation2 + $0x58] sm:$0xff]
    %v935 = vld [vmem:[#allocation2 + $0x60] sm:$0xff]
    %v936 = vld [vmem:[#allocation2 + $0x68] sm:$0xff]
    %v937 = vld [vmem:[#allocation2 + $0x70] sm:$0xff]
    %v938 = vld [vmem:[#allocation2 + $0x78] sm:$0xff]
    %v939 = vld [vmem:[#allocation2 + $0x80] sm:$0xff]
    %v940 = vld [vmem:[#allocation2 + $0x88] sm:$0xff]
    %v941 = vld [vmem:[#allocation2 + $0x90] sm:$0xff]
    %v942 = vld [vmem:[#allocation2 + $0x98] sm:$0xff]
    %v943 = vld [vmem:[#allocation2 + $0xa0] sm:$0xff]
    %v944 = vld [vmem:[#allocation2 + $0xa8] sm:$0xff]
    %v945 = vld [vmem:[#allocation2 + $0xb0] sm:$0xff]
    %v946 = vld [vmem:[#allocation2 + $0xb8] sm:$0xff]
    %v947 = vld [vmem:[#allocation2 + $0xc0] sm:$0xff]
    %v948 = vld [vmem:[#allocation2 + $0xc8] sm:$0xff]
    %v949 = vld [vmem:[#allocation2 + $0xd0] sm:$0xff]
    %v950 = vld [vmem:[#allocation2 + $0xd8] sm:$0xff]
    %v951 = vld [vmem:[#allocation2 + $0xe0] sm:$0xff]
    %v952 = vld [vmem:[#allocation2 + $0xe8] sm:$0xff]
    %v953 = vld [vmem:[#allocation2 + $0xf0] sm:$0xff]
    %v954 = vld [vmem:[#allocation2 + $0xf8] sm:$0xff]
    %v955 = vld [vmem:[#allocation2 + $0x100] sm:$0xff]
    %v956 = vld [vmem:[#allocation2 + $0x108] sm:$0xff]
    %v957 = vld [vmem:[#allocation2 + $0x110] sm:$0xff]
    %v958 = vld [vmem:[#allocation2 + $0x118] sm:$0xff]
    %v959 = vld [vmem:[#allocation2 + $0x120] sm:$0xff]
    %v960 = vld [vmem:[#allocation2 + $0x128] sm:$0xff]
    %v961 = vld [vmem:[#allocation2 + $0x130] sm:$0xff]
    %v962 = vld [vmem:[#allocation2 + $0x138] sm:$0xff]
    %v963 = vld [vmem:[#allocation2 + $0x140] sm:$0xff]
    %v964 = vld [vmem:[#allocation2 + $0x148] sm:$0xff]
    %v965 = vld [vmem:[#allocation2 + $0x150] sm:$0xff]
    %v966 = vld [vmem:[#allocation2 + $0x158] sm:$0xff]
    %v967 = vld [vmem:[#allocation2 + $0x160] sm:$0xff]
    %v968 = vld [vmem:[#allocation2 + $0x168] sm:$0xff]
    %v969 = vld [vmem:[#allocation2 + $0x170] sm:$0xff]
    %v970 = vld [vmem:[#allocation2 + $0x178] sm:$0xff]
    %v971 = vld [vmem:[#allocation2 + $0x180] sm:$0xff]
    %v972 = vld [vmem:[#allocation2 + $0x188] sm:$0xff]
    %v973 = vld [vmem:[#allocation2 + $0x190] sm:$0xff]
    %v974 = vld [vmem:[#allocation2 + $0x198] sm:$0xff]
    %v975 = vld [vmem:[#allocation2 + $0x1a0] sm:$0xff]
    %v976 = vld [vmem:[#allocation2 + $0x1a8] sm:$0xff]
    %v977 = vld [vmem:[#allocation2 + $0x1b0] sm:$0xff]
    %v978 = vld [vmem:[#allocation2 + $0x1b8] sm:$0xff]
    %v979 = vld [vmem:[#allocation2 + $0x1c0] sm:$0xff]
    %v980 = vld [vmem:[#allocation2 + $0x1c8] sm:$0xff]
    %v981 = vld [vmem:[#allocation2 + $0x1d0] sm:$0xff]
    %v982 = vld [vmem:[#allocation2 + $0x1d8] sm:$0xff]
    %v983 = vld [vmem:[#allocation2 + $0x1e0] sm:$0xff]
    %v984 = vld [vmem:[#allocation2 + $0x1e8] sm:$0xff]
    %v985 = vld [vmem:[#allocation2 + $0x1f0] sm:$0xff]
    %v986 = vld [vmem:[#allocation2 + $0x1f8] sm:$0xff]
    %v987 = vld [vmem:[%s10] sm:$0x1]
    %v992 = vrot.slane %v919, 5
    %v993 = vrot.slane %v920, 5
    %v994 = vsel %vm207, %v992, %v993
    %v995 = vrot.slane %v921, 5
    %v996 = vrot.slane %v922, 5
    %v997 = vsel %vm207, %v995, %v996
    %v1004 = vsel %vm207, 0.0, %v992
    %v1005 = vsel %vm207, 0.0, %v995
    %v1006 = vsel %vm207, %v993, 0.0
    %v1007 = vsel %vm207, %v996, 0.0
    %v1012 = vrot.slane %v1004, 1
    %v1013 = vrot.slane %v994, 1
    %v1014 = vsel %vm228, %v1012, %v1013
    %v1015 = vrot.slane %v1006, 1
    %v1016 = vsel %vm228, %v1013, %v1015
    %v1017 = vrot.slane %v1005, 1
    %v1018 = vrot.slane %v997, 1
    %v1019 = vsel %vm228, %v1017, %v1018
    %v1020 = vrot.slane %v1007, 1
    %v1021 = vsel %vm228, %v1018, %v1020
    %1022 = vrot.lane.b32.xlu0 %v1014, 64
    %v1023 = vpop.permute.xlu0 %1022
    %1024 = vrot.lane.b32.xlu0 %v1016, 64
    %v1025 = vpop.permute.xlu0 %1024
    %1026 = vrot.lane.b32.xlu0 %v1019, 64
    %v1027 = vpop.permute.xlu0 %1026
    %1028 = vrot.lane.b32.xlu0 %v1021, 64
    %v1029 = vpop.permute.xlu0 %1028
    %v1034 = vrot.slane %v1004, 2
    %v1035 = vrot.slane %v994, 2
    %v1036 = vsel %vm251, %v1034, %v1035
    %v1037 = vrot.slane %v1006, 2
    %v1038 = vsel %vm251, %v1035, %v1037
    %v1039 = vrot.slane %v1005, 2
    %v1040 = vrot.slane %v997, 2
    %v1041 = vsel %vm251, %v1039, %v1040
    %v1042 = vrot.slane %v1007, 2
    %v1043 = vsel %vm251, %v1040, %v1042
    %v1048 = vrot.slane %v1004, 3
    %v1049 = vrot.slane %v994, 3
    %v1050 = vsel %vm274, %v1048, %v1049
    %v1051 = vrot.slane %v1006, 3
    %v1052 = vsel %vm274, %v1049, %v1051
    %v1053 = vrot.slane %v1005, 3
    %v1054 = vrot.slane %v997, 3
    %v1055 = vsel %vm274, %v1053, %v1054
    %v1056 = vrot.slane %v1007, 3
    %v1057 = vsel %vm274, %v1054, %v1056
    %1058 = vrot.lane.b32.xlu0 %v1050, 64
    %v1059 = vpop.permute.xlu0 %1058
    %1060 = vrot.lane.b32.xlu0 %v1052, 64
    %v1061 = vpop.permute.xlu0 %1060
    %1062 = vrot.lane.b32.xlu0 %v1055, 64
    %v1063 = vpop.permute.xlu0 %1062
    %1064 = vrot.lane.b32.xlu0 %v1057, 64
    %v1065 = vpop.permute.xlu0 %1064
    %v1070 = vrot.slane %v1004, 4
    %v1071 = vrot.slane %v994, 4
    %v1072 = vsel %vm297, %v1070, %v1071
    %v1073 = vrot.slane %v1006, 4
    %v1074 = vsel %vm297, %v1071, %v1073
    %v1075 = vrot.slane %v1005, 4
    %v1076 = vrot.slane %v997, 4
    %v1077 = vsel %vm297, %v1075, %v1076
    %v1078 = vrot.slane %v1007, 4
    %v1079 = vsel %vm297, %v1076, %v1078
    %v1084 = vrot.slane %v1004, 5
    %v1085 = vrot.slane %v994, 5
    %v1086 = vsel %vm207, %v1084, %v1085
    %v1087 = vrot.slane %v1006, 5
    %v1088 = vsel %vm207, %v1085, %v1087
    %v1089 = vrot.slane %v1005, 5
    %v1090 = vrot.slane %v997, 5
    %v1091 = vsel %vm207, %v1089, %v1090
    %v1092 = vrot.slane %v1007, 5
    %v1093 = vsel %vm207, %v1090, %v1092
    %1094 = vrot.lane.b32.xlu0 %v1086, 64
    %v1095 = vpop.permute.xlu0 %1094
    %1096 = vrot.lane.b32.xlu0 %v1088, 64
    %v1097 = vpop.permute.xlu0 %1096
    %1098 = vrot.lane.b32.xlu0 %v1091, 64
    %v1099 = vpop.permute.xlu0 %1098
    %1100 = vrot.lane.b32.xlu0 %v1093, 64
    %v1101 = vpop.permute.xlu0 %1100
    %v1106 = vrot.slane %v1004, 6
    %v1107 = vrot.slane %v994, 6
    %v1108 = vsel %vm342, %v1106, %v1107
    %v1109 = vrot.slane %v1006, 6
    %v1110 = vsel %vm342, %v1107, %v1109
    %v1111 = vrot.slane %v1005, 6
    %v1112 = vrot.slane %v997, 6
    %v1113 = vsel %vm342, %v1111, %v1112
    %v1114 = vrot.slane %v1007, 6
    %v1115 = vsel %vm342, %v1112, %v1114
    %v1120 = vrot.slane %v1004, 7
    %v1121 = vrot.slane %v994, 7
    %v1122 = vsel %vm365, %v1120, %v1121
    %v1123 = vrot.slane %v1006, 7
    %v1124 = vsel %vm365, %v1121, %v1123
    %v1125 = vrot.slane %v1005, 7
    %v1126 = vrot.slane %v997, 7
    %v1127 = vsel %vm365, %v1125, %v1126
    %v1128 = vrot.slane %v1007, 7
    %v1129 = vsel %vm365, %v1126, %v1128
    %1130 = vrot.lane.b32.xlu0 %v1122, 64
    %v1131 = vpop.permute.xlu0 %1130
    %1132 = vrot.lane.b32.xlu0 %v1124, 64
    %v1133 = vpop.permute.xlu0 %1132
    %1134 = vrot.lane.b32.xlu0 %v1127, 64
    %v1135 = vpop.permute.xlu0 %1134
    %1136 = vrot.lane.b32.xlu0 %v1129, 64
    %v1137 = vpop.permute.xlu0 %1136
    %v1142 = vsel %vm605, %v1004, %v1023
    %v1143 = vsel %vm605, %v994, %v1025
    %v1144 = vsel %vm605, %v1005, %v1027
    %v1145 = vsel %vm605, %v997, %v1029
    %v1146 = vsel %vm605, %v1036, %v1059
    %v1147 = vsel %vm605, %v1038, %v1061
    %v1148 = vsel %vm605, %v1041, %v1063
    %v1149 = vsel %vm605, %v1043, %v1065
    %v1150 = vsel %vm605, %v1072, %v1095
    %v1151 = vsel %vm605, %v1074, %v1097
    %v1152 = vsel %vm605, %v1077, %v1099
    %v1153 = vsel %vm605, %v1079, %v1101
    %v1154 = vsel %vm605, %v1108, %v1131
    %v1155 = vsel %vm605, %v1110, %v1133
    %v1156 = vsel %vm605, %v1113, %v1135
    %v1157 = vsel %vm605, %v1115, %v1137
    %v1159 = vperm.slane %v987, 0
    %1161 = vmatpush.msra.mxu0 %v938
    %1162 = vmatpush.msra.mxu0 %v937
    %1163 = vmatpush.msra.mxu0 %v936
    %1164 = vmatpush.msra.mxu0 %v935
    %1165 = vmatpush.msra.mxu0 %v934
    %1166 = vmatpush.msra.mxu0 %v933
    %1167 = vmatpush.msra.mxu0 %v932
    %1168 = vmatpush.msra.mxu0 %v931
    %1169 = vmatpush.msra.mxu0 %v930
    %1170 = vmatpush.msra.mxu0 %v929
    %1171 = vmatpush.msra.mxu0 %v928
    %1172 = vmatpush.msra.mxu0 %v927
    %1173 = vmatpush.msra.mxu0 %v926
    %1174 = vmatpush.msra.mxu0 %v925
    %1175 = vmatpush.msra.mxu0 %v924
    %1176 = vmatpush.msra.mxu0 %v923
    %1177 = vmatmul.f32.gmra.mxu0 %v1142
    %v1178 = vpop.f32.mrf.mxu0
    %v1179 = vadd.f32 %v1159, %v1178
    %1180 = vmatmul.f32.gmra.mxu0 %v1143
    %v1181 = vpop.f32.mrf.mxu0
    %v1182 = vadd.f32 %v1159, %v1181
    %1183 = vmatmul.f32.gmra.mxu0 %v1144
    %v1184 = vpop.f32.mrf.mxu0
    %v1185 = vadd.f32 %v1159, %v1184
    %1186 = vmatmul.f32.gmra.mxu0 %v1145
    %v1187 = vpop.f32.mrf.mxu0
    %v1188 = vadd.f32 %v1159, %v1187
    %1189 = vdwg.mxu0
    %1190 = vmatpush.msra.mxu0 %v954
    %1191 = vmatpush.msra.mxu0 %v953
    %1192 = vmatpush.msra.mxu0 %v952
    %1193 = vmatpush.msra.mxu0 %v951
    %1194 = vmatpush.msra.mxu0 %v950
    %1195 = vmatpush.msra.mxu0 %v949
    %1196 = vmatpush.msra.mxu0 %v948
    %1197 = vmatpush.msra.mxu0 %v947
    %1198 = vmatpush.msra.mxu0 %v946
    %1199 = vmatpush.msra.mxu0 %v945
    %1200 = vmatpush.msra.mxu0 %v944
    %1201 = vmatpush.msra.mxu0 %v943
    %1202 = vmatpush.msra.mxu0 %v942
    %1203 = vmatpush.msra.mxu0 %v941
    %1204 = vmatpush.msra.mxu0 %v940
    %1205 = vmatpush.msra.mxu0 %v939
    %1206 = vmatmul.f32.gmra.mxu0 %v1146
    %v1207 = vpop.f32.mrf.mxu0
    %v1208 = vadd.f32 %v1179, %v1207
    %1209 = vmatmul.f32.gmra.mxu0 %v1147
    %v1210 = vpop.f32.mrf.mxu0
    %v1211 = vadd.f32 %v1182, %v1210
    %1212 = vmatmul.f32.gmra.mxu0 %v1148
    %v1213 = vpop.f32.mrf.mxu0
    %v1214 = vadd.f32 %v1185, %v1213
    %1215 = vmatmul.f32.gmra.mxu0 %v1149
    %v1216 = vpop.f32.mrf.mxu0
    %v1217 = vadd.f32 %v1188, %v1216
    %1218 = vdwg.mxu0
    %1219 = vmatpush.msra.mxu0 %v970
    %1220 = vmatpush.msra.mxu0 %v969
    %1221 = vmatpush.msra.mxu0 %v968
    %1222 = vmatpush.msra.mxu0 %v967
    %1223 = vmatpush.msra.mxu0 %v966
    %1224 = vmatpush.msra.mxu0 %v965
    %1225 = vmatpush.msra.mxu0 %v964
    %1226 = vmatpush.msra.mxu0 %v963
    %1227 = vmatpush.msra.mxu0 %v962
    %1228 = vmatpush.msra.mxu0 %v961
    %1229 = vmatpush.msra.mxu0 %v960
    %1230 = vmatpush.msra.mxu0 %v959
    %1231 = vmatpush.msra.mxu0 %v958
    %1232 = vmatpush.msra.mxu0 %v957
    %1233 = vmatpush.msra.mxu0 %v956
    %1234 = vmatpush.msra.mxu0 %v955
    %1235 = vmatmul.f32.gmra.mxu0 %v1150
    %v1236 = vpop.f32.mrf.mxu0
    %v1237 = vadd.f32 %v1208, %v1236
    %1238 = vmatmul.f32.gmra.mxu0 %v1151
    %v1239 = vpop.f32.mrf.mxu0
    %v1240 = vadd.f32 %v1211, %v1239
    %1241 = vmatmul.f32.gmra.mxu0 %v1152
    %v1242 = vpop.f32.mrf.mxu0
    %v1243 = vadd.f32 %v1214, %v1242
    %1244 = vmatmul.f32.gmra.mxu0 %v1153
    %v1245 = vpop.f32.mrf.mxu0
    %v1246 = vadd.f32 %v1217, %v1245
    %1247 = vdwg.mxu0
    %1248 = vmatpush.msra.mxu0 %v986
    %1249 = vmatpush.msra.mxu0 %v985
    %1250 = vmatpush.msra.mxu0 %v984
    %1251 = vmatpush.msra.mxu0 %v983
    %1252 = vmatpush.msra.mxu0 %v982
    %1253 = vmatpush.msra.mxu0 %v981
    %1254 = vmatpush.msra.mxu0 %v980
    %1255 = vmatpush.msra.mxu0 %v979
    %1256 = vmatpush.msra.mxu0 %v978
    %1257 = vmatpush.msra.mxu0 %v977
    %1258 = vmatpush.msra.mxu0 %v976
    %1259 = vmatpush.msra.mxu0 %v975
    %1260 = vmatpush.msra.mxu0 %v974
    %1261 = vmatpush.msra.mxu0 %v973
    %1262 = vmatpush.msra.mxu0 %v972
    %1263 = vmatpush.msra.mxu0 %v971
    %1264 = vmatmul.f32.gmra.mxu0 %v1154
    %v1265 = vpop.f32.mrf.mxu0
    %v1266 = vadd.f32 %v1237, %v1265
    %1267 = vmatmul.f32.gmra.mxu0 %v1155
    %v1268 = vpop.f32.mrf.mxu0
    %v1269 = vadd.f32 %v1240, %v1268
    %1270 = vmatmul.f32.gmra.mxu0 %v1156
    %v1271 = vpop.f32.mrf.mxu0
    %v1272 = vadd.f32 %v1243, %v1271
    %1273 = vmatmul.f32.gmra.mxu0 %v1157
    %v1274 = vpop.f32.mrf.mxu0
    %v1275 = vadd.f32 %v1246, %v1274
    %1276 = vdwg.mxu0
    %v1277 = vmax.f32 %v1266, 0.0
    %v1278 = vmax.f32 %v1269, 0.0
    %v1279 = vmax.f32 %v1272, 0.0
    %v1280 = vmax.f32 %v1275, 0.0
    %v1281 = vld [vmem:[%s11] sm:$0xff]
    %v1282 = vld [vmem:[%s11 + $0x8] sm:$0xff]
    %v1283 = vld [vmem:[%s11 + $0x10] sm:$0xff]
    %v1284 = vld [vmem:[%s11 + $0x18] sm:$0xff]
    %v1285 = vld [vmem:[%s11 + $0x20] sm:$0xff]
    %v1286 = vld [vmem:[%s11 + $0x28] sm:$0xff]
    %v1287 = vld [vmem:[%s11 + $0x30] sm:$0xff]
    %v1288 = vld [vmem:[%s11 + $0x38] sm:$0xff]
    %v1289 = vld [vmem:[%s11 + $0x40] sm:$0xff]
    %v1290 = vld [vmem:[%s11 + $0x48] sm:$0xff]
    %v1291 = vld [vmem:[%s11 + $0x50] sm:$0xff]
    %v1292 = vld [vmem:[%s11 + $0x58] sm:$0xff]
    %v1293 = vld [vmem:[%s11 + $0x60] sm:$0xff]
    %v1294 = vld [vmem:[%s11 + $0x68] sm:$0xff]
    %v1295 = vld [vmem:[%s11 + $0x70] sm:$0xff]
    %v1296 = vld [vmem:[%s11 + $0x78] sm:$0xff]
    %v1297 = vld [vmem:[%s11 + $0x80] sm:$0xff]
    %v1298 = vld [vmem:[%s11 + $0x88] sm:$0xff]
    %v1299 = vld [vmem:[%s11 + $0x90] sm:$0xff]
    %v1300 = vld [vmem:[%s11 + $0x98] sm:$0xff]
    %v1301 = vld [vmem:[%s11 + $0xa0] sm:$0xff]
    %v1302 = vld [vmem:[%s11 + $0xa8] sm:$0xff]
    %v1303 = vld [vmem:[%s11 + $0xb0] sm:$0xff]
    %v1304 = vld [vmem:[%s11 + $0xb8] sm:$0xff]
    %v1305 = vld [vmem:[%s11 + $0xc0] sm:$0xff]
    %v1306 = vld [vmem:[%s11 + $0xc8] sm:$0xff]
    %v1307 = vld [vmem:[%s11 + $0xd0] sm:$0xff]
    %v1308 = vld [vmem:[%s11 + $0xd8] sm:$0xff]
    %v1309 = vld [vmem:[%s11 + $0xe0] sm:$0xff]
    %v1310 = vld [vmem:[%s11 + $0xe8] sm:$0xff]
    %v1311 = vld [vmem:[%s11 + $0xf0] sm:$0xff]
    %v1312 = vld [vmem:[%s11 + $0xf8] sm:$0xff]
    %v1313 = vld [vmem:[%s11 + $0x100] sm:$0xff]
    %v1314 = vld [vmem:[%s11 + $0x108] sm:$0xff]
    %v1315 = vld [vmem:[%s11 + $0x110] sm:$0xff]
    %v1316 = vld [vmem:[%s11 + $0x118] sm:$0xff]
    %v1317 = vld [vmem:[%s11 + $0x120] sm:$0xff]
    %v1318 = vld [vmem:[%s11 + $0x128] sm:$0xff]
    %v1319 = vld [vmem:[%s11 + $0x130] sm:$0xff]
    %v1320 = vld [vmem:[%s11 + $0x138] sm:$0xff]
    %v1321 = vld [vmem:[%s11 + $0x140] sm:$0xff]
    %v1322 = vld [vmem:[%s11 + $0x148] sm:$0xff]
    %v1323 = vld [vmem:[%s11 + $0x150] sm:$0xff]
    %v1324 = vld [vmem:[%s11 + $0x158] sm:$0xff]
    %v1325 = vld [vmem:[%s11 + $0x160] sm:$0xff]
    %v1326 = vld [vmem:[%s11 + $0x168] sm:$0xff]
    %v1327 = vld [vmem:[%s11 + $0x170] sm:$0xff]
    %v1328 = vld [vmem:[%s11 + $0x178] sm:$0xff]
    %v1329 = vld [vmem:[%s11 + $0x180] sm:$0xff]
    %v1330 = vld [vmem:[%s11 + $0x188] sm:$0xff]
    %v1331 = vld [vmem:[%s11 + $0x190] sm:$0xff]
    %v1332 = vld [vmem:[%s11 + $0x198] sm:$0xff]
    %v1333 = vld [vmem:[%s11 + $0x1a0] sm:$0xff]
    %v1334 = vld [vmem:[%s11 + $0x1a8] sm:$0xff]
    %v1335 = vld [vmem:[%s11 + $0x1b0] sm:$0xff]
    %v1336 = vld [vmem:[%s11 + $0x1b8] sm:$0xff]
    %v1337 = vld [vmem:[%s11 + $0x1c0] sm:$0xff]
    %v1338 = vld [vmem:[%s11 + $0x1c8] sm:$0xff]
    %v1339 = vld [vmem:[%s11 + $0x1d0] sm:$0xff]
    %v1340 = vld [vmem:[%s11 + $0x1d8] sm:$0xff]
    %v1341 = vld [vmem:[%s11 + $0x1e0] sm:$0xff]
    %v1342 = vld [vmem:[%s11 + $0x1e8] sm:$0xff]
    %v1343 = vld [vmem:[%s11 + $0x1f0] sm:$0xff]
    %v1344 = vld [vmem:[%s11 + $0x1f8] sm:$0xff]
    %v1345 = vld [vmem:[%s11 + $0x200] sm:$0xff]
    %v1346 = vld [vmem:[%s11 + $0x208] sm:$0xff]
    %v1347 = vld [vmem:[%s11 + $0x210] sm:$0xff]
    %v1348 = vld [vmem:[%s11 + $0x218] sm:$0xff]
    %v1349 = vld [vmem:[%s11 + $0x220] sm:$0xff]
    %v1350 = vld [vmem:[%s11 + $0x228] sm:$0xff]
    %v1351 = vld [vmem:[%s11 + $0x230] sm:$0xff]
    %v1352 = vld [vmem:[%s11 + $0x238] sm:$0xff]
    %v1353 = vld [vmem:[%s11 + $0x240] sm:$0xff]
    %v1354 = vld [vmem:[%s11 + $0x248] sm:$0xff]
    %v1355 = vld [vmem:[%s11 + $0x250] sm:$0xff]
    %v1356 = vld [vmem:[%s11 + $0x258] sm:$0xff]
    %v1357 = vld [vmem:[%s11 + $0x260] sm:$0xff]
    %v1358 = vld [vmem:[%s11 + $0x268] sm:$0xff]
    %v1359 = vld [vmem:[%s11 + $0x270] sm:$0xff]
    %v1360 = vld [vmem:[%s11 + $0x278] sm:$0xff]
    %v1361 = vld [vmem:[%s12] sm:$0x1]
    %v1366 = vrot.slane %v1277, 6
    %v1367 = vrot.slane %v1278, 6
    %v1368 = vsel %vm342, %v1366, %v1367
    %v1369 = vrot.slane %v1279, 6
    %v1370 = vrot.slane %v1280, 6
    %v1371 = vsel %vm342, %v1369, %v1370
    %v1378 = vsel %vm342, 0.0, %v1366
    %v1379 = vsel %vm342, 0.0, %v1369
    %v1380 = vsel %vm342, %v1367, 0.0
    %v1381 = vsel %vm342, %v1370, 0.0
    %v1386 = vrot.slane %v1378, 1
    %v1387 = vrot.slane %v1368, 1
    %v1388 = vsel %vm228, %v1386, %v1387
    %v1389 = vrot.slane %v1380, 1
    %v1390 = vsel %vm228, %v1387, %v1389
    %v1391 = vrot.slane %v1379, 1
    %v1392 = vrot.slane %v1371, 1
    %v1393 = vsel %vm228, %v1391, %v1392
    %v1394 = vrot.slane %v1381, 1
    %v1395 = vsel %vm228, %v1392, %v1394
    %v1400 = vrot.slane %v1378, 2
    %v1401 = vrot.slane %v1368, 2
    %v1402 = vsel %vm251, %v1400, %v1401
    %v1403 = vrot.slane %v1380, 2
    %v1404 = vsel %vm251, %v1401, %v1403
    %v1405 = vrot.slane %v1379, 2
    %v1406 = vrot.slane %v1371, 2
    %v1407 = vsel %vm251, %v1405, %v1406
    %v1408 = vrot.slane %v1381, 2
    %v1409 = vsel %vm251, %v1406, %v1408
    %v1414 = vrot.slane %v1378, 3
    %v1415 = vrot.slane %v1368, 3
    %v1416 = vsel %vm274, %v1414, %v1415
    %v1417 = vrot.slane %v1380, 3
    %v1418 = vsel %vm274, %v1415, %v1417
    %v1419 = vrot.slane %v1379, 3
    %v1420 = vrot.slane %v1371, 3
    %v1421 = vsel %vm274, %v1419, %v1420
    %v1422 = vrot.slane %v1381, 3
    %v1423 = vsel %vm274, %v1420, %v1422
    %v1428 = vrot.slane %v1378, 4
    %v1429 = vrot.slane %v1368, 4
    %v1430 = vsel %vm297, %v1428, %v1429
    %v1431 = vrot.slane %v1380, 4
    %v1432 = vsel %vm297, %v1429, %v1431
    %v1433 = vrot.slane %v1379, 4
    %v1434 = vrot.slane %v1371, 4
    %v1435 = vsel %vm297, %v1433, %v1434
    %v1436 = vrot.slane %v1381, 4
    %v1437 = vsel %vm297, %v1434, %v1436
    %v1443 = vperm.slane %v1361, 0
    %1445 = vmatpush.msra.mxu0 %v1296
    %1446 = vmatpush.msra.mxu0 %v1295
    %1447 = vmatpush.msra.mxu0 %v1294
    %1448 = vmatpush.msra.mxu0 %v1293
    %1449 = vmatpush.msra.mxu0 %v1292
    %1450 = vmatpush.msra.mxu0 %v1291
    %1451 = vmatpush.msra.mxu0 %v1290
    %1452 = vmatpush.msra.mxu0 %v1289
    %1453 = vmatpush.msra.mxu0 %v1288
    %1454 = vmatpush.msra.mxu0 %v1287
    %1455 = vmatpush.msra.mxu0 %v1286
    %1456 = vmatpush.msra.mxu0 %v1285
    %1457 = vmatpush.msra.mxu0 %v1284
    %1458 = vmatpush.msra.mxu0 %v1283
    %1459 = vmatpush.msra.mxu0 %v1282
    %1460 = vmatpush.msra.mxu0 %v1281
    %1461 = vmatmul.f32.gmra.mxu0 %v1378
    %v1462 = vpop.f32.mrf.mxu0
    %v1463 = vadd.f32 %v1443, %v1462
    %1464 = vmatmul.f32.gmra.mxu0 %v1368
    %v1465 = vpop.f32.mrf.mxu0
    %v1466 = vadd.f32 %v1443, %v1465
    %1467 = vmatmul.f32.gmra.mxu0 %v1379
    %v1468 = vpop.f32.mrf.mxu0
    %v1469 = vadd.f32 %v1443, %v1468
    %1470 = vmatmul.f32.gmra.mxu0 %v1371
    %v1471 = vpop.f32.mrf.mxu0
    %v1472 = vadd.f32 %v1443, %v1471
    %1473 = vdwg.mxu0
    %1474 = vmatpush.msra.mxu0 %v1312
    %1475 = vmatpush.msra.mxu0 %v1311
    %1476 = vmatpush.msra.mxu0 %v1310
    %1477 = vmatpush.msra.mxu0 %v1309
    %1478 = vmatpush.msra.mxu0 %v1308
    %1479 = vmatpush.msra.mxu0 %v1307
    %1480 = vmatpush.msra.mxu0 %v1306
    %1481 = vmatpush.msra.mxu0 %v1305
    %1482 = vmatpush.msra.mxu0 %v1304
    %1483 = vmatpush.msra.mxu0 %v1303
    %1484 = vmatpush.msra.mxu0 %v1302
    %1485 = vmatpush.msra.mxu0 %v1301
    %1486 = vmatpush.msra.mxu0 %v1300
    %1487 = vmatpush.msra.mxu0 %v1299
    %1488 = vmatpush.msra.mxu0 %v1298
    %1489 = vmatpush.msra.mxu0 %v1297
    %1490 = vmatmul.f32.gmra.mxu0 %v1388
    %v1491 = vpop.f32.mrf.mxu0
    %v1492 = vadd.f32 %v1463, %v1491
    %1493 = vmatmul.f32.gmra.mxu0 %v1390
    %v1494 = vpop.f32.mrf.mxu0
    %v1495 = vadd.f32 %v1466, %v1494
    %1496 = vmatmul.f32.gmra.mxu0 %v1393
    %v1497 = vpop.f32.mrf.mxu0
    %v1498 = vadd.f32 %v1469, %v1497
    %1499 = vmatmul.f32.gmra.mxu0 %v1395
    %v1500 = vpop.f32.mrf.mxu0
    %v1501 = vadd.f32 %v1472, %v1500
    %1502 = vdwg.mxu0
    %1503 = vmatpush.msra.mxu0 %v1328
    %1504 = vmatpush.msra.mxu0 %v1327
    %1505 = vmatpush.msra.mxu0 %v1326
    %1506 = vmatpush.msra.mxu0 %v1325
    %1507 = vmatpush.msra.mxu0 %v1324
    %1508 = vmatpush.msra.mxu0 %v1323
    %1509 = vmatpush.msra.mxu0 %v1322
    %1510 = vmatpush.msra.mxu0 %v1321
    %1511 = vmatpush.msra.mxu0 %v1320
    %1512 = vmatpush.msra.mxu0 %v1319
    %1513 = vmatpush.msra.mxu0 %v1318
    %1514 = vmatpush.msra.mxu0 %v1317
    %1515 = vmatpush.msra.mxu0 %v1316
    %1516 = vmatpush.msra.mxu0 %v1315
    %1517 = vmatpush.msra.mxu0 %v1314
    %1518 = vmatpush.msra.mxu0 %v1313
    %1519 = vmatmul.f32.gmra.mxu0 %v1402
    %v1520 = vpop.f32.mrf.mxu0
    %v1521 = vadd.f32 %v1492, %v1520
    %1522 = vmatmul.f32.gmra.mxu0 %v1404
    %v1523 = vpop.f32.mrf.mxu0
    %v1524 = vadd.f32 %v1495, %v1523
    %1525 = vmatmul.f32.gmra.mxu0 %v1407
    %v1526 = vpop.f32.mrf.mxu0
    %v1527 = vadd.f32 %v1498, %v1526
    %1528 = vmatmul.f32.gmra.mxu0 %v1409
    %v1529 = vpop.f32.mrf.mxu0
    %v1530 = vadd.f32 %v1501, %v1529
    %1531 = vdwg.mxu0
    %1532 = vmatpush.msra.mxu0 %v1344
    %1533 = vmatpush.msra.mxu0 %v1343
    %1534 = vmatpush.msra.mxu0 %v1342
    %1535 = vmatpush.msra.mxu0 %v1341
    %1536 = vmatpush.msra.mxu0 %v1340
    %1537 = vmatpush.msra.mxu0 %v1339
    %1538 = vmatpush.msra.mxu0 %v1338
    %1539 = vmatpush.msra.mxu0 %v1337
    %1540 = vmatpush.msra.mxu0 %v1336
    %1541 = vmatpush.msra.mxu0 %v1335
    %1542 = vmatpush.msra.mxu0 %v1334
    %1543 = vmatpush.msra.mxu0 %v1333
    %1544 = vmatpush.msra.mxu0 %v1332
    %1545 = vmatpush.msra.mxu0 %v1331
    %1546 = vmatpush.msra.mxu0 %v1330
    %1547 = vmatpush.msra.mxu0 %v1329
    %1548 = vmatmul.f32.gmra.mxu0 %v1416
    %v1549 = vpop.f32.mrf.mxu0
    %v1550 = vadd.f32 %v1521, %v1549
    %1551 = vmatmul.f32.gmra.mxu0 %v1418
    %v1552 = vpop.f32.mrf.mxu0
    %v1553 = vadd.f32 %v1524, %v1552
    %1554 = vmatmul.f32.gmra.mxu0 %v1421
    %v1555 = vpop.f32.mrf.mxu0
    %v1556 = vadd.f32 %v1527, %v1555
    %1557 = vmatmul.f32.gmra.mxu0 %v1423
    %v1558 = vpop.f32.mrf.mxu0
    %v1559 = vadd.f32 %v1530, %v1558
    %1560 = vdwg.mxu0
    %1561 = vmatpush.msra.mxu0 %v1360
    %1562 = vmatpush.msra.mxu0 %v1359
    %1563 = vmatpush.msra.mxu0 %v1358
    %1564 = vmatpush.msra.mxu0 %v1357
    %1565 = vmatpush.msra.mxu0 %v1356
    %1566 = vmatpush.msra.mxu0 %v1355
    %1567 = vmatpush.msra.mxu0 %v1354
    %1568 = vmatpush.msra.mxu0 %v1353
    %1569 = vmatpush.msra.mxu0 %v1352
    %1570 = vmatpush.msra.mxu0 %v1351
    %1571 = vmatpush.msra.mxu0 %v1350
    %1572 = vmatpush.msra.mxu0 %v1349
    %1573 = vmatpush.msra.mxu0 %v1348
    %1574 = vmatpush.msra.mxu0 %v1347
    %1575 = vmatpush.msra.mxu0 %v1346
    %1576 = vmatpush.msra.mxu0 %v1345
    %1577 = vmatmul.f32.gmra.mxu0 %v1430
    %v1578 = vpop.f32.mrf.mxu0
    %v1579 = vadd.f32 %v1550, %v1578
    %1580 = vmatmul.f32.gmra.mxu0 %v1432
    %v1581 = vpop.f32.mrf.mxu0
    %v1582 = vadd.f32 %v1553, %v1581
    %1583 = vmatmul.f32.gmra.mxu0 %v1435
    %v1584 = vpop.f32.mrf.mxu0
    %v1585 = vadd.f32 %v1556, %v1584
    %1586 = vmatmul.f32.gmra.mxu0 %v1437
    %v1587 = vpop.f32.mrf.mxu0
    %v1588 = vadd.f32 %v1559, %v1587
    %1589 = vdwg.mxu0
    %v1590 = vmax.f32 %v1579, 0.0
    %v1591 = vmax.f32 %v1582, 0.0
    %v1592 = vmax.f32 %v1585, 0.0
    %v1593 = vmax.f32 %v1588, 0.0
    %v1594 = vld [vmem:[#allocation5] sm:$0xff]
    %v1595 = vld [vmem:[#allocation5 + $0x8] sm:$0xff]
    %v1596 = vld [vmem:[#allocation5 + $0x10] sm:$0xff]
    %v1597 = vld [vmem:[#allocation5 + $0x18] sm:$0xff]
    %v1598 = vld [vmem:[#allocation5 + $0x20] sm:$0xff]
    %v1599 = vld [vmem:[#allocation5 + $0x28] sm:$0xff]
    %v1600 = vld [vmem:[#allocation5 + $0x30] sm:$0xff]
    %v1601 = vld [vmem:[#allocation5 + $0x38] sm:$0xff]
    %v1602 = vld [vmem:[#allocation5 + $0x40] sm:$0xff]
    %v1603 = vld [vmem:[#allocation5 + $0x48] sm:$0xff]
    %v1604 = vld [vmem:[#allocation5 + $0x50] sm:$0xff]
    %v1605 = vld [vmem:[#allocation5 + $0x58] sm:$0xff]
    %v1606 = vld [vmem:[#allocation5 + $0x60] sm:$0xff]
    %v1607 = vld [vmem:[#allocation5 + $0x68] sm:$0xff]
    %v1608 = vld [vmem:[#allocation5 + $0x70] sm:$0xff]
    %v1609 = vld [vmem:[#allocation5 + $0x78] sm:$0xff]
    %v1610 = vld [vmem:[#allocation5 + $0x80] sm:$0xff]
    %v1611 = vld [vmem:[#allocation5 + $0x88] sm:$0xff]
    %v1612 = vld [vmem:[#allocation5 + $0x90] sm:$0xff]
    %v1613 = vld [vmem:[#allocation5 + $0x98] sm:$0xff]
    %v1614 = vld [vmem:[#allocation5 + $0xa0] sm:$0xff]
    %v1615 = vld [vmem:[#allocation5 + $0xa8] sm:$0xff]
    %v1616 = vld [vmem:[#allocation5 + $0xb0] sm:$0xff]
    %v1617 = vld [vmem:[#allocation5 + $0xb8] sm:$0xff]
    %v1618 = vld [vmem:[#allocation5 + $0xc0] sm:$0xff]
    %v1619 = vld [vmem:[#allocation5 + $0xc8] sm:$0xff]
    %v1620 = vld [vmem:[#allocation5 + $0xd0] sm:$0xff]
    %v1621 = vld [vmem:[#allocation5 + $0xd8] sm:$0xff]
    %v1622 = vld [vmem:[#allocation5 + $0xe0] sm:$0xff]
    %v1623 = vld [vmem:[#allocation5 + $0xe8] sm:$0xff]
    %v1624 = vld [vmem:[#allocation5 + $0xf0] sm:$0xff]
    %v1625 = vld [vmem:[#allocation5 + $0xf8] sm:$0xff]
    %v1626 = vld [vmem:[#allocation5 + $0x100] sm:$0xff]
    %v1627 = vld [vmem:[#allocation5 + $0x108] sm:$0xff]
    %v1628 = vld [vmem:[#allocation5 + $0x110] sm:$0xff]
    %v1629 = vld [vmem:[#allocation5 + $0x118] sm:$0xff]
    %v1630 = vld [vmem:[#allocation5 + $0x120] sm:$0xff]
    %v1631 = vld [vmem:[#allocation5 + $0x128] sm:$0xff]
    %v1632 = vld [vmem:[#allocation5 + $0x130] sm:$0xff]
    %v1633 = vld [vmem:[#allocation5 + $0x138] sm:$0xff]
    %v1634 = vld [vmem:[#allocation5 + $0x140] sm:$0xff]
    %v1635 = vld [vmem:[#allocation5 + $0x148] sm:$0xff]
    %v1636 = vld [vmem:[#allocation5 + $0x150] sm:$0xff]
    %v1637 = vld [vmem:[#allocation5 + $0x158] sm:$0xff]
    %v1638 = vld [vmem:[#allocation5 + $0x160] sm:$0xff]
    %v1639 = vld [vmem:[#allocation5 + $0x168] sm:$0xff]
    %v1640 = vld [vmem:[#allocation5 + $0x170] sm:$0xff]
    %v1641 = vld [vmem:[#allocation5 + $0x178] sm:$0xff]
    %v1642 = vld [vmem:[%s14] sm:$0x1]
    %v1647 = vrot.slane %v1590, 7
    %v1648 = vrot.slane %v1591, 7
    %v1649 = vsel %vm365, %v1647, %v1648
    %v1650 = vrot.slane %v1592, 7
    %v1651 = vrot.slane %v1593, 7
    %v1652 = vsel %vm365, %v1650, %v1651
    %v1659 = vsel %vm365, 0.0, %v1647
    %v1660 = vsel %vm365, 0.0, %v1650
    %v1661 = vsel %vm365, %v1648, 0.0
    %v1662 = vsel %vm365, %v1651, 0.0
    %v1667 = vrot.slane %v1659, 1
    %v1668 = vrot.slane %v1649, 1
    %v1669 = vsel %vm228, %v1667, %v1668
    %v1670 = vrot.slane %v1661, 1
    %v1671 = vsel %vm228, %v1668, %v1670
    %v1672 = vrot.slane %v1660, 1
    %v1673 = vrot.slane %v1652, 1
    %v1674 = vsel %vm228, %v1672, %v1673
    %v1675 = vrot.slane %v1662, 1
    %v1676 = vsel %vm228, %v1673, %v1675
    %v1681 = vrot.slane %v1659, 2
    %v1682 = vrot.slane %v1649, 2
    %v1683 = vsel %vm251, %v1681, %v1682
    %v1684 = vrot.slane %v1661, 2
    %v1685 = vsel %vm251, %v1682, %v1684
    %v1686 = vrot.slane %v1660, 2
    %v1687 = vrot.slane %v1652, 2
    %v1688 = vsel %vm251, %v1686, %v1687
    %v1689 = vrot.slane %v1662, 2
    %v1690 = vsel %vm251, %v1687, %v1689
    %v1696 = vperm.slane %v1642, 0
    %1698 = vmatpush.msra.mxu0 %v1609
    %1699 = vmatpush.msra.mxu0 %v1608
    %1700 = vmatpush.msra.mxu0 %v1607
    %1701 = vmatpush.msra.mxu0 %v1606
    %1702 = vmatpush.msra.mxu0 %v1605
    %1703 = vmatpush.msra.mxu0 %v1604
    %1704 = vmatpush.msra.mxu0 %v1603
    %1705 = vmatpush.msra.mxu0 %v1602
    %1706 = vmatpush.msra.mxu0 %v1601
    %1707 = vmatpush.msra.mxu0 %v1600
    %1708 = vmatpush.msra.mxu0 %v1599
    %1709 = vmatpush.msra.mxu0 %v1598
    %1710 = vmatpush.msra.mxu0 %v1597
    %1711 = vmatpush.msra.mxu0 %v1596
    %1712 = vmatpush.msra.mxu0 %v1595
    %1713 = vmatpush.msra.mxu0 %v1594
    %1714 = vmatmul.f32.gmra.mxu0 %v1659
    %v1715 = vpop.f32.mrf.mxu0
    %v1716 = vadd.f32 %v1696, %v1715
    %1717 = vmatmul.f32.gmra.mxu0 %v1649
    %v1718 = vpop.f32.mrf.mxu0
    %v1719 = vadd.f32 %v1696, %v1718
    %1720 = vmatmul.f32.gmra.mxu0 %v1660
    %v1721 = vpop.f32.mrf.mxu0
    %v1722 = vadd.f32 %v1696, %v1721
    %1723 = vmatmul.f32.gmra.mxu0 %v1652
    %v1724 = vpop.f32.mrf.mxu0
    %v1725 = vadd.f32 %v1696, %v1724
    %1726 = vdwg.mxu0
    %1727 = vmatpush.msra.mxu0 %v1625
    %1728 = vmatpush.msra.mxu0 %v1624
    %1729 = vmatpush.msra.mxu0 %v1623
    %1730 = vmatpush.msra.mxu0 %v1622
    %1731 = vmatpush.msra.mxu0 %v1621
    %1732 = vmatpush.msra.mxu0 %v1620
    %1733 = vmatpush.msra.mxu0 %v1619
    %1734 = vmatpush.msra.mxu0 %v1618
    %1735 = vmatpush.msra.mxu0 %v1617
    %1736 = vmatpush.msra.mxu0 %v1616
    %1737 = vmatpush.msra.mxu0 %v1615
    %1738 = vmatpush.msra.mxu0 %v1614
    %1739 = vmatpush.msra.mxu0 %v1613
    %1740 = vmatpush.msra.mxu0 %v1612
    %1741 = vmatpush.msra.mxu0 %v1611
    %1742 = vmatpush.msra.mxu0 %v1610
    %1743 = vmatmul.f32.gmra.mxu0 %v1669
    %v1744 = vpop.f32.mrf.mxu0
    %v1745 = vadd.f32 %v1716, %v1744
    %1746 = vmatmul.f32.gmra.mxu0 %v1671
    %v1747 = vpop.f32.mrf.mxu0
    %v1748 = vadd.f32 %v1719, %v1747
    %1749 = vmatmul.f32.gmra.mxu0 %v1674
    %v1750 = vpop.f32.mrf.mxu0
    %v1751 = vadd.f32 %v1722, %v1750
    %1752 = vmatmul.f32.gmra.mxu0 %v1676
    %v1753 = vpop.f32.mrf.mxu0
    %v1754 = vadd.f32 %v1725, %v1753
    %1755 = vdwg.mxu0
    %1756 = vmatpush.msra.mxu0 %v1641
    %1757 = vmatpush.msra.mxu0 %v1640
    %1758 = vmatpush.msra.mxu0 %v1639
    %1759 = vmatpush.msra.mxu0 %v1638
    %1760 = vmatpush.msra.mxu0 %v1637
    %1761 = vmatpush.msra.mxu0 %v1636
    %1762 = vmatpush.msra.mxu0 %v1635
    %1763 = vmatpush.msra.mxu0 %v1634
    %1764 = vmatpush.msra.mxu0 %v1633
    %1765 = vmatpush.msra.mxu0 %v1632
    %1766 = vmatpush.msra.mxu0 %v1631
    %1767 = vmatpush.msra.mxu0 %v1630
    %1768 = vmatpush.msra.mxu0 %v1629
    %1769 = vmatpush.msra.mxu0 %v1628
    %1770 = vmatpush.msra.mxu0 %v1627
    %1771 = vmatpush.msra.mxu0 %v1626
    %1772 = vmatmul.f32.gmra.mxu0 %v1683
    %v1773 = vpop.f32.mrf.mxu0
    %v1774 = vadd.f32 %v1745, %v1773
    %1775 = vmatmul.f32.gmra.mxu0 %v1685
    %v1776 = vpop.f32.mrf.mxu0
    %v1777 = vadd.f32 %v1748, %v1776
    %1778 = vmatmul.f32.gmra.mxu0 %v1688
    %v1779 = vpop.f32.mrf.mxu0
    %v1780 = vadd.f32 %v1751, %v1779
    %1781 = vmatmul.f32.gmra.mxu0 %v1690
    %v1782 = vpop.f32.mrf.mxu0
    %v1783 = vadd.f32 %v1754, %v1782
    %1784 = vdwg.mxu0
    %v1785 = vld [vmem:[#allocation7] sm:$0xff]
    %v1786 = vld [vmem:[#allocation7 + $0x8] sm:$0xff]
    %v1787 = vld [vmem:[#allocation7 + $0x10] sm:$0xff]
    %v1788 = vld [vmem:[#allocation7 + $0x18] sm:$0xff]
    %v1789 = vld [vmem:[#allocation7 + $0x20] sm:$0xff]
    %v1790 = vld [vmem:[#allocation7 + $0x28] sm:$0xff]
    %v1791 = vld [vmem:[#allocation7 + $0x30] sm:$0xff]
    %v1792 = vld [vmem:[#allocation7 + $0x38] sm:$0xff]
    %v1793 = vld [vmem:[%s16] sm:$0x1]
    %v1795 = vperm.slane %v1793, 0
    %v1797 = vsel %vm605, %v919, 0
    %v1799 = vsel %vm605, %v920, 0
    %v1801 = vsel %vm605, %v921, 0
    %v1803 = vsel %vm605, %v922, 0
    %1805 = vmatpush.msra.mxu0 0.0
    %1806 = vmatpush.msra.mxu0 0.0
    %1807 = vmatpush.msra.mxu0 0.0
    %1808 = vmatpush.msra.mxu0 0.0
    %1809 = vmatpush.msra.mxu0 0.0
    %1810 = vmatpush.msra.mxu0 0.0
    %1811 = vmatpush.msra.mxu0 0.0
    %1812 = vmatpush.msra.mxu0 0.0
    %1813 = vmatpush.msra.mxu0 %v1792
    %1814 = vmatpush.msra.mxu0 %v1791
    %1815 = vmatpush.msra.mxu0 %v1790
    %1816 = vmatpush.msra.mxu0 %v1789
    %1817 = vmatpush.msra.mxu0 %v1788
    %1818 = vmatpush.msra.mxu0 %v1787
    %1819 = vmatpush.msra.mxu0 %v1786
    %1820 = vmatpush.msra.mxu0 %v1785
    %1821 = vmatmul.f32.gmra.mxu0 %v1797
    %v1822 = vpop.f32.mrf.mxu0
    %v1823 = vadd.f32 %v1795, %v1822
    %1824 = vmatmul.f32.gmra.mxu0 %v1799
    %v1825 = vpop.f32.mrf.mxu0
    %v1826 = vadd.f32 %v1795, %v1825
    %1827 = vmatmul.f32.gmra.mxu0 %v1801
    %v1828 = vpop.f32.mrf.mxu0
    %v1829 = vadd.f32 %v1795, %v1828
    %1830 = vmatmul.f32.gmra.mxu0 %v1803
    %v1831 = vpop.f32.mrf.mxu0
    %v1832 = vadd.f32 %v1795, %v1831
    %1833 = vdwg.mxu0
    %v1834 = vadd.f32 %v1774, %v1823
    %v1835 = vadd.f32 %v1777, %v1826
    %v1836 = vadd.f32 %v1780, %v1829
    %v1837 = vadd.f32 %v1783, %v1832
    %v1838 = vmax.f32 %v1834, 0.0
    %v1839 = vmax.f32 %v1835, 0.0
    %v1840 = vmax.f32 %v1836, 0.0
    %v1841 = vmax.f32 %v1837, 0.0
    %v1842 = vld [vmem:[#allocation8] sm:$0xff]
    %v1843 = vld [vmem:[#allocation8 + $0x8] sm:$0xff]
    %v1844 = vld [vmem:[#allocation8 + $0x10] sm:$0xff]
    %v1845 = vld [vmem:[#allocation8 + $0x18] sm:$0xff]
    %v1846 = vld [vmem:[#allocation8 + $0x20] sm:$0xff]
    %v1847 = vld [vmem:[#allocation8 + $0x28] sm:$0xff]
    %v1848 = vld [vmem:[#allocation8 + $0x30] sm:$0xff]
    %v1849 = vld [vmem:[#allocation8 + $0x38] sm:$0xff]
    %v1850 = vld [vmem:[#allocation8 + $0x40] sm:$0xff]
    %v1851 = vld [vmem:[#allocation8 + $0x48] sm:$0xff]
    %v1852 = vld [vmem:[#allocation8 + $0x50] sm:$0xff]
    %v1853 = vld [vmem:[#allocation8 + $0x58] sm:$0xff]
    %v1854 = vld [vmem:[#allocation8 + $0x60] sm:$0xff]
    %v1855 = vld [vmem:[#allocation8 + $0x68] sm:$0xff]
    %v1856 = vld [vmem:[#allocation8 + $0x70] sm:$0xff]
    %v1857 = vld [vmem:[#allocation8 + $0x78] sm:$0xff]
    %v1858 = vld [vmem:[#allocation8 + $0x80] sm:$0xff]
    %v1859 = vld [vmem:[#allocation8 + $0x88] sm:$0xff]
    %v1860 = vld [vmem:[#allocation8 + $0x90] sm:$0xff]
    %v1861 = vld [vmem:[#allocation8 + $0x98] sm:$0xff]
    %v1862 = vld [vmem:[#allocation8 + $0xa0] sm:$0xff]
    %v1863 = vld [vmem:[#allocation8 + $0xa8] sm:$0xff]
    %v1864 = vld [vmem:[#allocation8 + $0xb0] sm:$0xff]
    %v1865 = vld [vmem:[#allocation8 + $0xb8] sm:$0xff]
    %v1866 = vld [vmem:[#allocation8 + $0xc0] sm:$0xff]
    %v1867 = vld [vmem:[#allocation8 + $0xc8] sm:$0xff]
    %v1868 = vld [vmem:[#allocation8 + $0xd0] sm:$0xff]
    %v1869 = vld [vmem:[#allocation8 + $0xd8] sm:$0xff]
    %v1870 = vld [vmem:[#allocation8 + $0xe0] sm:$0xff]
    %v1871 = vld [vmem:[#allocation8 + $0xe8] sm:$0xff]
    %v1872 = vld [vmem:[#allocation8 + $0xf0] sm:$0xff]
    %v1873 = vld [vmem:[#allocation8 + $0xf8] sm:$0xff]
    %v1874 = vld [vmem:[#allocation8 + $0x100] sm:$0xff]
    %v1875 = vld [vmem:[#allocation8 + $0x108] sm:$0xff]
    %v1876 = vld [vmem:[#allocation8 + $0x110] sm:$0xff]
    %v1877 = vld [vmem:[#allocation8 + $0x118] sm:$0xff]
    %v1878 = vld [vmem:[#allocation8 + $0x120] sm:$0xff]
    %v1879 = vld [vmem:[#allocation8 + $0x128] sm:$0xff]
    %v1880 = vld [vmem:[#allocation8 + $0x130] sm:$0xff]
    %v1881 = vld [vmem:[#allocation8 + $0x138] sm:$0xff]
    %v1882 = vld [vmem:[#allocation8 + $0x140] sm:$0xff]
    %v1883 = vld [vmem:[#allocation8 + $0x148] sm:$0xff]
    %v1884 = vld [vmem:[#allocation8 + $0x150] sm:$0xff]
    %v1885 = vld [vmem:[#allocation8 + $0x158] sm:$0xff]
    %v1886 = vld [vmem:[#allocation8 + $0x160] sm:$0xff]
    %v1887 = vld [vmem:[#allocation8 + $0x168] sm:$0xff]
    %v1888 = vld [vmem:[#allocation8 + $0x170] sm:$0xff]
    %v1889 = vld [vmem:[#allocation8 + $0x178] sm:$0xff]
    %v1890 = vld [vmem:[#allocation8 + $0x180] sm:$0xff]
    %v1891 = vld [vmem:[#allocation8 + $0x188] sm:$0xff]
    %v1892 = vld [vmem:[#allocation8 + $0x190] sm:$0xff]
    %v1893 = vld [vmem:[#allocation8 + $0x198] sm:$0xff]
    %v1894 = vld [vmem:[#allocation8 + $0x1a0] sm:$0xff]
    %v1895 = vld [vmem:[#allocation8 + $0x1a8] sm:$0xff]
    %v1896 = vld [vmem:[#allocation8 + $0x1b0] sm:$0xff]
    %v1897 = vld [vmem:[#allocation8 + $0x1b8] sm:$0xff]
    %v1898 = vld [vmem:[#allocation8 + $0x1c0] sm:$0xff]
    %v1899 = vld [vmem:[#allocation8 + $0x1c8] sm:$0xff]
    %v1900 = vld [vmem:[#allocation8 + $0x1d0] sm:$0xff]
    %v1901 = vld [vmem:[#allocation8 + $0x1d8] sm:$0xff]
    %v1902 = vld [vmem:[#allocation8 + $0x1e0] sm:$0xff]
    %v1903 = vld [vmem:[#allocation8 + $0x1e8] sm:$0xff]
    %v1904 = vld [vmem:[#allocation8 + $0x1f0] sm:$0xff]
    %v1905 = vld [vmem:[#allocation8 + $0x1f8] sm:$0xff]
    %v1906 = vld [vmem:[#allocation8 + $0x200] sm:$0xff]
    %v1907 = vld [vmem:[#allocation8 + $0x208] sm:$0xff]
    %v1908 = vld [vmem:[#allocation8 + $0x210] sm:$0xff]
    %v1909 = vld [vmem:[#allocation8 + $0x218] sm:$0xff]
    %v1910 = vld [vmem:[#allocation8 + $0x220] sm:$0xff]
    %v1911 = vld [vmem:[#allocation8 + $0x228] sm:$0xff]
    %v1912 = vld [vmem:[#allocation8 + $0x230] sm:$0xff]
    %v1913 = vld [vmem:[#allocation8 + $0x238] sm:$0xff]
    %v1914 = vld [vmem:[#allocation8 + $0x240] sm:$0xff]
    %v1915 = vld [vmem:[#allocation8 + $0x248] sm:$0xff]
    %v1916 = vld [vmem:[#allocation8 + $0x250] sm:$0xff]
    %v1917 = vld [vmem:[#allocation8 + $0x258] sm:$0xff]
    %v1918 = vld [vmem:[#allocation8 + $0x260] sm:$0xff]
    %v1919 = vld [vmem:[#allocation8 + $0x268] sm:$0xff]
    %v1920 = vld [vmem:[#allocation8 + $0x270] sm:$0xff]
    %v1921 = vld [vmem:[#allocation8 + $0x278] sm:$0xff]
    %v1922 = vld [vmem:[#allocation8 + $0x280] sm:$0xff]
    %v1923 = vld [vmem:[#allocation8 + $0x288] sm:$0xff]
    %v1924 = vld [vmem:[#allocation8 + $0x290] sm:$0xff]
    %v1925 = vld [vmem:[#allocation8 + $0x298] sm:$0xff]
    %v1926 = vld [vmem:[#allocation8 + $0x2a0] sm:$0xff]
    %v1927 = vld [vmem:[#allocation8 + $0x2a8] sm:$0xff]
    %v1928 = vld [vmem:[#allocation8 + $0x2b0] sm:$0xff]
    %v1929 = vld [vmem:[#allocation8 + $0x2b8] sm:$0xff]
    %v1930 = vld [vmem:[#allocation8 + $0x2c0] sm:$0xff]
    %v1931 = vld [vmem:[#allocation8 + $0x2c8] sm:$0xff]
    %v1932 = vld [vmem:[#allocation8 + $0x2d0] sm:$0xff]
    %v1933 = vld [vmem:[#allocation8 + $0x2d8] sm:$0xff]
    %v1934 = vld [vmem:[#allocation8 + $0x2e0] sm:$0xff]
    %v1935 = vld [vmem:[#allocation8 + $0x2e8] sm:$0xff]
    %v1936 = vld [vmem:[#allocation8 + $0x2f0] sm:$0xff]
    %v1937 = vld [vmem:[#allocation8 + $0x2f8] sm:$0xff]
    %v1938 = vld [vmem:[#allocation8 + $0x300] sm:$0xff]
    %v1939 = vld [vmem:[#allocation8 + $0x308] sm:$0xff]
    %v1940 = vld [vmem:[#allocation8 + $0x310] sm:$0xff]
    %v1941 = vld [vmem:[#allocation8 + $0x318] sm:$0xff]
    %v1942 = vld [vmem:[#allocation8 + $0x320] sm:$0xff]
    %v1943 = vld [vmem:[#allocation8 + $0x328] sm:$0xff]
    %v1944 = vld [vmem:[#allocation8 + $0x330] sm:$0xff]
    %v1945 = vld [vmem:[#allocation8 + $0x338] sm:$0xff]
    %v1946 = vld [vmem:[#allocation8 + $0x340] sm:$0xff]
    %v1947 = vld [vmem:[#allocation8 + $0x348] sm:$0xff]
    %v1948 = vld [vmem:[#allocation8 + $0x350] sm:$0xff]
    %v1949 = vld [vmem:[#allocation8 + $0x358] sm:$0xff]
    %v1950 = vld [vmem:[#allocation8 + $0x360] sm:$0xff]
    %v1951 = vld [vmem:[#allocation8 + $0x368] sm:$0xff]
    %v1952 = vld [vmem:[#allocation8 + $0x370] sm:$0xff]
    %v1953 = vld [vmem:[#allocation8 + $0x378] sm:$0xff]
    %v1954 = vld [vmem:[#allocation8 + $0x380] sm:$0xff]
    %v1955 = vld [vmem:[#allocation8 + $0x388] sm:$0xff]
    %v1956 = vld [vmem:[#allocation8 + $0x390] sm:$0xff]
    %v1957 = vld [vmem:[#allocation8 + $0x398] sm:$0xff]
    %v1958 = vld [vmem:[#allocation8 + $0x3a0] sm:$0xff]
    %v1959 = vld [vmem:[#allocation8 + $0x3a8] sm:$0xff]
    %v1960 = vld [vmem:[#allocation8 + $0x3b0] sm:$0xff]
    %v1961 = vld [vmem:[#allocation8 + $0x3b8] sm:$0xff]
    %v1962 = vld [vmem:[#allocation8 + $0x3c0] sm:$0xff]
    %v1963 = vld [vmem:[#allocation8 + $0x3c8] sm:$0xff]
    %v1964 = vld [vmem:[#allocation8 + $0x3d0] sm:$0xff]
    %v1965 = vld [vmem:[#allocation8 + $0x3d8] sm:$0xff]
    %v1966 = vld [vmem:[#allocation8 + $0x3e0] sm:$0xff]
    %v1967 = vld [vmem:[#allocation8 + $0x3e8] sm:$0xff]
    %v1968 = vld [vmem:[#allocation8 + $0x3f0] sm:$0xff]
    %v1969 = vld [vmem:[#allocation8 + $0x3f8] sm:$0xff]
    %v1970 = vld [vmem:[%s18] sm:$0x1]
    %v1975 = vrot.slane %v1838, 5
    %v1976 = vrot.slane %v1839, 5
    %v1977 = vsel %vm207, %v1975, %v1976
    %v1978 = vrot.slane %v1840, 5
    %v1979 = vrot.slane %v1841, 5
    %v1980 = vsel %vm207, %v1978, %v1979
    %v1987 = vsel %vm207, 0.0, %v1975
    %v1988 = vsel %vm207, 0.0, %v1978
    %v1989 = vsel %vm207, %v1976, 0.0
    %v1990 = vsel %vm207, %v1979, 0.0
    %v1995 = vrot.slane %v1987, 1
    %v1996 = vrot.slane %v1977, 1
    %v1997 = vsel %vm228, %v1995, %v1996
    %v1998 = vrot.slane %v1989, 1
    %v1999 = vsel %vm228, %v1996, %v1998
    %v2000 = vrot.slane %v1988, 1
    %v2001 = vrot.slane %v1980, 1
    %v2002 = vsel %vm228, %v2000, %v2001
    %v2003 = vrot.slane %v1990, 1
    %v2004 = vsel %vm228, %v2001, %v2003
    %v2009 = vrot.slane %v1987, 2
    %v2010 = vrot.slane %v1977, 2
    %v2011 = vsel %vm251, %v2009, %v2010
    %v2012 = vrot.slane %v1989, 2
    %v2013 = vsel %vm251, %v2010, %v2012
    %v2014 = vrot.slane %v1988, 2
    %v2015 = vrot.slane %v1980, 2
    %v2016 = vsel %vm251, %v2014, %v2015
    %v2017 = vrot.slane %v1990, 2
    %v2018 = vsel %vm251, %v2015, %v2017
    %v2023 = vrot.slane %v1987, 3
    %v2024 = vrot.slane %v1977, 3
    %v2025 = vsel %vm274, %v2023, %v2024
    %v2026 = vrot.slane %v1989, 3
    %v2027 = vsel %vm274, %v2024, %v2026
    %v2028 = vrot.slane %v1988, 3
    %v2029 = vrot.slane %v1980, 3
    %v2030 = vsel %vm274, %v2028, %v2029
    %v2031 = vrot.slane %v1990, 3
    %v2032 = vsel %vm274, %v2029, %v2031
    %v2037 = vrot.slane %v1987, 4
    %v2038 = vrot.slane %v1977, 4
    %v2039 = vsel %vm297, %v2037, %v2038
    %v2040 = vrot.slane %v1989, 4
    %v2041 = vsel %vm297, %v2038, %v2040
    %v2042 = vrot.slane %v1988, 4
    %v2043 = vrot.slane %v1980, 4
    %v2044 = vsel %vm297, %v2042, %v2043
    %v2045 = vrot.slane %v1990, 4
    %v2046 = vsel %vm297, %v2043, %v2045
    %v2051 = vrot.slane %v1987, 5
    %v2052 = vrot.slane %v1977, 5
    %v2053 = vsel %vm207, %v2051, %v2052
    %v2054 = vrot.slane %v1989, 5
    %v2055 = vsel %vm207, %v2052, %v2054
    %v2056 = vrot.slane %v1988, 5
    %v2057 = vrot.slane %v1980, 5
    %v2058 = vsel %vm207, %v2056, %v2057
    %v2059 = vrot.slane %v1990, 5
    %v2060 = vsel %vm207, %v2057, %v2059
    %v2065 = vrot.slane %v1987, 6
    %v2066 = vrot.slane %v1977, 6
    %v2067 = vsel %vm342, %v2065, %v2066
    %v2068 = vrot.slane %v1989, 6
    %v2069 = vsel %vm342, %v2066, %v2068
    %v2070 = vrot.slane %v1988, 6
    %v2071 = vrot.slane %v1980, 6
    %v2072 = vsel %vm342, %v2070, %v2071
    %v2073 = vrot.slane %v1990, 6
    %v2074 = vsel %vm342, %v2071, %v2073
    %v2079 = vrot.slane %v1987, 7
    %v2080 = vrot.slane %v1977, 7
    %v2081 = vsel %vm365, %v2079, %v2080
    %v2082 = vrot.slane %v1989, 7
    %v2083 = vsel %vm365, %v2080, %v2082
    %v2084 = vrot.slane %v1988, 7
    %v2085 = vrot.slane %v1980, 7
    %v2086 = vsel %vm365, %v2084, %v2085
    %v2087 = vrot.slane %v1990, 7
    %v2088 = vsel %vm365, %v2085, %v2087
    %v2094 = vperm.slane %v1970, 0
    %2096 = vmatpush.msra.mxu0 %v1857
    %2097 = vmatpush.msra.mxu0 %v1856
    %2098 = vmatpush.msra.mxu0 %v1855
    %2099 = vmatpush.msra.mxu0 %v1854
    %2100 = vmatpush.msra.mxu0 %v1853
    %2101 = vmatpush.msra.mxu0 %v1852
    %2102 = vmatpush.msra.mxu0 %v1851
    %2103 = vmatpush.msra.mxu0 %v1850
    %2104 = vmatpush.msra.mxu0 %v1849
    %2105 = vmatpush.msra.mxu0 %v1848
    %2106 = vmatpush.msra.mxu0 %v1847
    %2107 = vmatpush.msra.mxu0 %v1846
    %2108 = vmatpush.msra.mxu0 %v1845
    %2109 = vmatpush.msra.mxu0 %v1844
    %2110 = vmatpush.msra.mxu0 %v1843
    %2111 = vmatpush.msra.mxu0 %v1842
    %2112 = vmatmul.f32.gmra.mxu0 %v1987
    %v2113 = vpop.f32.mrf.mxu0
    %v2114 = vadd.f32 %v2094, %v2113
    %2115 = vmatmul.f32.gmra.mxu0 %v1977
    %v2116 = vpop.f32.mrf.mxu0
    %v2117 = vadd.f32 %v2094, %v2116
    %2118 = vmatmul.f32.gmra.mxu0 %v1988
    %v2119 = vpop.f32.mrf.mxu0
    %v2120 = vadd.f32 %v2094, %v2119
    %2121 = vmatmul.f32.gmra.mxu0 %v1980
    %v2122 = vpop.f32.mrf.mxu0
    %v2123 = vadd.f32 %v2094, %v2122
    %2124 = vdwg.mxu0
    %2125 = vmatpush.msra.mxu0 %v1873
    %2126 = vmatpush.msra.mxu0 %v1872
    %2127 = vmatpush.msra.mxu0 %v1871
    %2128 = vmatpush.msra.mxu0 %v1870
    %2129 = vmatpush.msra.mxu0 %v1869
    %2130 = vmatpush.msra.mxu0 %v1868
    %2131 = vmatpush.msra.mxu0 %v1867
    %2132 = vmatpush.msra.mxu0 %v1866
    %2133 = vmatpush.msra.mxu0 %v1865
    %2134 = vmatpush.msra.mxu0 %v1864
    %2135 = vmatpush.msra.mxu0 %v1863
    %2136 = vmatpush.msra.mxu0 %v1862
    %2137 = vmatpush.msra.mxu0 %v1861
    %2138 = vmatpush.msra.mxu0 %v1860
    %2139 = vmatpush.msra.mxu0 %v1859
    %2140 = vmatpush.msra.mxu0 %v1858
    %2141 = vmatmul.f32.gmra.mxu0 %v1997
    %v2142 = vpop.f32.mrf.mxu0
    %v2143 = vadd.f32 %v2114, %v2142
    %2144 = vmatmul.f32.gmra.mxu0 %v1999
    %v2145 = vpop.f32.mrf.mxu0
    %v2146 = vadd.f32 %v2117, %v2145
    %2147 = vmatmul.f32.gmra.mxu0 %v2002
    %v2148 = vpop.f32.mrf.mxu0
    %v2149 = vadd.f32 %v2120, %v2148
    %2150 = vmatmul.f32.gmra.mxu0 %v2004
    %v2151 = vpop.f32.mrf.mxu0
    %v2152 = vadd.f32 %v2123, %v2151
    %2153 = vdwg.mxu0
    %2154 = vmatpush.msra.mxu0 %v1889
    %2155 = vmatpush.msra.mxu0 %v1888
    %2156 = vmatpush.msra.mxu0 %v1887
    %2157 = vmatpush.msra.mxu0 %v1886
    %2158 = vmatpush.msra.mxu0 %v1885
    %2159 = vmatpush.msra.mxu0 %v1884
    %2160 = vmatpush.msra.mxu0 %v1883
    %2161 = vmatpush.msra.mxu0 %v1882
    %2162 = vmatpush.msra.mxu0 %v1881
    %2163 = vmatpush.msra.mxu0 %v1880
    %2164 = vmatpush.msra.mxu0 %v1879
    %2165 = vmatpush.msra.mxu0 %v1878
    %2166 = vmatpush.msra.mxu0 %v1877
    %2167 = vmatpush.msra.mxu0 %v1876
    %2168 = vmatpush.msra.mxu0 %v1875
    %2169 = vmatpush.msra.mxu0 %v1874
    %2170 = vmatmul.f32.gmra.mxu0 %v2011
    %v2171 = vpop.f32.mrf.mxu0
    %v2172 = vadd.f32 %v2143, %v2171
    %2173 = vmatmul.f32.gmra.mxu0 %v2013
    %v2174 = vpop.f32.mrf.mxu0
    %v2175 = vadd.f32 %v2146, %v2174
    %2176 = vmatmul.f32.gmra.mxu0 %v2016
    %v2177 = vpop.f32.mrf.mxu0
    %v2178 = vadd.f32 %v2149, %v2177
    %2179 = vmatmul.f32.gmra.mxu0 %v2018
    %v2180 = vpop.f32.mrf.mxu0
    %v2181 = vadd.f32 %v2152, %v2180
    %2182 = vdwg.mxu0
    %2183 = vmatpush.msra.mxu0 %v1905
    %2184 = vmatpush.msra.mxu0 %v1904
    %2185 = vmatpush.msra.mxu0 %v1903
    %2186 = vmatpush.msra.mxu0 %v1902
    %2187 = vmatpush.msra.mxu0 %v1901
    %2188 = vmatpush.msra.mxu0 %v1900
    %2189 = vmatpush.msra.mxu0 %v1899
    %2190 = vmatpush.msra.mxu0 %v1898
    %2191 = vmatpush.msra.mxu0 %v1897
    %2192 = vmatpush.msra.mxu0 %v1896
    %2193 = vmatpush.msra.mxu0 %v1895
    %2194 = vmatpush.msra.mxu0 %v1894
    %2195 = vmatpush.msra.mxu0 %v1893
    %2196 = vmatpush.msra.mxu0 %v1892
    %2197 = vmatpush.msra.mxu0 %v1891
    %2198 = vmatpush.msra.mxu0 %v1890
    %2199 = vmatmul.f32.gmra.mxu0 %v2025
    %v2200 = vpop.f32.mrf.mxu0
    %v2201 = vadd.f32 %v2172, %v2200
    %2202 = vmatmul.f32.gmra.mxu0 %v2027
    %v2203 = vpop.f32.mrf.mxu0
    %v2204 = vadd.f32 %v2175, %v2203
    %2205 = vmatmul.f32.gmra.mxu0 %v2030
    %v2206 = vpop.f32.mrf.mxu0
    %v2207 = vadd.f32 %v2178, %v2206
    %2208 = vmatmul.f32.gmra.mxu0 %v2032
    %v2209 = vpop.f32.mrf.mxu0
    %v2210 = vadd.f32 %v2181, %v2209
    %2211 = vdwg.mxu0
    %2212 = vmatpush.msra.mxu0 %v1921
    %2213 = vmatpush.msra.mxu0 %v1920
    %2214 = vmatpush.msra.mxu0 %v1919
    %2215 = vmatpush.msra.mxu0 %v1918
    %2216 = vmatpush.msra.mxu0 %v1917
    %2217 = vmatpush.msra.mxu0 %v1916
    %2218 = vmatpush.msra.mxu0 %v1915
    %2219 = vmatpush.msra.mxu0 %v1914
    %2220 = vmatpush.msra.mxu0 %v1913
    %2221 = vmatpush.msra.mxu0 %v1912
    %2222 = vmatpush.msra.mxu0 %v1911
    %2223 = vmatpush.msra.mxu0 %v1910
    %2224 = vmatpush.msra.mxu0 %v1909
    %2225 = vmatpush.msra.mxu0 %v1908
    %2226 = vmatpush.msra.mxu0 %v1907
    %2227 = vmatpush.msra.mxu0 %v1906
    %2228 = vmatmul.f32.gmra.mxu0 %v2039
    %v2229 = vpop.f32.mrf.mxu0
    %v2230 = vadd.f32 %v2201, %v2229
    %2231 = vmatmul.f32.gmra.mxu0 %v2041
    %v2232 = vpop.f32.mrf.mxu0
    %v2233 = vadd.f32 %v2204, %v2232
    %2234 = vmatmul.f32.gmra.mxu0 %v2044
    %v2235 = vpop.f32.mrf.mxu0
    %v2236 = vadd.f32 %v2207, %v2235
    %2237 = vmatmul.f32.gmra.mxu0 %v2046
    %v2238 = vpop.f32.mrf.mxu0
    %v2239 = vadd.f32 %v2210, %v2238
    %2240 = vdwg.mxu0
    %2241 = vmatpush.msra.mxu0 %v1937
    %2242 = vmatpush.msra.mxu0 %v1936
    %2243 = vmatpush.msra.mxu0 %v1935
    %2244 = vmatpush.msra.mxu0 %v1934
    %2245 = vmatpush.msra.mxu0 %v1933
    %2246 = vmatpush.msra.mxu0 %v1932
    %2247 = vmatpush.msra.mxu0 %v1931
    %2248 = vmatpush.msra.mxu0 %v1930
    %2249 = vmatpush.msra.mxu0 %v1929
    %2250 = vmatpush.msra.mxu0 %v1928
    %2251 = vmatpush.msra.mxu0 %v1927
    %2252 = vmatpush.msra.mxu0 %v1926
    %2253 = vmatpush.msra.mxu0 %v1925
    %2254 = vmatpush.msra.mxu0 %v1924
    %2255 = vmatpush.msra.mxu0 %v1923
    %2256 = vmatpush.msra.mxu0 %v1922
    %2257 = vmatmul.f32.gmra.mxu0 %v2053
    %v2258 = vpop.f32.mrf.mxu0
    %v2259 = vadd.f32 %v2230, %v2258
    %2260 = vmatmul.f32.gmra.mxu0 %v2055
    %v2261 = vpop.f32.mrf.mxu0
    %v2262 = vadd.f32 %v2233, %v2261
    %2263 = vmatmul.f32.gmra.mxu0 %v2058
    %v2264 = vpop.f32.mrf.mxu0
    %v2265 = vadd.f32 %v2236, %v2264
    %2266 = vmatmul.f32.gmra.mxu0 %v2060
    %v2267 = vpop.f32.mrf.mxu0
    %v2268 = vadd.f32 %v2239, %v2267
    %2269 = vdwg.mxu0
    %2270 = vmatpush.msra.mxu0 %v1953
    %2271 = vmatpush.msra.mxu0 %v1952
    %2272 = vmatpush.msra.mxu0 %v1951
    %2273 = vmatpush.msra.mxu0 %v1950
    %2274 = vmatpush.msra.mxu0 %v1949
    %2275 = vmatpush.msra.mxu0 %v1948
    %2276 = vmatpush.msra.mxu0 %v1947
    %2277 = vmatpush.msra.mxu0 %v1946
    %2278 = vmatpush.msra.mxu0 %v1945
    %2279 = vmatpush.msra.mxu0 %v1944
    %2280 = vmatpush.msra.mxu0 %v1943
    %2281 = vmatpush.msra.mxu0 %v1942
    %2282 = vmatpush.msra.mxu0 %v1941
    %2283 = vmatpush.msra.mxu0 %v1940
    %2284 = vmatpush.msra.mxu0 %v1939
    %2285 = vmatpush.msra.mxu0 %v1938
    %2286 = vmatmul.f32.gmra.mxu0 %v2067
    %v2287 = vpop.f32.mrf.mxu0
    %v2288 = vadd.f32 %v2259, %v2287
    %2289 = vmatmul.f32.gmra.mxu0 %v2069
    %v2290 = vpop.f32.mrf.mxu0
    %v2291 = vadd.f32 %v2262, %v2290
    %2292 = vmatmul.f32.gmra.mxu0 %v2072
    %v2293 = vpop.f32.mrf.mxu0
    %v2294 = vadd.f32 %v2265, %v2293
    %2295 = vmatmul.f32.gmra.mxu0 %v2074
    %v2296 = vpop.f32.mrf.mxu0
    %v2297 = vadd.f32 %v2268, %v2296
    %2298 = vdwg.mxu0
    %2299 = vmatpush.msra.mxu0 %v1969
    %2300 = vmatpush.msra.mxu0 %v1968
    %2301 = vmatpush.msra.mxu0 %v1967
    %2302 = vmatpush.msra.mxu0 %v1966
    %2303 = vmatpush.msra.mxu0 %v1965
    %2304 = vmatpush.msra.mxu0 %v1964
    %2305 = vmatpush.msra.mxu0 %v1963
    %2306 = vmatpush.msra.mxu0 %v1962
    %2307 = vmatpush.msra.mxu0 %v1961
    %2308 = vmatpush.msra.mxu0 %v1960
    %2309 = vmatpush.msra.mxu0 %v1959
    %2310 = vmatpush.msra.mxu0 %v1958
    %2311 = vmatpush.msra.mxu0 %v1957
    %2312 = vmatpush.msra.mxu0 %v1956
    %2313 = vmatpush.msra.mxu0 %v1955
    %2314 = vmatpush.msra.mxu0 %v1954
    %2315 = vmatmul.f32.gmra.mxu0 %v2081
    %v2316 = vpop.f32.mrf.mxu0
    %v2317 = vadd.f32 %v2288, %v2316
    %2318 = vmatmul.f32.gmra.mxu0 %v2083
    %v2319 = vpop.f32.mrf.mxu0
    %v2320 = vadd.f32 %v2291, %v2319
    %2321 = vmatmul.f32.gmra.mxu0 %v2086
    %v2322 = vpop.f32.mrf.mxu0
    %v2323 = vadd.f32 %v2294, %v2322
    %2324 = vmatmul.f32.gmra.mxu0 %v2088
    %v2325 = vpop.f32.mrf.mxu0
    %v2326 = vadd.f32 %v2297, %v2325
    %2327 = vdwg.mxu0
    %v2328 = vmax.f32 %v2317, 0.0
    %v2329 = vmax.f32 %v2320, 0.0
    %v2330 = vmax.f32 %v2323, 0.0
    %v2331 = vmax.f32 %v2326, 0.0
    %v2332 = vld [vmem:[#allocation10] sm:$0xff]
    %v2333 = vld [vmem:[#allocation10 + $0x8] sm:$0xff]
    %v2334 = vld [vmem:[#allocation10 + $0x10] sm:$0xff]
    %v2335 = vld [vmem:[#allocation10 + $0x18] sm:$0xff]
    %v2336 = vld [vmem:[#allocation10 + $0x20] sm:$0xff]
    %v2337 = vld [vmem:[#allocation10 + $0x28] sm:$0xff]
    %v2338 = vld [vmem:[#allocation10 + $0x30] sm:$0xff]
    %v2339 = vld [vmem:[#allocation10 + $0x38] sm:$0xff]
    %v2340 = vld [vmem:[#allocation10 + $0x40] sm:$0xff]
    %v2341 = vld [vmem:[#allocation10 + $0x48] sm:$0xff]
    %v2342 = vld [vmem:[#allocation10 + $0x50] sm:$0xff]
    %v2343 = vld [vmem:[#allocation10 + $0x58] sm:$0xff]
    %v2344 = vld [vmem:[#allocation10 + $0x60] sm:$0xff]
    %v2345 = vld [vmem:[#allocation10 + $0x68] sm:$0xff]
    %v2346 = vld [vmem:[#allocation10 + $0x70] sm:$0xff]
    %v2347 = vld [vmem:[#allocation10 + $0x78] sm:$0xff]
    %v2348 = vld [vmem:[#allocation10 + $0x80] sm:$0xff]
    %v2349 = vld [vmem:[#allocation10 + $0x88] sm:$0xff]
    %v2350 = vld [vmem:[#allocation10 + $0x90] sm:$0xff]
    %v2351 = vld [vmem:[#allocation10 + $0x98] sm:$0xff]
    %v2352 = vld [vmem:[#allocation10 + $0xa0] sm:$0xff]
    %v2353 = vld [vmem:[#allocation10 + $0xa8] sm:$0xff]
    %v2354 = vld [vmem:[#allocation10 + $0xb0] sm:$0xff]
    %v2355 = vld [vmem:[#allocation10 + $0xb8] sm:$0xff]
    %v2356 = vld [vmem:[#allocation10 + $0xc0] sm:$0xff]
    %v2357 = vld [vmem:[#allocation10 + $0xc8] sm:$0xff]
    %v2358 = vld [vmem:[#allocation10 + $0xd0] sm:$0xff]
    %v2359 = vld [vmem:[#allocation10 + $0xd8] sm:$0xff]
    %v2360 = vld [vmem:[#allocation10 + $0xe0] sm:$0xff]
    %v2361 = vld [vmem:[#allocation10 + $0xe8] sm:$0xff]
    %v2362 = vld [vmem:[#allocation10 + $0xf0] sm:$0xff]
    %v2363 = vld [vmem:[#allocation10 + $0xf8] sm:$0xff]
    %v2364 = vld [vmem:[#allocation10 + $0x100] sm:$0xff]
    %v2365 = vld [vmem:[#allocation10 + $0x108] sm:$0xff]
    %v2366 = vld [vmem:[#allocation10 + $0x110] sm:$0xff]
    %v2367 = vld [vmem:[#allocation10 + $0x118] sm:$0xff]
    %v2368 = vld [vmem:[#allocation10 + $0x120] sm:$0xff]
    %v2369 = vld [vmem:[#allocation10 + $0x128] sm:$0xff]
    %v2370 = vld [vmem:[#allocation10 + $0x130] sm:$0xff]
    %v2371 = vld [vmem:[#allocation10 + $0x138] sm:$0xff]
    %v2372 = vld [vmem:[#allocation10 + $0x140] sm:$0xff]
    %v2373 = vld [vmem:[#allocation10 + $0x148] sm:$0xff]
    %v2374 = vld [vmem:[#allocation10 + $0x150] sm:$0xff]
    %v2375 = vld [vmem:[#allocation10 + $0x158] sm:$0xff]
    %v2376 = vld [vmem:[#allocation10 + $0x160] sm:$0xff]
    %v2377 = vld [vmem:[#allocation10 + $0x168] sm:$0xff]
    %v2378 = vld [vmem:[#allocation10 + $0x170] sm:$0xff]
    %v2379 = vld [vmem:[#allocation10 + $0x178] sm:$0xff]
    %v2380 = vld [vmem:[#allocation10 + $0x180] sm:$0xff]
    %v2381 = vld [vmem:[#allocation10 + $0x188] sm:$0xff]
    %v2382 = vld [vmem:[#allocation10 + $0x190] sm:$0xff]
    %v2383 = vld [vmem:[#allocation10 + $0x198] sm:$0xff]
    %v2384 = vld [vmem:[#allocation10 + $0x1a0] sm:$0xff]
    %v2385 = vld [vmem:[#allocation10 + $0x1a8] sm:$0xff]
    %v2386 = vld [vmem:[#allocation10 + $0x1b0] sm:$0xff]
    %v2387 = vld [vmem:[#allocation10 + $0x1b8] sm:$0xff]
    %v2388 = vld [vmem:[#allocation10 + $0x1c0] sm:$0xff]
    %v2389 = vld [vmem:[#allocation10 + $0x1c8] sm:$0xff]
    %v2390 = vld [vmem:[#allocation10 + $0x1d0] sm:$0xff]
    %v2391 = vld [vmem:[#allocation10 + $0x1d8] sm:$0xff]
    %v2392 = vld [vmem:[#allocation10 + $0x1e0] sm:$0xff]
    %v2393 = vld [vmem:[#allocation10 + $0x1e8] sm:$0xff]
    %v2394 = vld [vmem:[#allocation10 + $0x1f0] sm:$0xff]
    %v2395 = vld [vmem:[#allocation10 + $0x1f8] sm:$0xff]
    %v2396 = vld [vmem:[#allocation10 + $0x200] sm:$0xff]
    %v2397 = vld [vmem:[#allocation10 + $0x208] sm:$0xff]
    %v2398 = vld [vmem:[#allocation10 + $0x210] sm:$0xff]
    %v2399 = vld [vmem:[#allocation10 + $0x218] sm:$0xff]
    %v2400 = vld [vmem:[#allocation10 + $0x220] sm:$0xff]
    %v2401 = vld [vmem:[#allocation10 + $0x228] sm:$0xff]
    %v2402 = vld [vmem:[#allocation10 + $0x230] sm:$0xff]
    %v2403 = vld [vmem:[#allocation10 + $0x238] sm:$0xff]
    %v2404 = vld [vmem:[#allocation10 + $0x240] sm:$0xff]
    %v2405 = vld [vmem:[#allocation10 + $0x248] sm:$0xff]
    %v2406 = vld [vmem:[#allocation10 + $0x250] sm:$0xff]
    %v2407 = vld [vmem:[#allocation10 + $0x258] sm:$0xff]
    %v2408 = vld [vmem:[#allocation10 + $0x260] sm:$0xff]
    %v2409 = vld [vmem:[#allocation10 + $0x268] sm:$0xff]
    %v2410 = vld [vmem:[#allocation10 + $0x270] sm:$0xff]
    %v2411 = vld [vmem:[#allocation10 + $0x278] sm:$0xff]
    %v2412 = vld [vmem:[%s20] sm:$0x1]
    %v2417 = vrot.slane %v2328, 6
    %v2418 = vrot.slane %v2329, 6
    %v2419 = vsel %vm342, %v2417, %v2418
    %v2420 = vrot.slane %v2330, 6
    %v2421 = vrot.slane %v2331, 6
    %v2422 = vsel %vm342, %v2420, %v2421
    %v2429 = vsel %vm342, 0.0, %v2417
    %v2430 = vsel %vm342, 0.0, %v2420
    %v2431 = vsel %vm342, %v2418, 0.0
    %v2432 = vsel %vm342, %v2421, 0.0
    %v2437 = vrot.slane %v2429, 1
    %v2438 = vrot.slane %v2419, 1
    %v2439 = vsel %vm228, %v2437, %v2438
    %v2440 = vrot.slane %v2431, 1
    %v2441 = vsel %vm228, %v2438, %v2440
    %v2442 = vrot.slane %v2430, 1
    %v2443 = vrot.slane %v2422, 1
    %v2444 = vsel %vm228, %v2442, %v2443
    %v2445 = vrot.slane %v2432, 1
    %v2446 = vsel %vm228, %v2443, %v2445
    %v2451 = vrot.slane %v2429, 2
    %v2452 = vrot.slane %v2419, 2
    %v2453 = vsel %vm251, %v2451, %v2452
    %v2454 = vrot.slane %v2431, 2
    %v2455 = vsel %vm251, %v2452, %v2454
    %v2456 = vrot.slane %v2430, 2
    %v2457 = vrot.slane %v2422, 2
    %v2458 = vsel %vm251, %v2456, %v2457
    %v2459 = vrot.slane %v2432, 2
    %v2460 = vsel %vm251, %v2457, %v2459
    %v2465 = vrot.slane %v2429, 3
    %v2466 = vrot.slane %v2419, 3
    %v2467 = vsel %vm274, %v2465, %v2466
    %v2468 = vrot.slane %v2431, 3
    %v2469 = vsel %vm274, %v2466, %v2468
    %v2470 = vrot.slane %v2430, 3
    %v2471 = vrot.slane %v2422, 3
    %v2472 = vsel %vm274, %v2470, %v2471
    %v2473 = vrot.slane %v2432, 3
    %v2474 = vsel %vm274, %v2471, %v2473
    %v2479 = vrot.slane %v2429, 4
    %v2480 = vrot.slane %v2419, 4
    %v2481 = vsel %vm297, %v2479, %v2480
    %v2482 = vrot.slane %v2431, 4
    %v2483 = vsel %vm297, %v2480, %v2482
    %v2484 = vrot.slane %v2430, 4
    %v2485 = vrot.slane %v2422, 4
    %v2486 = vsel %vm297, %v2484, %v2485
    %v2487 = vrot.slane %v2432, 4
    %v2488 = vsel %vm297, %v2485, %v2487
    %v2494 = vperm.slane %v2412, 0
    %2496 = vmatpush.msra.mxu0 %v2347
    %2497 = vmatpush.msra.mxu0 %v2346
    %2498 = vmatpush.msra.mxu0 %v2345
    %2499 = vmatpush.msra.mxu0 %v2344
    %2500 = vmatpush.msra.mxu0 %v2343
    %2501 = vmatpush.msra.mxu0 %v2342
    %2502 = vmatpush.msra.mxu0 %v2341
    %2503 = vmatpush.msra.mxu0 %v2340
    %2504 = vmatpush.msra.mxu0 %v2339
    %2505 = vmatpush.msra.mxu0 %v2338
    %2506 = vmatpush.msra.mxu0 %v2337
    %2507 = vmatpush.msra.mxu0 %v2336
    %2508 = vmatpush.msra.mxu0 %v2335
    %2509 = vmatpush.msra.mxu0 %v2334
    %2510 = vmatpush.msra.mxu0 %v2333
    %2511 = vmatpush.msra.mxu0 %v2332
    %2512 = vmatmul.f32.gmra.mxu0 %v2429
    %v2513 = vpop.f32.mrf.mxu0
    %v2514 = vadd.f32 %v2494, %v2513
    %2515 = vmatmul.f32.gmra.mxu0 %v2419
    %v2516 = vpop.f32.mrf.mxu0
    %v2517 = vadd.f32 %v2494, %v2516
    %2518 = vmatmul.f32.gmra.mxu0 %v2430
    %v2519 = vpop.f32.mrf.mxu0
    %v2520 = vadd.f32 %v2494, %v2519
    %2521 = vmatmul.f32.gmra.mxu0 %v2422
    %v2522 = vpop.f32.mrf.mxu0
    %v2523 = vadd.f32 %v2494, %v2522
    %2524 = vdwg.mxu0
    %2525 = vmatpush.msra.mxu0 %v2363
    %2526 = vmatpush.msra.mxu0 %v2362
    %2527 = vmatpush.msra.mxu0 %v2361
    %2528 = vmatpush.msra.mxu0 %v2360
    %2529 = vmatpush.msra.mxu0 %v2359
    %2530 = vmatpush.msra.mxu0 %v2358
    %2531 = vmatpush.msra.mxu0 %v2357
    %2532 = vmatpush.msra.mxu0 %v2356
    %2533 = vmatpush.msra.mxu0 %v2355
    %2534 = vmatpush.msra.mxu0 %v2354
    %2535 = vmatpush.msra.mxu0 %v2353
    %2536 = vmatpush.msra.mxu0 %v2352
    %2537 = vmatpush.msra.mxu0 %v2351
    %2538 = vmatpush.msra.mxu0 %v2350
    %2539 = vmatpush.msra.mxu0 %v2349
    %2540 = vmatpush.msra.mxu0 %v2348
    %2541 = vmatmul.f32.gmra.mxu0 %v2439
    %v2542 = vpop.f32.mrf.mxu0
    %v2543 = vadd.f32 %v2514, %v2542
    %2544 = vmatmul.f32.gmra.mxu0 %v2441
    %v2545 = vpop.f32.mrf.mxu0
    %v2546 = vadd.f32 %v2517, %v2545
    %2547 = vmatmul.f32.gmra.mxu0 %v2444
    %v2548 = vpop.f32.mrf.mxu0
    %v2549 = vadd.f32 %v2520, %v2548
    %2550 = vmatmul.f32.gmra.mxu0 %v2446
    %v2551 = vpop.f32.mrf.mxu0
    %v2552 = vadd.f32 %v2523, %v2551
    %2553 = vdwg.mxu0
    %2554 = vmatpush.msra.mxu0 %v2379
    %2555 = vmatpush.msra.mxu0 %v2378
    %2556 = vmatpush.msra.mxu0 %v2377
    %2557 = vmatpush.msra.mxu0 %v2376
    %2558 = vmatpush.msra.mxu0 %v2375
    %2559 = vmatpush.msra.mxu0 %v2374
    %2560 = vmatpush.msra.mxu0 %v2373
    %2561 = vmatpush.msra.mxu0 %v2372
    %2562 = vmatpush.msra.mxu0 %v2371
    %2563 = vmatpush.msra.mxu0 %v2370
    %2564 = vmatpush.msra.mxu0 %v2369
    %2565 = vmatpush.msra.mxu0 %v2368
    %2566 = vmatpush.msra.mxu0 %v2367
    %2567 = vmatpush.msra.mxu0 %v2366
    %2568 = vmatpush.msra.mxu0 %v2365
    %2569 = vmatpush.msra.mxu0 %v2364
    %2570 = vmatmul.f32.gmra.mxu0 %v2453
    %v2571 = vpop.f32.mrf.mxu0
    %v2572 = vadd.f32 %v2543, %v2571
    %2573 = vmatmul.f32.gmra.mxu0 %v2455
    %v2574 = vpop.f32.mrf.mxu0
    %v2575 = vadd.f32 %v2546, %v2574
    %2576 = vmatmul.f32.gmra.mxu0 %v2458
    %v2577 = vpop.f32.mrf.mxu0
    %v2578 = vadd.f32 %v2549, %v2577
    %2579 = vmatmul.f32.gmra.mxu0 %v2460
    %v2580 = vpop.f32.mrf.mxu0
    %v2581 = vadd.f32 %v2552, %v2580
    %2582 = vdwg.mxu0
    %2583 = vmatpush.msra.mxu0 %v2395
    %2584 = vmatpush.msra.mxu0 %v2394
    %2585 = vmatpush.msra.mxu0 %v2393
    %2586 = vmatpush.msra.mxu0 %v2392
    %2587 = vmatpush.msra.mxu0 %v2391
    %2588 = vmatpush.msra.mxu0 %v2390
    %2589 = vmatpush.msra.mxu0 %v2389
    %2590 = vmatpush.msra.mxu0 %v2388
    %2591 = vmatpush.msra.mxu0 %v2387
    %2592 = vmatpush.msra.mxu0 %v2386
    %2593 = vmatpush.msra.mxu0 %v2385
    %2594 = vmatpush.msra.mxu0 %v2384
    %2595 = vmatpush.msra.mxu0 %v2383
    %2596 = vmatpush.msra.mxu0 %v2382
    %2597 = vmatpush.msra.mxu0 %v2381
    %2598 = vmatpush.msra.mxu0 %v2380
    %2599 = vmatmul.f32.gmra.mxu0 %v2467
    %v2600 = vpop.f32.mrf.mxu0
    %v2601 = vadd.f32 %v2572, %v2600
    %2602 = vmatmul.f32.gmra.mxu0 %v2469
    %v2603 = vpop.f32.mrf.mxu0
    %v2604 = vadd.f32 %v2575, %v2603
    %2605 = vmatmul.f32.gmra.mxu0 %v2472
    %v2606 = vpop.f32.mrf.mxu0
    %v2607 = vadd.f32 %v2578, %v2606
    %2608 = vmatmul.f32.gmra.mxu0 %v2474
    %v2609 = vpop.f32.mrf.mxu0
    %v2610 = vadd.f32 %v2581, %v2609
    %2611 = vdwg.mxu0
    %2612 = vmatpush.msra.mxu0 %v2411
    %2613 = vmatpush.msra.mxu0 %v2410
    %2614 = vmatpush.msra.mxu0 %v2409
    %2615 = vmatpush.msra.mxu0 %v2408
    %2616 = vmatpush.msra.mxu0 %v2407
    %2617 = vmatpush.msra.mxu0 %v2406
    %2618 = vmatpush.msra.mxu0 %v2405
    %2619 = vmatpush.msra.mxu0 %v2404
    %2620 = vmatpush.msra.mxu0 %v2403
    %2621 = vmatpush.msra.mxu0 %v2402
    %2622 = vmatpush.msra.mxu0 %v2401
    %2623 = vmatpush.msra.mxu0 %v2400
    %2624 = vmatpush.msra.mxu0 %v2399
    %2625 = vmatpush.msra.mxu0 %v2398
    %2626 = vmatpush.msra.mxu0 %v2397
    %2627 = vmatpush.msra.mxu0 %v2396
    %2628 = vmatmul.f32.gmra.mxu0 %v2481
    %v2629 = vpop.f32.mrf.mxu0
    %v2630 = vadd.f32 %v2601, %v2629
    %2631 = vmatmul.f32.gmra.mxu0 %v2483
    %v2632 = vpop.f32.mrf.mxu0
    %v2633 = vadd.f32 %v2604, %v2632
    %2634 = vmatmul.f32.gmra.mxu0 %v2486
    %v2635 = vpop.f32.mrf.mxu0
    %v2636 = vadd.f32 %v2607, %v2635
    %2637 = vmatmul.f32.gmra.mxu0 %v2488
    %v2638 = vpop.f32.mrf.mxu0
    %v2639 = vadd.f32 %v2610, %v2638
    %2640 = vdwg.mxu0
    %v2641 = vmax.f32 %v2630, 0.0
    %v2642 = vmax.f32 %v2633, 0.0
    %v2643 = vmax.f32 %v2636, 0.0
    %v2644 = vmax.f32 %v2639, 0.0
    %v2645 = vld [vmem:[#allocation11] sm:$0xff]
    %v2646 = vld [vmem:[#allocation11 + $0x8] sm:$0xff]
    %v2647 = vld [vmem:[#allocation11 + $0x10] sm:$0xff]
    %v2648 = vld [vmem:[#allocation11 + $0x18] sm:$0xff]
    %v2649 = vld [vmem:[#allocation11 + $0x20] sm:$0xff]
    %v2650 = vld [vmem:[#allocation11 + $0x28] sm:$0xff]
    %v2651 = vld [vmem:[#allocation11 + $0x30] sm:$0xff]
    %v2652 = vld [vmem:[#allocation11 + $0x38] sm:$0xff]
    %v2653 = vld [vmem:[#allocation11 + $0x40] sm:$0xff]
    %v2654 = vld [vmem:[#allocation11 + $0x48] sm:$0xff]
    %v2655 = vld [vmem:[#allocation11 + $0x50] sm:$0xff]
    %v2656 = vld [vmem:[#allocation11 + $0x58] sm:$0xff]
    %v2657 = vld [vmem:[#allocation11 + $0x60] sm:$0xff]
    %v2658 = vld [vmem:[#allocation11 + $0x68] sm:$0xff]
    %v2659 = vld [vmem:[#allocation11 + $0x70] sm:$0xff]
    %v2660 = vld [vmem:[#allocation11 + $0x78] sm:$0xff]
    %v2661 = vld [vmem:[#allocation11 + $0x80] sm:$0xff]
    %v2662 = vld [vmem:[#allocation11 + $0x88] sm:$0xff]
    %v2663 = vld [vmem:[#allocation11 + $0x90] sm:$0xff]
    %v2664 = vld [vmem:[#allocation11 + $0x98] sm:$0xff]
    %v2665 = vld [vmem:[#allocation11 + $0xa0] sm:$0xff]
    %v2666 = vld [vmem:[#allocation11 + $0xa8] sm:$0xff]
    %v2667 = vld [vmem:[#allocation11 + $0xb0] sm:$0xff]
    %v2668 = vld [vmem:[#allocation11 + $0xb8] sm:$0xff]
    %v2669 = vld [vmem:[#allocation11 + $0xc0] sm:$0xff]
    %v2670 = vld [vmem:[#allocation11 + $0xc8] sm:$0xff]
    %v2671 = vld [vmem:[#allocation11 + $0xd0] sm:$0xff]
    %v2672 = vld [vmem:[#allocation11 + $0xd8] sm:$0xff]
    %v2673 = vld [vmem:[#allocation11 + $0xe0] sm:$0xff]
    %v2674 = vld [vmem:[#allocation11 + $0xe8] sm:$0xff]
    %v2675 = vld [vmem:[#allocation11 + $0xf0] sm:$0xff]
    %v2676 = vld [vmem:[#allocation11 + $0xf8] sm:$0xff]
    %v2677 = vld [vmem:[#allocation11 + $0x100] sm:$0xff]
    %v2678 = vld [vmem:[#allocation11 + $0x108] sm:$0xff]
    %v2679 = vld [vmem:[#allocation11 + $0x110] sm:$0xff]
    %v2680 = vld [vmem:[#allocation11 + $0x118] sm:$0xff]
    %v2681 = vld [vmem:[#allocation11 + $0x120] sm:$0xff]
    %v2682 = vld [vmem:[#allocation11 + $0x128] sm:$0xff]
    %v2683 = vld [vmem:[#allocation11 + $0x130] sm:$0xff]
    %v2684 = vld [vmem:[#allocation11 + $0x138] sm:$0xff]
    %v2685 = vld [vmem:[#allocation11 + $0x140] sm:$0xff]
    %v2686 = vld [vmem:[#allocation11 + $0x148] sm:$0xff]
    %v2687 = vld [vmem:[#allocation11 + $0x150] sm:$0xff]
    %v2688 = vld [vmem:[#allocation11 + $0x158] sm:$0xff]
    %v2689 = vld [vmem:[#allocation11 + $0x160] sm:$0xff]
    %v2690 = vld [vmem:[#allocation11 + $0x168] sm:$0xff]
    %v2691 = vld [vmem:[#allocation11 + $0x170] sm:$0xff]
    %v2692 = vld [vmem:[#allocation11 + $0x178] sm:$0xff]
    %v2693 = vld [vmem:[%s22] sm:$0x1]
    %v2698 = vrot.slane %v2641, 7
    %v2699 = vrot.slane %v2642, 7
    %v2700 = vsel %vm365, %v2698, %v2699
    %v2701 = vrot.slane %v2643, 7
    %v2702 = vrot.slane %v2644, 7
    %v2703 = vsel %vm365, %v2701, %v2702
    %v2710 = vsel %vm365, 0.0, %v2698
    %v2711 = vsel %vm365, 0.0, %v2701
    %v2712 = vsel %vm365, %v2699, 0.0
    %v2713 = vsel %vm365, %v2702, 0.0
    %v2718 = vrot.slane %v2710, 1
    %v2719 = vrot.slane %v2700, 1
    %v2720 = vsel %vm228, %v2718, %v2719
    %v2721 = vrot.slane %v2712, 1
    %v2722 = vsel %vm228, %v2719, %v2721
    %v2723 = vrot.slane %v2711, 1
    %v2724 = vrot.slane %v2703, 1
    %v2725 = vsel %vm228, %v2723, %v2724
    %v2726 = vrot.slane %v2713, 1
    %v2727 = vsel %vm228, %v2724, %v2726
    %v2732 = vrot.slane %v2710, 2
    %v2733 = vrot.slane %v2700, 2
    %v2734 = vsel %vm251, %v2732, %v2733
    %v2735 = vrot.slane %v2712, 2
    %v2736 = vsel %vm251, %v2733, %v2735
    %v2737 = vrot.slane %v2711, 2
    %v2738 = vrot.slane %v2703, 2
    %v2739 = vsel %vm251, %v2737, %v2738
    %v2740 = vrot.slane %v2713, 2
    %v2741 = vsel %vm251, %v2738, %v2740
    %v2747 = vperm.slane %v2693, 0
    %2749 = vmatpush.msra.mxu0 %v2660
    %2750 = vmatpush.msra.mxu0 %v2659
    %2751 = vmatpush.msra.mxu0 %v2658
    %2752 = vmatpush.msra.mxu0 %v2657
    %2753 = vmatpush.msra.mxu0 %v2656
    %2754 = vmatpush.msra.mxu0 %v2655
    %2755 = vmatpush.msra.mxu0 %v2654
    %2756 = vmatpush.msra.mxu0 %v2653
    %2757 = vmatpush.msra.mxu0 %v2652
    %2758 = vmatpush.msra.mxu0 %v2651
    %2759 = vmatpush.msra.mxu0 %v2650
    %2760 = vmatpush.msra.mxu0 %v2649
    %2761 = vmatpush.msra.mxu0 %v2648
    %2762 = vmatpush.msra.mxu0 %v2647
    %2763 = vmatpush.msra.mxu0 %v2646
    %2764 = vmatpush.msra.mxu0 %v2645
    %2765 = vmatmul.f32.gmra.mxu0 %v2710
    %v2766 = vpop.f32.mrf.mxu0
    %v2767 = vadd.f32 %v2747, %v2766
    %2768 = vmatmul.f32.gmra.mxu0 %v2700
    %v2769 = vpop.f32.mrf.mxu0
    %v2770 = vadd.f32 %v2747, %v2769
    %2771 = vmatmul.f32.gmra.mxu0 %v2711
    %v2772 = vpop.f32.mrf.mxu0
    %v2773 = vadd.f32 %v2747, %v2772
    %2774 = vmatmul.f32.gmra.mxu0 %v2703
    %v2775 = vpop.f32.mrf.mxu0
    %v2776 = vadd.f32 %v2747, %v2775
    %2777 = vdwg.mxu0
    %2778 = vmatpush.msra.mxu0 %v2676
    %2779 = vmatpush.msra.mxu0 %v2675
    %2780 = vmatpush.msra.mxu0 %v2674
    %2781 = vmatpush.msra.mxu0 %v2673
    %2782 = vmatpush.msra.mxu0 %v2672
    %2783 = vmatpush.msra.mxu0 %v2671
    %2784 = vmatpush.msra.mxu0 %v2670
    %2785 = vmatpush.msra.mxu0 %v2669
    %2786 = vmatpush.msra.mxu0 %v2668
    %2787 = vmatpush.msra.mxu0 %v2667
    %2788 = vmatpush.msra.mxu0 %v2666
    %2789 = vmatpush.msra.mxu0 %v2665
    %2790 = vmatpush.msra.mxu0 %v2664
    %2791 = vmatpush.msra.mxu0 %v2663
    %2792 = vmatpush.msra.mxu0 %v2662
    %2793 = vmatpush.msra.mxu0 %v2661
    %2794 = vmatmul.f32.gmra.mxu0 %v2720
    %v2795 = vpop.f32.mrf.mxu0
    %v2796 = vadd.f32 %v2767, %v2795
    %2797 = vmatmul.f32.gmra.mxu0 %v2722
    %v2798 = vpop.f32.mrf.mxu0
    %v2799 = vadd.f32 %v2770, %v2798
    %2800 = vmatmul.f32.gmra.mxu0 %v2725
    %v2801 = vpop.f32.mrf.mxu0
    %v2802 = vadd.f32 %v2773, %v2801
    %2803 = vmatmul.f32.gmra.mxu0 %v2727
    %v2804 = vpop.f32.mrf.mxu0
    %v2805 = vadd.f32 %v2776, %v2804
    %2806 = vdwg.mxu0
    %2807 = vmatpush.msra.mxu0 %v2692
    %2808 = vmatpush.msra.mxu0 %v2691
    %2809 = vmatpush.msra.mxu0 %v2690
    %2810 = vmatpush.msra.mxu0 %v2689
    %2811 = vmatpush.msra.mxu0 %v2688
    %2812 = vmatpush.msra.mxu0 %v2687
    %2813 = vmatpush.msra.mxu0 %v2686
    %2814 = vmatpush.msra.mxu0 %v2685
    %2815 = vmatpush.msra.mxu0 %v2684
    %2816 = vmatpush.msra.mxu0 %v2683
    %2817 = vmatpush.msra.mxu0 %v2682
    %2818 = vmatpush.msra.mxu0 %v2681
    %2819 = vmatpush.msra.mxu0 %v2680
    %2820 = vmatpush.msra.mxu0 %v2679
    %2821 = vmatpush.msra.mxu0 %v2678
    %2822 = vmatpush.msra.mxu0 %v2677
    %2823 = vmatmul.f32.gmra.mxu0 %v2734
    %v2824 = vpop.f32.mrf.mxu0
    %v2825 = vadd.f32 %v2796, %v2824
    %2826 = vmatmul.f32.gmra.mxu0 %v2736
    %v2827 = vpop.f32.mrf.mxu0
    %v2828 = vadd.f32 %v2799, %v2827
    %2829 = vmatmul.f32.gmra.mxu0 %v2739
    %v2830 = vpop.f32.mrf.mxu0
    %v2831 = vadd.f32 %v2802, %v2830
    %2832 = vmatmul.f32.gmra.mxu0 %v2741
    %v2833 = vpop.f32.mrf.mxu0
    %v2834 = vadd.f32 %v2805, %v2833
    %2835 = vdwg.mxu0
    %v2836 = vld [vmem:[#allocation13] sm:$0xff]
    %v2837 = vld [vmem:[#allocation13 + $0x8] sm:$0xff]
    %v2838 = vld [vmem:[#allocation13 + $0x10] sm:$0xff]
    %v2839 = vld [vmem:[#allocation13 + $0x18] sm:$0xff]
    %v2840 = vld [vmem:[#allocation13 + $0x20] sm:$0xff]
    %v2841 = vld [vmem:[#allocation13 + $0x28] sm:$0xff]
    %v2842 = vld [vmem:[#allocation13 + $0x30] sm:$0xff]
    %v2843 = vld [vmem:[#allocation13 + $0x38] sm:$0xff]
    %v2844 = vld [vmem:[#allocation13 + $0x40] sm:$0xff]
    %v2845 = vld [vmem:[#allocation13 + $0x48] sm:$0xff]
    %v2846 = vld [vmem:[#allocation13 + $0x50] sm:$0xff]
    %v2847 = vld [vmem:[#allocation13 + $0x58] sm:$0xff]
    %v2848 = vld [vmem:[#allocation13 + $0x60] sm:$0xff]
    %v2849 = vld [vmem:[#allocation13 + $0x68] sm:$0xff]
    %v2850 = vld [vmem:[#allocation13 + $0x70] sm:$0xff]
    %v2851 = vld [vmem:[#allocation13 + $0x78] sm:$0xff]
    %v2852 = vld [vmem:[%s24] sm:$0x1]
    %v2854 = vperm.slane %v2852, 0
    %2856 = vmatpush.msra.mxu0 %v2851
    %2857 = vmatpush.msra.mxu0 %v2850
    %2858 = vmatpush.msra.mxu0 %v2849
    %2859 = vmatpush.msra.mxu0 %v2848
    %2860 = vmatpush.msra.mxu0 %v2847
    %2861 = vmatpush.msra.mxu0 %v2846
    %2862 = vmatpush.msra.mxu0 %v2845
    %2863 = vmatpush.msra.mxu0 %v2844
    %2864 = vmatpush.msra.mxu0 %v2843
    %2865 = vmatpush.msra.mxu0 %v2842
    %2866 = vmatpush.msra.mxu0 %v2841
    %2867 = vmatpush.msra.mxu0 %v2840
    %2868 = vmatpush.msra.mxu0 %v2839
    %2869 = vmatpush.msra.mxu0 %v2838
    %2870 = vmatpush.msra.mxu0 %v2837
    %2871 = vmatpush.msra.mxu0 %v2836
    %2872 = vmatmul.f32.gmra.mxu0 %v1838
    %v2873 = vpop.f32.mrf.mxu0
    %v2874 = vadd.f32 %v2854, %v2873
    %2875 = vmatmul.f32.gmra.mxu0 %v1839
    %v2876 = vpop.f32.mrf.mxu0
    %v2877 = vadd.f32 %v2854, %v2876
    %2878 = vmatmul.f32.gmra.mxu0 %v1840
    %v2879 = vpop.f32.mrf.mxu0
    %v2880 = vadd.f32 %v2854, %v2879
    %2881 = vmatmul.f32.gmra.mxu0 %v1841
    %v2882 = vpop.f32.mrf.mxu0
    %v2883 = vadd.f32 %v2854, %v2882
    %2884 = vdwg.mxu0
    %v2885 = vadd.f32 %v2825, %v2874
    %v2886 = vadd.f32 %v2828, %v2877
    %v2887 = vadd.f32 %v2831, %v2880
    %v2888 = vadd.f32 %v2834, %v2883
    %v2889 = vmax.f32 %v2885, 0.0
    %v2890 = vmax.f32 %v2886, 0.0
    %v2891 = vmax.f32 %v2887, 0.0
    %v2892 = vmax.f32 %v2888, 0.0
    %v2893 = vld [vmem:[%s25] sm:$0xff]
    %v2894 = vld [vmem:[%s25 + $0x8] sm:$0xff]
    %v2895 = vld [vmem:[%s25 + $0x10] sm:$0xff]
    %v2896 = vld [vmem:[%s25 + $0x18] sm:$0xff]
    %v2897 = vld [vmem:[%s25 + $0x20] sm:$0xff]
    %v2898 = vld [vmem:[%s25 + $0x28] sm:$0xff]
    %v2899 = vld [vmem:[%s25 + $0x30] sm:$0xff]
    %v2900 = vld [vmem:[%s25 + $0x38] sm:$0xff]
    %v2901 = vld [vmem:[%s25 + $0x40] sm:$0xff]
    %v2902 = vld [vmem:[%s25 + $0x48] sm:$0xff]
    %v2903 = vld [vmem:[%s25 + $0x50] sm:$0xff]
    %v2904 = vld [vmem:[%s25 + $0x58] sm:$0xff]
    %v2905 = vld [vmem:[%s25 + $0x60] sm:$0xff]
    %v2906 = vld [vmem:[%s25 + $0x68] sm:$0xff]
    %v2907 = vld [vmem:[%s25 + $0x70] sm:$0xff]
    %v2908 = vld [vmem:[%s25 + $0x78] sm:$0xff]
    %v2909 = vld [vmem:[%s26] sm:$0x1]
    %v2910 = vadd.f32 %v2889, %v2890
    %v2911 = vrot.slane %v2910, 4
    %v2912 = vadd.f32 %v2910, %v2911
    %v2913 = vrot.slane %v2912, 2
    %v2914 = vadd.f32 %v2912, %v2913
    %v2915 = vrot.slane %v2914, 1
    %v2916 = vadd.f32 %v2914, %v2915
    %v2917 = vadd.f32 %v2891, %v2892
    %v2918 = vrot.slane %v2917, 4
    %v2919 = vadd.f32 %v2917, %v2918
    %v2920 = vrot.slane %v2919, 2
    %v2921 = vadd.f32 %v2919, %v2920
    %v2922 = vrot.slane %v2921, 1
    %v2923 = vadd.f32 %v2921, %v2922
    %v2924 = vmul.f32 %v2916, 0.0625
    %v2925 = vmul.f32 %v2923, 0.0625
    %v2927 = vperm.slane %v2909, 0
    %vm2931 = vcmask 1041409
    %v2932 = vsel %vm2931, %v2925, %v2924
    %2934 = vmatpush.msra.mxu0 %v2908
    %2935 = vmatpush.msra.mxu0 %v2907
    %2936 = vmatpush.msra.mxu0 %v2906
    %2937 = vmatpush.msra.mxu0 %v2905
    %2938 = vmatpush.msra.mxu0 %v2904
    %2939 = vmatpush.msra.mxu0 %v2903
    %2940 = vmatpush.msra.mxu0 %v2902
    %2941 = vmatpush.msra.mxu0 %v2901
    %2942 = vmatpush.msra.mxu0 %v2900
    %2943 = vmatpush.msra.mxu0 %v2899
    %2944 = vmatpush.msra.mxu0 %v2898
    %2945 = vmatpush.msra.mxu0 %v2897
    %2946 = vmatpush.msra.mxu0 %v2896
    %2947 = vmatpush.msra.mxu0 %v2895
    %2948 = vmatpush.msra.mxu0 %v2894
    %2949 = vmatpush.msra.mxu0 %v2893
    %2950 = vmatmul.f32.gmra.mxu0 %v2932
    %v2951 = vpop.f32.mrf.mxu0
    %v2952 = vadd.f32 %v2927, %v2951
    %2953 = vdwg.mxu0
    %vm2954 = vcmask 66560
    %2955 = vst.msk [vmem:[#allocation14] sm:$0x3] %vm2954, %v2952
    // Predicated region
    $region138: #{resnet_forward.1} parent=1 // pred_check
      _
    $region139: #{resnet_forward.1} parent=1 // pred_check_branch
      %2957 = sbr.rel (0) target = $region141
    $region140: #{resnet_forward.1} parent=1 // pred_region
      %2959 = vsyncadd [#allocation4], 0
      %s2961 = sshll.u32 [#allocation14], 4
      %s2962 = int_to_ptr.vmem [resolvable:$true] %s2961
      %s2963 = sshll.u32 %s27, 4
      %s2964 = int_to_ptr.hbm [resolvable:$true] %s2963
      %2966 = dma.vmem_to_hbm [thread:$0]  %s2962, 32, %s2964, [#allocation4]
    $region141: #{resnet_forward.1} parent=1 // pred_fallthru
      _
    // Predicated region
    $region142: #{resnet_forward.1} parent=1 // pred_check
      _
    $region143: #{resnet_forward.1} parent=1 // pred_check_branch
      %2968 = sbr.rel (0) target = $region145
    $region144: #{resnet_forward.1} parent=1 // pred_region
      %2970 = dma.done [#allocation4], 32
    $region145: #{resnet_forward.1} parent=1 // pred_fallthru
      _
    %2971 = vsyncpa [#allocation3], 1
    %2972 = vsyncpa [#allocation6], 1
    %2973 = vsyncpa [#allocation9], 1
    %2974 = vsyncpa [#allocation12], 1
    %2975 = vsyncpa [#allocation4], 1

</llo_original>
